<compile_context>
chip_gen: v7x
topology: tpu7x:2x2x1
jax: 0.10.0
libtpu: 0.0.40
codegen_flags: <defaults>
</compile_context>

<pallas_src>
import functools

import jax
import jax.numpy as jnp
import numpy as np
from jax.experimental import pallas as pl
from jax.experimental.pallas import tpu as pltpu

# ---------------- model hyper-parameters (small, consistent with the module) --
D_MODEL = 32
N_HEAD = 4
D_HEAD = 8
H = N_HEAD * D_HEAD            # == D_MODEL
D_INNER = 64
QLEN = 8
MLEN = 8
CMLEN = 4
BSZ = 2
COMPRESSION_RATE = 2
LN_EPS = 1e-5
MASK_VALUE = float(jnp.finfo(jnp.float32).min)


# ---------------- in-kernel helpers -------------------------------------------
def _layernorm(x, gamma, beta, eps):
    mean = jnp.mean(x, axis=-1, keepdims=True)
    var = jnp.mean(jnp.square(x - mean), axis=-1, keepdims=True)
    return (x - mean) * jax.lax.rsqrt(var + eps) * gamma + beta


# ---------------- fused CompressiveLayer kernel --------------------------------
def _fused_layer_kernel(xq_ref, xkv_ref, pos_ref, wq_ref, wk_ref, wv_ref, wr_ref,
                        wo_ref, w1_ref, w2_ref, rwb_ref, rrb_ref, const_ref,
                        *rest, qlen, klen, bsz, n_head, d_head, d_model, d_inner,
                        eps, scale, has_mask, out_attn):
    idx = 0
    mask_ref = None
    if has_mask:
        mask_ref = rest[idx]
        idx += 1
    out_ref = rest[idx]
    idx += 1
    prob_ref = rest[idx] if out_attn else None

    f32 = jnp.float32
    npad = klen + 1

    # ---- small constants (packed slab, one DMA) ----
    ln1_g = const_ref[0:1, 0:d_model]
    ln1_b = const_ref[1:2, 0:d_model]
    ff_b1 = const_ref[2:3, 0:d_inner]
    ff_b2 = const_ref[3:4, 0:d_model]
    ln2_g = const_ref[4:5, 0:d_model]
    ln2_b = const_ref[5:6, 0:d_model]

    wq = wq_ref[...]      # (n_head, d_model, d_head)
    wk = wk_ref[...]
    wv = wv_ref[...]
    wr = wr_ref[...]
    wo = wo_ref[...]      # (n_head, d_head, d_model)
    w1 = w1_ref[...]      # (d_model, d_inner)
    w2 = w2_ref[...]      # (d_inner, d_model)

    # 1/sqrt(d_head) folded into the query side; bias broadcasts hoisted out of the
    # batch loop (JAX does not CSE broadcast_in_dim).
    rwb = jnp.broadcast_to(rwb_ref[...] * scale, (n_head, qlen, d_head))
    rrb = jnp.broadcast_to(rrb_ref[...] * scale, (n_head, qlen, d_head))

    # positional projection, batch-independent.  pos row 0 is zeros -> column 0 of the
    # positional scores is the rel_shift zero pad.
    pos_b = jnp.broadcast_to(pos_ref[...], (n_head, npad, d_model))
    r_h = jax.lax.dot_general(pos_b, wr, (((2,), (1,)), ((0,), (0,))),
                              preferred_element_type=f32)          # (n, npad, dh)

    # ---- rel_shift helpers (loop-invariant): iotas, per-bit roll masks, threshold ----
    row = jax.lax.broadcasted_iota(jnp.int32, (n_head, qlen, npad), 1)
    col = jax.lax.broadcasted_iota(jnp.int32, (n_head, qlen, npad), 2)
    r_amt = qlen - row                       # per-row left-roll amount in [1, qlen]
    roll_masks = []
    bit = 1
    while bit <= qlen:
        roll_masks.append((bit, (r_amt & bit) != 0))
        bit *= 2
    use_region1 = col < (klen - qlen + 1 + row)

    mask3 = None
    if has_mask:
        mask3 = jnp.broadcast_to(mask_ref[...], (n_head, qlen, klen)) > 0.5

    for b in range(bsz):                     # tiny static loop over batch
        xq = xq_ref[b]                       # (qlen, d_model)  == residual input
        xkv = xkv_ref[b]                     # (klen, d_model)  == [mem; c_mem; input]

        # ---- head-batched projections (no lane-offset head slices) ----
        xq_n = jnp.broadcast_to(xq, (n_head, qlen, d_model))
        xkv_n = jnp.broadcast_to(xkv, (n_head, klen, d_model))
        q_h = jax.lax.dot_general(xq_n, wq, (((2,), (1,)), ((0,), (0,))),
                                  preferred_element_type=f32)       # (n, q, dh)
        k_h = jax.lax.dot_general(xkv_n, wk, (((2,), (1,)), ((0,), (0,))),
                                  preferred_element_type=f32)       # (n, k, dh)
        v_h = jax.lax.dot_general(xkv_n, wv, (((2,), (1,)), ((0,), (0,))),
                                  preferred_element_type=f32)       # (n, k, dh)

        q_rw = q_h * scale + rwb
        q_rr = q_h * scale + rrb

        # content scores AC: (n, q, klen); padded positional scores xp: (n, q, klen+1)
        ac = jax.lax.dot_general(q_rw, k_h, (((2,), (2,)), ((0,), (0,))),
                                 preferred_element_type=f32)
        xp = jax.lax.dot_general(q_rr, r_h, (((2,), (2,)), ((0,), (0,))),
                                 preferred_element_type=f32)

        # ---- HF _rel_shift, register-only, all heads at once ----
        # Y[i, j] = xp[i, (j + qlen - i) mod (klen+1)]  via a barrel shifter of static
        # lane rolls selected per row; the wrap rows come from Y shifted by (-1, -1).
        y = xp
        for roll_bits, m in roll_masks:
            y = jnp.where(m, jnp.roll(y, -roll_bits, axis=2), y)
        y_wrap = jnp.roll(jnp.roll(y, -1, axis=1), -1, axis=2)
        bd = jnp.where(use_region1, y, y_wrap)[:, :, :klen]          # (n, q, klen)

        score = ac + bd                       # scale already folded into q
        if has_mask:
            score = jnp.where(mask3, MASK_VALUE, score)
        score = score - jnp.max(score, axis=-1, keepdims=True)
        e = jnp.exp(score)
        prob = e * pl.reciprocal(jnp.sum(e, axis=-1, keepdims=True), approx=True)
        if out_attn:
            prob_ref[b] = prob

        # attention values + merged output projection (head-batched dot + cheap sum)
        av = jax.lax.dot_general(prob, v_h, (((2,), (1,)), ((0,), (0,))),
                                 preferred_element_type=f32)         # (n, q, dh)
        o_nm = jax.lax.dot_general(av, wo, (((2,), (1,)), ((0,), (0,))),
                                   preferred_element_type=f32)       # (n, q, d_model)
        attn_out = jnp.sum(o_nm, axis=0)                             # (q, d_model)

        # ---- residual + LayerNorm + PositionwiseFF + LayerNorm (post-lnorm path) ----
        x = xq + attn_out
        h = _layernorm(x, ln1_g, ln1_b, eps)
        inner = jnp.maximum(
            jnp.dot(h, w1, preferred_element_type=f32) + ff_b1, 0.0)
        core = jnp.dot(inner, w2, preferred_element_type=f32) + ff_b2
        out_ref[b] = _layernorm(h + core, ln2_g, ln2_b, eps)


def compressive_layer_forward(params, input_ids, pos_emb, mem=None, c_mem=None,
                              attention_mask=None, output_attentions=False):
    """CompressiveLayer.forward.  input_ids/mem/c_mem: (L, B, D); pos_emb: (rlen, D)."""
    qlen, bsz, d_model = input_ids.shape
    pieces = []
    if mem is not None:
        pieces.append(mem)
    if c_mem is not None:
        pieces.append(c_mem)
    pieces.append(input_ids)
    cat = jnp.concatenate(pieces, axis=0) if len(pieces) > 1 else input_ids
    klen = cat.shape[0]
    rlen = pos_emb.shape[0]
    assert rlen == klen, "pos_emb length must equal key length"
    assert qlen <= klen

    n_head, d_head = params['r_w_bias'].shape
    hdim = n_head * d_head
    d_inner = params['ff_w1'].shape[1]
    scale = 1.0 / (d_head ** 0.5)
    f32 = jnp.float32

    # ---- one-time XLA glue on KB-scale inputs / weights (kernel-friendly layouts) ----
    xq3 = jnp.transpose(input_ids, (1, 0, 2)).astype(f32)       # (B, qlen, D) query/resid
    xkv3 = jnp.transpose(cat, (1, 0, 2)).astype(f32)            # (B, klen, D)
    pos_aug = jnp.concatenate(
        [jnp.zeros((1, d_model), f32), pos_emb.astype(f32)], axis=0)   # (klen+1, D)

    def head_major(w):      # (D, H) -> (n_head, D, d_head)
        return jnp.transpose(w.reshape(d_model, n_head, d_head), (1, 0, 2))

    w_qkv = params['w_qkv'].astype(f32)
    wq_h = head_major(w_qkv[:, :hdim])
    wk_h = head_major(w_qkv[:, hdim:2 * hdim])
    wv_h = head_major(w_qkv[:, 2 * hdim:])
    wr_h = head_major(params['w_r'].astype(f32))
    wo_h = params['w_o'].astype(f32).reshape(n_head, d_head, d_model)
    rwb3 = params['r_w_bias'].astype(f32).reshape(n_head, 1, d_head)
    rrb3 = params['r_r_bias'].astype(f32).reshape(n_head, 1, d_head)

    # pack the six tiny LN/FF vectors into one slab (single DMA)
    cw = max(d_model, d_inner)

    def padw(v):
        v = v.astype(f32).reshape(1, -1)
        return jnp.pad(v, ((0, 0), (0, cw - v.shape[1])))

    const_slab = jnp.concatenate(
        [padw(params['ln1_g']), padw(params['ln1_b']),
         padw(params['ff_b1']), padw(params['ff_b2']),
         padw(params['ln2_g']), padw(params['ln2_b'])], axis=0)      # (6, cw)

    inputs = [xq3, xkv3, pos_aug, wq_h, wk_h, wv_h, wr_h, wo_h,
              params['ff_w1'].astype(f32), params['ff_w2'].astype(f32),
              rwb3, rrb3, const_slab]

    has_mask = attention_mask is not None                            # static flag
    if has_mask:
        inputs.append(jnp.asarray(attention_mask, f32).reshape(qlen, klen))

    out_shapes = [jax.ShapeDtypeStruct((bsz, qlen, d_model), f32)]
    if output_attentions:
        out_shapes.append(jax.ShapeDtypeStruct((bsz, n_head, qlen, klen), f32))

    kernel = functools.partial(
        _fused_layer_kernel,
        qlen=qlen, klen=klen, bsz=bsz, n_head=n_head, d_head=d_head,
        d_model=d_model, d_inner=d_inner, eps=LN_EPS, scale=scale,
        has_mask=has_mask, out_attn=output_attentions)

    vmem = pl.BlockSpec(memory_space=pltpu.MemorySpace.VMEM)
    results = pl.pallas_call(
        kernel,
        out_shape=tuple(out_shapes) if output_attentions else out_shapes[0],
        in_specs=[vmem] * len(inputs),
        out_specs=(vmem, vmem) if output_attentions else vmem,
    )(*inputs)

    if output_attentions:
        out_b, prob_b = results
    else:
        out_b = results

    outputs = [jnp.transpose(out_b, (1, 0, 2))]                      # (qlen, B, D)
    if output_attentions:
        outputs.append(jnp.transpose(prob_b, (2, 3, 0, 1)))          # (q, klen, B, n)
    return outputs


# ---------------- Conv1dCompression (module attribute, exercised standalone) ----
def conv_compress_kernel(x_ref, w_ref, b_ref, o_ref):
    # x: (B*Lout, rate*D); w: (rate*D, D); b: (1, D)
    o_ref[...] = jnp.dot(x_ref[...], w_ref[...],
                         preferred_element_type=jnp.float32) + b_ref[...]


def conv1d_compress(memories, w_conv, b_conv, rate):
    """Conv1dCompression.forward: (L, B, D) -> (L//rate, B, D).
    Conv1d(D, D, kernel=stride=rate) over NCW == strided-window matmul."""
    L, B, D = memories.shape
    n_out = (L - rate) // rate + 1
    x_win = memories[:n_out * rate].reshape(n_out, rate, B, D)
    x_win = x_win.transpose(2, 0, 1, 3).reshape(B * n_out, rate * D)  # idx = k*D + ci
    w2 = w_conv.transpose(2, 1, 0).reshape(rate * D, D)               # W[co,ci,k] -> [k*D+ci, co]
    out2d = pl.pallas_call(
        conv_compress_kernel,
        out_shape=jax.ShapeDtypeStruct((B * n_out, D), jnp.float32),
        in_specs=[pl.BlockSpec(memory_space=pltpu.MemorySpace.VMEM)] * 3,
        out_specs=pl.BlockSpec(memory_space=pltpu.MemorySpace.VMEM),
    )(x_win, w2, b_conv.reshape(1, D))
    return out2d.reshape(B, n_out, D).transpose(1, 0, 2)              # (n_out, B, D)


# ---------------- pure-JAX reference (mirrors the PyTorch code path) -----------
def _layernorm_ref(x, gamma, beta):
    mean = jnp.mean(x, axis=-1, keepdims=True)
    var = jnp.mean(jnp.square(x - mean), axis=-1, keepdims=True)
    return (x - mean) / jnp.sqrt(var + LN_EPS) * gamma + beta


def reference_forward(params, w, r, mem, c_mem):
    qlen, bsz, _ = w.shape
    mems = jnp.concatenate([mem, c_mem], axis=0)
    cat = jnp.concatenate([mems, w], axis=0)
    w_heads = cat @ params['w_qkv']
    r_head_k = r @ params['w_r']
    w_head_q, w_head_k, w_head_v = jnp.split(w_heads, 3, axis=-1)
    w_head_q = w_head_q[-qlen:]
    klen, rlen = w_head_k.shape[0], r.shape[0]
    w_head_q = w_head_q.reshape(qlen, bsz, N_HEAD, D_HEAD)
    w_head_k = w_head_k.reshape(klen, bsz, N_HEAD, D_HEAD)
    w_head_v = w_head_v.reshape(klen, bsz, N_HEAD, D_HEAD)
    r_head_k = r_head_k.reshape(rlen, N_HEAD, D_HEAD)
    AC = jnp.einsum('ibnd,jbnd->ijbn', w_head_q + params['r_w_bias'], w_head_k)
    BD = jnp.einsum('ibnd,jnd->ijbn', w_head_q + params['r_r_bias'], r_head_k)
    zero_pad = jnp.zeros((BD.shape[0], 1) + BD.shape[2:], BD.dtype)
    x_padded = jnp.concatenate([zero_pad, BD], axis=1)
    x_padded = x_padded.reshape((BD.shape[1] + 1, BD.shape[0]) + BD.shape[2:])
    BD = x_padded[1:].reshape(BD.shape)
    attn_score = (AC + BD) * (1.0 / D_HEAD ** 0.5)
    attn_prob = jax.nn.softmax(attn_score, axis=1)
    attn_vec = jnp.einsum('ijbn,jbnd->ibnd', attn_prob, w_head_v).reshape(qlen, bsz, H)
    attn_out = attn_vec @ params['w_o']
    h = _layernorm_ref(w + attn_out, params['ln1_g'], params['ln1_b'])
    inner = jax.nn.relu(h @ params['ff_w1'] + params['ff_b1'])
    core = inner @ params['ff_w2'] + params['ff_b2']
    return _layernorm_ref(h + core, params['ln2_g'], params['ln2_b'])


# ---------------- deterministic parameter init ----------------------------------
def init_params(key):
    ks = jax.random.split(key, 10)
    s = 0.02
    return dict(
        w_qkv=jax.random.normal(ks[0], (D_MODEL, 3 * H), jnp.float32) * s,
        w_r=jax.random.normal(ks[1], (D_MODEL, H), jnp.float32) * s,
        w_o=jax.random.normal(ks[2], (H, D_MODEL), jnp.float32) * s,
        r_w_bias=jax.random.normal(ks[3], (N_HEAD, D_HEAD), jnp.float32) * s,
        r_r_bias=jax.random.normal(ks[4], (N_HEAD, D_HEAD), jnp.float32) * s,
        ln1_g=1.0 + 0.1 * jax.random.normal(ks[5], (1, D_MODEL), jnp.float32),
        ln1_b=0.1 * jax.random.normal(ks[6], (1, D_MODEL), jnp.float32),
        ff_w1=jax.random.normal(ks[7], (D_MODEL, D_INNER), jnp.float32) * s,
        ff_b1=0.1 * jax.random.normal(ks[8], (1, D_INNER), jnp.float32),
        ff_w2=jax.random.normal(ks[9], (D_INNER, D_MODEL), jnp.float32) * s,
        ff_b2=jnp.zeros((1, D_MODEL), jnp.float32),
        ln2_g=jnp.ones((1, D_MODEL), jnp.float32),
        ln2_b=jnp.zeros((1, D_MODEL), jnp.float32),
        conv_w=jax.random.normal(jax.random.PRNGKey(42),
                                 (D_MODEL, D_MODEL, COMPRESSION_RATE), jnp.float32) * s,
        conv_b=jnp.zeros((D_MODEL,), jnp.float32),
    )


# ---------------- main ------------------------------------------------------------
if __name__ == "__main__":
    key = jax.random.PRNGKey(0)
    kp, k1, k2, k3, k4 = jax.random.split(key, 5)
    params = init_params(kp)

    input_ids = jax.random.normal(k1, (QLEN, BSZ, D_MODEL), jnp.float32)   # embedded seq
    mem = jax.random.normal(k2, (MLEN, BSZ, D_MODEL), jnp.float32)
    c_mem = jax.random.normal(k3, (CMLEN, BSZ, D_MODEL), jnp.float32)
    klen = MLEN + CMLEN + QLEN
    pos_emb = jax.random.normal(k4, (klen, D_MODEL), jnp.float32)

    outs = compressive_layer_forward(params, input_ids, pos_emb, mem, c_mem,
                                     attention_mask=None, output_attentions=False)
    out = jax.block_until_ready(outs[0])
    assert out.shape == (QLEN, BSZ, D_MODEL)

    ref = reference_forward(params, input_ids, pos_emb, mem, c_mem)
    np.testing.assert_allclose(np.asarray(out), np.asarray(ref), rtol=2e-2, atol=2e-2)

    # Conv1dCompression (module attribute, not invoked by forward) — exercised standalone.
    compressed = jax.block_until_ready(
        conv1d_compress(mem, params['conv_w'], params['conv_b'], COMPRESSION_RATE))
    n_out = MLEN // COMPRESSION_RATE
    assert compressed.shape == (n_out, BSZ, D_MODEL)
    xw = mem[:n_out * COMPRESSION_RATE].reshape(n_out, COMPRESSION_RATE, BSZ, D_MODEL)
    conv_ref = jnp.einsum('okbc,fck->obf', xw, params['conv_w']) + params['conv_b']
    np.testing.assert_allclose(np.asarray(compressed), np.asarray(conv_ref),
                               rtol=2e-2, atol=2e-2)

    print("KERNEL_OK")
</pallas_src>

<mosaic_0001>
module attributes {stable_mosaic.version = 11 : i64} {
  func.func @_fused_layer_kernel(%arg0: memref<2x8x32xf32, #tpu.memory_space<vmem>>, %arg1: memref<2x20x32xf32, #tpu.memory_space<vmem>>, %arg2: memref<21x32xf32, #tpu.memory_space<vmem>>, %arg3: memref<4x32x8xf32, #tpu.memory_space<vmem>>, %arg4: memref<4x32x8xf32, #tpu.memory_space<vmem>>, %arg5: memref<4x32x8xf32, #tpu.memory_space<vmem>>, %arg6: memref<4x32x8xf32, #tpu.memory_space<vmem>>, %arg7: memref<4x8x32xf32, #tpu.memory_space<vmem>>, %arg8: memref<32x64xf32, #tpu.memory_space<vmem>>, %arg9: memref<64x32xf32, #tpu.memory_space<vmem>>, %arg10: memref<4x1x8xf32, #tpu.memory_space<vmem>>, %arg11: memref<4x1x8xf32, #tpu.memory_space<vmem>>, %arg12: memref<6x64xf32, #tpu.memory_space<vmem>>, %arg13: memref<2x8x32xf32, #tpu.memory_space<vmem>>) attributes {dimension_semantics = [], scalar_prefetch = 0 : i64, scratch_operands = 0 : i64, tpu.core_type = #tpu.core_type<tc>} {
    %c0 = arith.constant 0 : index
    %c0_0 = arith.constant 0 : index
    %0 = vector.load %arg12[%c0, %c0_0] : memref<6x64xf32, #tpu.memory_space<vmem>>, vector<1x32xf32>
    %c1 = arith.constant 1 : index
    %c0_1 = arith.constant 0 : index
    %1 = vector.load %arg12[%c1, %c0_1] : memref<6x64xf32, #tpu.memory_space<vmem>>, vector<1x32xf32>
    %c2 = arith.constant 2 : index
    %c0_2 = arith.constant 0 : index
    %2 = vector.load %arg12[%c2, %c0_2] : memref<6x64xf32, #tpu.memory_space<vmem>>, vector<1x64xf32>
    %c3 = arith.constant 3 : index
    %c0_3 = arith.constant 0 : index
    %3 = vector.load %arg12[%c3, %c0_3] : memref<6x64xf32, #tpu.memory_space<vmem>>, vector<1x32xf32>
    %c4 = arith.constant 4 : index
    %c0_4 = arith.constant 0 : index
    %4 = vector.load %arg12[%c4, %c0_4] : memref<6x64xf32, #tpu.memory_space<vmem>>, vector<1x32xf32>
    %c5 = arith.constant 5 : index
    %c0_5 = arith.constant 0 : index
    %5 = vector.load %arg12[%c5, %c0_5] : memref<6x64xf32, #tpu.memory_space<vmem>>, vector<1x32xf32>
    %c0_6 = arith.constant 0 : index
    %c0_7 = arith.constant 0 : index
    %c0_8 = arith.constant 0 : index
    %6 = vector.load %arg3[%c0_6, %c0_7, %c0_8] : memref<4x32x8xf32, #tpu.memory_space<vmem>>, vector<4x32x8xf32>
    %c0_9 = arith.constant 0 : index
    %c0_10 = arith.constant 0 : index
    %c0_11 = arith.constant 0 : index
    %7 = vector.load %arg4[%c0_9, %c0_10, %c0_11] : memref<4x32x8xf32, #tpu.memory_space<vmem>>, vector<4x32x8xf32>
    %c0_12 = arith.constant 0 : index
    %c0_13 = arith.constant 0 : index
    %c0_14 = arith.constant 0 : index
    %8 = vector.load %arg5[%c0_12, %c0_13, %c0_14] : memref<4x32x8xf32, #tpu.memory_space<vmem>>, vector<4x32x8xf32>
    %c0_15 = arith.constant 0 : index
    %c0_16 = arith.constant 0 : index
    %c0_17 = arith.constant 0 : index
    %9 = vector.load %arg6[%c0_15, %c0_16, %c0_17] : memref<4x32x8xf32, #tpu.memory_space<vmem>>, vector<4x32x8xf32>
    %c0_18 = arith.constant 0 : index
    %c0_19 = arith.constant 0 : index
    %c0_20 = arith.constant 0 : index
    %10 = vector.load %arg7[%c0_18, %c0_19, %c0_20] : memref<4x8x32xf32, #tpu.memory_space<vmem>>, vector<4x8x32xf32>
    %c0_21 = arith.constant 0 : index
    %c0_22 = arith.constant 0 : index
    %11 = vector.load %arg8[%c0_21, %c0_22] : memref<32x64xf32, #tpu.memory_space<vmem>>, vector<32x64xf32>
    %c0_23 = arith.constant 0 : index
    %c0_24 = arith.constant 0 : index
    %12 = vector.load %arg9[%c0_23, %c0_24] : memref<64x32xf32, #tpu.memory_space<vmem>>, vector<64x32xf32>
    %c0_25 = arith.constant 0 : index
    %c0_26 = arith.constant 0 : index
    %c0_27 = arith.constant 0 : index
    %13 = vector.load %arg10[%c0_25, %c0_26, %c0_27] : memref<4x1x8xf32, #tpu.memory_space<vmem>>, vector<4x1x8xf32>
    %cst = arith.constant 0.353553385 : f32
    %14 = vector.broadcast %cst : f32 to vector<4x1x8xf32>
    %15 = arith.mulf %13, %14 : vector<4x1x8xf32>
    %16 = vector.shape_cast %15 : vector<4x1x8xf32> to vector<4x1x8xf32>
    %17 = vector.broadcast %16 : vector<4x1x8xf32> to vector<4x8x8xf32>
    %c0_28 = arith.constant 0 : index
    %c0_29 = arith.constant 0 : index
    %c0_30 = arith.constant 0 : index
    %18 = vector.load %arg11[%c0_28, %c0_29, %c0_30] : memref<4x1x8xf32, #tpu.memory_space<vmem>>, vector<4x1x8xf32>
    %cst_31 = arith.constant 0.353553385 : f32
    %19 = vector.broadcast %cst_31 : f32 to vector<4x1x8xf32>
    %20 = arith.mulf %18, %19 : vector<4x1x8xf32>
    %21 = vector.shape_cast %20 : vector<4x1x8xf32> to vector<4x1x8xf32>
    %22 = vector.broadcast %21 : vector<4x1x8xf32> to vector<4x8x8xf32>
    %c0_32 = arith.constant 0 : index
    %c0_33 = arith.constant 0 : index
    %23 = vector.load %arg2[%c0_32, %c0_33] : memref<21x32xf32, #tpu.memory_space<vmem>>, vector<21x32xf32>
    %24 = vector.shape_cast %23 : vector<21x32xf32> to vector<1x21x32xf32>
    %25 = vector.broadcast %24 : vector<1x21x32xf32> to vector<4x21x32xf32>
    %cst_34 = arith.constant dense<0.000000e+00> : vector<4x21x8xf32>
    %26 = tpu.matmul %25, %9, %cst_34 {dimension_numbers = #tpu.dot_dimension_numbers<[2], [1], [1], [2], [0, 0, 0, 1, 1, 2], [0], [0]>} : vector<4x21x32xf32>, vector<4x32x8xf32>, vector<4x21x8xf32> -> vector<4x21x8xf32>
    %27 = tpu.iota {dimensions = array<i32: 1>} : vector<4x8x21xi32>
    %28 = tpu.iota {dimensions = array<i32: 2>} : vector<4x8x21xi32>
    %c8_i32 = arith.constant 8 : i32
    %29 = vector.broadcast %c8_i32 : i32 to vector<4x8x21xi32>
    %30 = arith.subi %29, %27 : vector<4x8x21xi32>
    %c1_i32 = arith.constant 1 : i32
    %31 = vector.broadcast %c1_i32 : i32 to vector<4x8x21xi32>
    %32 = arith.andi %30, %31 : vector<4x8x21xi32>
    %c0_i32 = arith.constant 0 : i32
    %33 = vector.broadcast %c0_i32 : i32 to vector<4x8x21xi32>
    %34 = arith.cmpi ne, %32, %33 : vector<4x8x21xi32>
    %c2_i32 = arith.constant 2 : i32
    %35 = vector.broadcast %c2_i32 : i32 to vector<4x8x21xi32>
    %36 = arith.andi %30, %35 : vector<4x8x21xi32>
    %c0_i32_35 = arith.constant 0 : i32
    %37 = vector.broadcast %c0_i32_35 : i32 to vector<4x8x21xi32>
    %38 = arith.cmpi ne, %36, %37 : vector<4x8x21xi32>
    %c4_i32 = arith.constant 4 : i32
    %39 = vector.broadcast %c4_i32 : i32 to vector<4x8x21xi32>
    %40 = arith.andi %30, %39 : vector<4x8x21xi32>
    %c0_i32_36 = arith.constant 0 : i32
    %41 = vector.broadcast %c0_i32_36 : i32 to vector<4x8x21xi32>
    %42 = arith.cmpi ne, %40, %41 : vector<4x8x21xi32>
    %c8_i32_37 = arith.constant 8 : i32
    %43 = vector.broadcast %c8_i32_37 : i32 to vector<4x8x21xi32>
    %44 = arith.andi %30, %43 : vector<4x8x21xi32>
    %c0_i32_38 = arith.constant 0 : i32
    %45 = vector.broadcast %c0_i32_38 : i32 to vector<4x8x21xi32>
    %46 = arith.cmpi ne, %44, %45 : vector<4x8x21xi32>
    %c13_i32 = arith.constant 13 : i32
    %47 = vector.broadcast %c13_i32 : i32 to vector<4x8x21xi32>
    %48 = arith.addi %47, %27 : vector<4x8x21xi32>
    %49 = arith.cmpi slt, %28, %48 : vector<4x8x21xi32>
    %c0_39 = arith.constant 0 : index
    %c0_40 = arith.constant 0 : index
    %c0_41 = arith.constant 0 : index
    %50 = vector.load %arg0[%c0_39, %c0_40, %c0_41] : memref<2x8x32xf32, #tpu.memory_space<vmem>>, vector<1x8x32xf32>
    %51 = vector.shape_cast %50 : vector<1x8x32xf32> to vector<8x32xf32>
    %c0_42 = arith.constant 0 : index
    %c0_43 = arith.constant 0 : index
    %c0_44 = arith.constant 0 : index
    %52 = vector.load %arg1[%c0_42, %c0_43, %c0_44] : memref<2x20x32xf32, #tpu.memory_space<vmem>>, vector<1x20x32xf32>
    %53 = vector.shape_cast %52 : vector<1x20x32xf32> to vector<20x32xf32>
    %54 = vector.shape_cast %51 : vector<8x32xf32> to vector<1x8x32xf32>
    %55 = vector.broadcast %54 : vector<1x8x32xf32> to vector<4x8x32xf32>
    %56 = vector.shape_cast %53 : vector<20x32xf32> to vector<1x20x32xf32>
    %57 = vector.broadcast %56 : vector<1x20x32xf32> to vector<4x20x32xf32>
    %cst_45 = arith.constant dense<0.000000e+00> : vector<4x8x8xf32>
    %58 = tpu.matmul %55, %6, %cst_45 {dimension_numbers = #tpu.dot_dimension_numbers<[2], [1], [1], [2], [0, 0, 0, 1, 1, 2], [0], [0]>} : vector<4x8x32xf32>, vector<4x32x8xf32>, vector<4x8x8xf32> -> vector<4x8x8xf32>
    %cst_46 = arith.constant dense<0.000000e+00> : vector<4x20x8xf32>
    %59 = tpu.matmul %57, %7, %cst_46 {dimension_numbers = #tpu.dot_dimension_numbers<[2], [1], [1], [2], [0, 0, 0, 1, 1, 2], [0], [0]>} : vector<4x20x32xf32>, vector<4x32x8xf32>, vector<4x20x8xf32> -> vector<4x20x8xf32>
    %cst_47 = arith.constant dense<0.000000e+00> : vector<4x20x8xf32>
    %60 = tpu.matmul %57, %8, %cst_47 {dimension_numbers = #tpu.dot_dimension_numbers<[2], [1], [1], [2], [0, 0, 0, 1, 1, 2], [0], [0]>} : vector<4x20x32xf32>, vector<4x32x8xf32>, vector<4x20x8xf32> -> vector<4x20x8xf32>
    %cst_48 = arith.constant 0.353553385 : f32
    %61 = vector.broadcast %cst_48 : f32 to vector<4x8x8xf32>
    %62 = arith.mulf %58, %61 : vector<4x8x8xf32>
    %63 = arith.addf %62, %17 : vector<4x8x8xf32>
    %cst_49 = arith.constant 0.353553385 : f32
    %64 = vector.broadcast %cst_49 : f32 to vector<4x8x8xf32>
    %65 = arith.mulf %58, %64 : vector<4x8x8xf32>
    %66 = arith.addf %65, %22 : vector<4x8x8xf32>
    %cst_50 = arith.constant dense<0.000000e+00> : vector<4x8x20xf32>
    %67 = tpu.matmul %63, %59, %cst_50 {dimension_numbers = #tpu.dot_dimension_numbers<[2], [2], [1], [1], [0, 0, 0, 1, 1, 1], [0], [0]>} : vector<4x8x8xf32>, vector<4x20x8xf32>, vector<4x8x20xf32> -> vector<4x8x20xf32>
    %cst_51 = arith.constant dense<0.000000e+00> : vector<4x8x21xf32>
    %68 = tpu.matmul %66, %26, %cst_51 {dimension_numbers = #tpu.dot_dimension_numbers<[2], [2], [1], [1], [0, 0, 0, 1, 1, 1], [0], [0]>} : vector<4x8x8xf32>, vector<4x21x8xf32>, vector<4x8x21xf32> -> vector<4x8x21xf32>
    %69 = vector.extract_strided_slice %68 {offsets = [0, 0, 1], sizes = [4, 8, 20], strides = [1, 1, 1]} : vector<4x8x21xf32> to vector<4x8x20xf32>
    %70 = vector.extract_strided_slice %68 {offsets = [0, 0, 0], sizes = [4, 8, 1], strides = [1, 1, 1]} : vector<4x8x21xf32> to vector<4x8x1xf32>
    %71 = tpu.concatenate %69, %70 in 2 : vector<4x8x20xf32>, vector<4x8x1xf32> -> vector<4x8x21xf32>
    %72 = arith.select %34, %71, %68 : vector<4x8x21xi1>, vector<4x8x21xf32>
    %73 = vector.extract_strided_slice %72 {offsets = [0, 0, 2], sizes = [4, 8, 19], strides = [1, 1, 1]} : vector<4x8x21xf32> to vector<4x8x19xf32>
    %74 = vector.extract_strided_slice %72 {offsets = [0, 0, 0], sizes = [4, 8, 2], strides = [1, 1, 1]} : vector<4x8x21xf32> to vector<4x8x2xf32>
    %75 = tpu.concatenate %73, %74 in 2 : vector<4x8x19xf32>, vector<4x8x2xf32> -> vector<4x8x21xf32>
    %76 = arith.select %38, %75, %72 : vector<4x8x21xi1>, vector<4x8x21xf32>
    %77 = vector.extract_strided_slice %76 {offsets = [0, 0, 4], sizes = [4, 8, 17], strides = [1, 1, 1]} : vector<4x8x21xf32> to vector<4x8x17xf32>
    %78 = vector.extract_strided_slice %76 {offsets = [0, 0, 0], sizes = [4, 8, 4], strides = [1, 1, 1]} : vector<4x8x21xf32> to vector<4x8x4xf32>
    %79 = tpu.concatenate %77, %78 in 2 : vector<4x8x17xf32>, vector<4x8x4xf32> -> vector<4x8x21xf32>
    %80 = arith.select %42, %79, %76 : vector<4x8x21xi1>, vector<4x8x21xf32>
    %81 = vector.extract_strided_slice %80 {offsets = [0, 0, 8], sizes = [4, 8, 13], strides = [1, 1, 1]} : vector<4x8x21xf32> to vector<4x8x13xf32>
    %82 = vector.extract_strided_slice %80 {offsets = [0, 0, 0], sizes = [4, 8, 8], strides = [1, 1, 1]} : vector<4x8x21xf32> to vector<4x8x8xf32>
    %83 = tpu.concatenate %81, %82 in 2 : vector<4x8x13xf32>, vector<4x8x8xf32> -> vector<4x8x21xf32>
    %84 = arith.select %46, %83, %80 : vector<4x8x21xi1>, vector<4x8x21xf32>
    %85 = vector.extract_strided_slice %84 {offsets = [0, 1, 0], sizes = [4, 7, 21], strides = [1, 1, 1]} : vector<4x8x21xf32> to vector<4x7x21xf32>
    %86 = vector.extract_strided_slice %84 {offsets = [0, 0, 0], sizes = [4, 1, 21], strides = [1, 1, 1]} : vector<4x8x21xf32> to vector<4x1x21xf32>
    %87 = tpu.concatenate %85, %86 in 1 : vector<4x7x21xf32>, vector<4x1x21xf32> -> vector<4x8x21xf32>
    %88 = vector.extract_strided_slice %87 {offsets = [0, 0, 1], sizes = [4, 8, 20], strides = [1, 1, 1]} : vector<4x8x21xf32> to vector<4x8x20xf32>
    %89 = vector.extract_strided_slice %87 {offsets = [0, 0, 0], sizes = [4, 8, 1], strides = [1, 1, 1]} : vector<4x8x21xf32> to vector<4x8x1xf32>
    %90 = tpu.concatenate %88, %89 in 2 : vector<4x8x20xf32>, vector<4x8x1xf32> -> vector<4x8x21xf32>
    %91 = arith.select %49, %84, %90 : vector<4x8x21xi1>, vector<4x8x21xf32>
    %92 = vector.extract_strided_slice %91 {offsets = [0, 0, 0], sizes = [4, 8, 20], strides = [1, 1, 1]} : vector<4x8x21xf32> to vector<4x8x20xf32>
    %93 = arith.addf %67, %92 : vector<4x8x20xf32>
    %cst_52 = arith.constant dense<0xFF800000> : vector<4x8xf32>
    %94 = vector.multi_reduction <maximumf>, %93, %cst_52 [2] : vector<4x8x20xf32> to vector<4x8xf32>
    %95 = vector.shape_cast %94 : vector<4x8xf32> to vector<4x8x1xf32>
    %96 = vector.broadcast %95 : vector<4x8x1xf32> to vector<4x8x20xf32>
    %97 = arith.subf %93, %96 : vector<4x8x20xf32>
    %98 = math.exp %97 : vector<4x8x20xf32>
    %cst_53 = arith.constant dense<0.000000e+00> : vector<4x8xf32>
    %99 = vector.multi_reduction <add>, %98, %cst_53 [2] : vector<4x8x20xf32> to vector<4x8xf32>
    %100 = vector.shape_cast %99 : vector<4x8xf32> to vector<4x8x1xf32>
    %101 = tpu.reciprocal %100 {approx = true} : vector<4x8x1xf32> -> vector<4x8x1xf32>
    %102 = vector.broadcast %101 : vector<4x8x1xf32> to vector<4x8x20xf32>
    %103 = arith.mulf %98, %102 : vector<4x8x20xf32>
    %cst_54 = arith.constant dense<0.000000e+00> : vector<4x8x8xf32>
    %104 = tpu.matmul %103, %60, %cst_54 {dimension_numbers = #tpu.dot_dimension_numbers<[2], [1], [1], [2], [0, 0, 0, 1, 1, 2], [0], [0]>} : vector<4x8x20xf32>, vector<4x20x8xf32>, vector<4x8x8xf32> -> vector<4x8x8xf32>
    %cst_55 = arith.constant dense<0.000000e+00> : vector<4x8x32xf32>
    %105 = tpu.matmul %104, %10, %cst_55 {dimension_numbers = #tpu.dot_dimension_numbers<[2], [1], [1], [2], [0, 0, 0, 1, 1, 2], [0], [0]>} : vector<4x8x8xf32>, vector<4x8x32xf32>, vector<4x8x32xf32> -> vector<4x8x32xf32>
    %cst_56 = arith.constant dense<0.000000e+00> : vector<8x32xf32>
    %106 = vector.multi_reduction <add>, %105, %cst_56 [0] : vector<4x8x32xf32> to vector<8x32xf32>
    %107 = arith.addf %51, %106 : vector<8x32xf32>
    %cst_57 = arith.constant dense<0.000000e+00> : vector<8xf32>
    %108 = vector.multi_reduction <add>, %107, %cst_57 [1] : vector<8x32xf32> to vector<8xf32>
    %109 = vector.shape_cast %108 : vector<8xf32> to vector<8x1xf32>
    %cst_58 = arith.constant 3.200000e+01 : f32
    %110 = vector.broadcast %cst_58 : f32 to vector<8x1xf32>
    %111 = arith.divf %109, %110 : vector<8x1xf32>
    %112 = vector.broadcast %111 : vector<8x1xf32> to vector<8x32xf32>
    %113 = arith.subf %107, %112 : vector<8x32xf32>
    %114 = arith.mulf %113, %113 : vector<8x32xf32>
    %cst_59 = arith.constant dense<0.000000e+00> : vector<8xf32>
    %115 = vector.multi_reduction <add>, %114, %cst_59 [1] : vector<8x32xf32> to vector<8xf32>
    %116 = vector.shape_cast %115 : vector<8xf32> to vector<8x1xf32>
    %cst_60 = arith.constant 3.200000e+01 : f32
    %117 = vector.broadcast %cst_60 : f32 to vector<8x1xf32>
    %118 = arith.divf %116, %117 : vector<8x1xf32>
    %119 = vector.broadcast %111 : vector<8x1xf32> to vector<8x32xf32>
    %120 = arith.subf %107, %119 : vector<8x32xf32>
    %cst_61 = arith.constant 9.99999974E-6 : f32
    %121 = vector.broadcast %cst_61 : f32 to vector<8x1xf32>
    %122 = arith.addf %118, %121 : vector<8x1xf32>
    %123 = math.rsqrt %122 : vector<8x1xf32>
    %124 = vector.broadcast %123 : vector<8x1xf32> to vector<8x32xf32>
    %125 = arith.mulf %120, %124 : vector<8x32xf32>
    %126 = vector.broadcast %0 : vector<1x32xf32> to vector<8x32xf32>
    %127 = arith.mulf %125, %126 : vector<8x32xf32>
    %128 = vector.broadcast %1 : vector<1x32xf32> to vector<8x32xf32>
    %129 = arith.addf %127, %128 : vector<8x32xf32>
    %cst_62 = arith.constant dense<0.000000e+00> : vector<8x64xf32>
    %130 = tpu.matmul %129, %11, %cst_62 {dimension_numbers = #tpu.dot_dimension_numbers<[1], [0], [0], [1], [0, 0, 1, 1], [], []>} : vector<8x32xf32>, vector<32x64xf32>, vector<8x64xf32> -> vector<8x64xf32>
    %131 = vector.broadcast %2 : vector<1x64xf32> to vector<8x64xf32>
    %132 = arith.addf %130, %131 : vector<8x64xf32>
    %cst_63 = arith.constant 0.000000e+00 : f32
    %133 = vector.broadcast %cst_63 : f32 to vector<8x64xf32>
    %134 = arith.maximumf %132, %133 : vector<8x64xf32>
    %cst_64 = arith.constant dense<0.000000e+00> : vector<8x32xf32>
    %135 = tpu.matmul %134, %12, %cst_64 {dimension_numbers = #tpu.dot_dimension_numbers<[1], [0], [0], [1], [0, 0, 1, 1], [], []>} : vector<8x64xf32>, vector<64x32xf32>, vector<8x32xf32> -> vector<8x32xf32>
    %136 = vector.broadcast %3 : vector<1x32xf32> to vector<8x32xf32>
    %137 = arith.addf %135, %136 : vector<8x32xf32>
    %138 = arith.addf %129, %137 : vector<8x32xf32>
    %cst_65 = arith.constant dense<0.000000e+00> : vector<8xf32>
    %139 = vector.multi_reduction <add>, %138, %cst_65 [1] : vector<8x32xf32> to vector<8xf32>
    %140 = vector.shape_cast %139 : vector<8xf32> to vector<8x1xf32>
    %cst_66 = arith.constant 3.200000e+01 : f32
    %141 = vector.broadcast %cst_66 : f32 to vector<8x1xf32>
    %142 = arith.divf %140, %141 : vector<8x1xf32>
    %143 = vector.broadcast %142 : vector<8x1xf32> to vector<8x32xf32>
    %144 = arith.subf %138, %143 : vector<8x32xf32>
    %145 = arith.mulf %144, %144 : vector<8x32xf32>
    %cst_67 = arith.constant dense<0.000000e+00> : vector<8xf32>
    %146 = vector.multi_reduction <add>, %145, %cst_67 [1] : vector<8x32xf32> to vector<8xf32>
    %147 = vector.shape_cast %146 : vector<8xf32> to vector<8x1xf32>
    %cst_68 = arith.constant 3.200000e+01 : f32
    %148 = vector.broadcast %cst_68 : f32 to vector<8x1xf32>
    %149 = arith.divf %147, %148 : vector<8x1xf32>
    %150 = vector.broadcast %142 : vector<8x1xf32> to vector<8x32xf32>
    %151 = arith.subf %138, %150 : vector<8x32xf32>
    %cst_69 = arith.constant 9.99999974E-6 : f32
    %152 = vector.broadcast %cst_69 : f32 to vector<8x1xf32>
    %153 = arith.addf %149, %152 : vector<8x1xf32>
    %154 = math.rsqrt %153 : vector<8x1xf32>
    %155 = vector.broadcast %154 : vector<8x1xf32> to vector<8x32xf32>
    %156 = arith.mulf %151, %155 : vector<8x32xf32>
    %157 = vector.broadcast %4 : vector<1x32xf32> to vector<8x32xf32>
    %158 = arith.mulf %156, %157 : vector<8x32xf32>
    %159 = vector.broadcast %5 : vector<1x32xf32> to vector<8x32xf32>
    %160 = arith.addf %158, %159 : vector<8x32xf32>
    %c0_70 = arith.constant 0 : index
    %c0_71 = arith.constant 0 : index
    %c0_72 = arith.constant 0 : index
    %161 = vector.load %arg13[%c0_70, %c0_71, %c0_72] : memref<2x8x32xf32, #tpu.memory_space<vmem>>, vector<1x8x32xf32>
    %162 = vector.shape_cast %161 : vector<1x8x32xf32> to vector<8x32xf32>
    %163 = vector.shape_cast %160 : vector<8x32xf32> to vector<1x8x32xf32>
    tpu.vector_store %arg13[%c0_70, %c0_71, %c0_72], %163 {strides = array<i32>} : memref<2x8x32xf32, #tpu.memory_space<vmem>>, vector<1x8x32xf32>,
    %c1_73 = arith.constant 1 : index
    %c0_74 = arith.constant 0 : index
    %c0_75 = arith.constant 0 : index
    %164 = vector.load %arg0[%c1_73, %c0_74, %c0_75] : memref<2x8x32xf32, #tpu.memory_space<vmem>>, vector<1x8x32xf32>
    %165 = vector.shape_cast %164 : vector<1x8x32xf32> to vector<8x32xf32>
    %c1_76 = arith.constant 1 : index
    %c0_77 = arith.constant 0 : index
    %c0_78 = arith.constant 0 : index
    %166 = vector.load %arg1[%c1_76, %c0_77, %c0_78] : memref<2x20x32xf32, #tpu.memory_space<vmem>>, vector<1x20x32xf32>
    %167 = vector.shape_cast %166 : vector<1x20x32xf32> to vector<20x32xf32>
    %168 = vector.shape_cast %165 : vector<8x32xf32> to vector<1x8x32xf32>
    %169 = vector.broadcast %168 : vector<1x8x32xf32> to vector<4x8x32xf32>
    %170 = vector.shape_cast %167 : vector<20x32xf32> to vector<1x20x32xf32>
    %171 = vector.broadcast %170 : vector<1x20x32xf32> to vector<4x20x32xf32>
    %cst_79 = arith.constant dense<0.000000e+00> : vector<4x8x8xf32>
    %172 = tpu.matmul %169, %6, %cst_79 {dimension_numbers = #tpu.dot_dimension_numbers<[2], [1], [1], [2], [0, 0, 0, 1, 1, 2], [0], [0]>} : vector<4x8x32xf32>, vector<4x32x8xf32>, vector<4x8x8xf32> -> vector<4x8x8xf32>
    %cst_80 = arith.constant dense<0.000000e+00> : vector<4x20x8xf32>
    %173 = tpu.matmul %171, %7, %cst_80 {dimension_numbers = #tpu.dot_dimension_numbers<[2], [1], [1], [2], [0, 0, 0, 1, 1, 2], [0], [0]>} : vector<4x20x32xf32>, vector<4x32x8xf32>, vector<4x20x8xf32> -> vector<4x20x8xf32>
    %cst_81 = arith.constant dense<0.000000e+00> : vector<4x20x8xf32>
    %174 = tpu.matmul %171, %8, %cst_81 {dimension_numbers = #tpu.dot_dimension_numbers<[2], [1], [1], [2], [0, 0, 0, 1, 1, 2], [0], [0]>} : vector<4x20x32xf32>, vector<4x32x8xf32>, vector<4x20x8xf32> -> vector<4x20x8xf32>
    %cst_82 = arith.constant 0.353553385 : f32
    %175 = vector.broadcast %cst_82 : f32 to vector<4x8x8xf32>
    %176 = arith.mulf %172, %175 : vector<4x8x8xf32>
    %177 = arith.addf %176, %17 : vector<4x8x8xf32>
    %cst_83 = arith.constant 0.353553385 : f32
    %178 = vector.broadcast %cst_83 : f32 to vector<4x8x8xf32>
    %179 = arith.mulf %172, %178 : vector<4x8x8xf32>
    %180 = arith.addf %179, %22 : vector<4x8x8xf32>
    %cst_84 = arith.constant dense<0.000000e+00> : vector<4x8x20xf32>
    %181 = tpu.matmul %177, %173, %cst_84 {dimension_numbers = #tpu.dot_dimension_numbers<[2], [2], [1], [1], [0, 0, 0, 1, 1, 1], [0], [0]>} : vector<4x8x8xf32>, vector<4x20x8xf32>, vector<4x8x20xf32> -> vector<4x8x20xf32>
    %cst_85 = arith.constant dense<0.000000e+00> : vector<4x8x21xf32>
    %182 = tpu.matmul %180, %26, %cst_85 {dimension_numbers = #tpu.dot_dimension_numbers<[2], [2], [1], [1], [0, 0, 0, 1, 1, 1], [0], [0]>} : vector<4x8x8xf32>, vector<4x21x8xf32>, vector<4x8x21xf32> -> vector<4x8x21xf32>
    %183 = vector.extract_strided_slice %182 {offsets = [0, 0, 1], sizes = [4, 8, 20], strides = [1, 1, 1]} : vector<4x8x21xf32> to vector<4x8x20xf32>
    %184 = vector.extract_strided_slice %182 {offsets = [0, 0, 0], sizes = [4, 8, 1], strides = [1, 1, 1]} : vector<4x8x21xf32> to vector<4x8x1xf32>
    %185 = tpu.concatenate %183, %184 in 2 : vector<4x8x20xf32>, vector<4x8x1xf32> -> vector<4x8x21xf32>
    %186 = arith.select %34, %185, %182 : vector<4x8x21xi1>, vector<4x8x21xf32>
    %187 = vector.extract_strided_slice %186 {offsets = [0, 0, 2], sizes = [4, 8, 19], strides = [1, 1, 1]} : vector<4x8x21xf32> to vector<4x8x19xf32>
    %188 = vector.extract_strided_slice %186 {offsets = [0, 0, 0], sizes = [4, 8, 2], strides = [1, 1, 1]} : vector<4x8x21xf32> to vector<4x8x2xf32>
    %189 = tpu.concatenate %187, %188 in 2 : vector<4x8x19xf32>, vector<4x8x2xf32> -> vector<4x8x21xf32>
    %190 = arith.select %38, %189, %186 : vector<4x8x21xi1>, vector<4x8x21xf32>
    %191 = vector.extract_strided_slice %190 {offsets = [0, 0, 4], sizes = [4, 8, 17], strides = [1, 1, 1]} : vector<4x8x21xf32> to vector<4x8x17xf32>
    %192 = vector.extract_strided_slice %190 {offsets = [0, 0, 0], sizes = [4, 8, 4], strides = [1, 1, 1]} : vector<4x8x21xf32> to vector<4x8x4xf32>
    %193 = tpu.concatenate %191, %192 in 2 : vector<4x8x17xf32>, vector<4x8x4xf32> -> vector<4x8x21xf32>
    %194 = arith.select %42, %193, %190 : vector<4x8x21xi1>, vector<4x8x21xf32>
    %195 = vector.extract_strided_slice %194 {offsets = [0, 0, 8], sizes = [4, 8, 13], strides = [1, 1, 1]} : vector<4x8x21xf32> to vector<4x8x13xf32>
    %196 = vector.extract_strided_slice %194 {offsets = [0, 0, 0], sizes = [4, 8, 8], strides = [1, 1, 1]} : vector<4x8x21xf32> to vector<4x8x8xf32>
    %197 = tpu.concatenate %195, %196 in 2 : vector<4x8x13xf32>, vector<4x8x8xf32> -> vector<4x8x21xf32>
    %198 = arith.select %46, %197, %194 : vector<4x8x21xi1>, vector<4x8x21xf32>
    %199 = vector.extract_strided_slice %198 {offsets = [0, 1, 0], sizes = [4, 7, 21], strides = [1, 1, 1]} : vector<4x8x21xf32> to vector<4x7x21xf32>
    %200 = vector.extract_strided_slice %198 {offsets = [0, 0, 0], sizes = [4, 1, 21], strides = [1, 1, 1]} : vector<4x8x21xf32> to vector<4x1x21xf32>
    %201 = tpu.concatenate %199, %200 in 1 : vector<4x7x21xf32>, vector<4x1x21xf32> -> vector<4x8x21xf32>
    %202 = vector.extract_strided_slice %201 {offsets = [0, 0, 1], sizes = [4, 8, 20], strides = [1, 1, 1]} : vector<4x8x21xf32> to vector<4x8x20xf32>
    %203 = vector.extract_strided_slice %201 {offsets = [0, 0, 0], sizes = [4, 8, 1], strides = [1, 1, 1]} : vector<4x8x21xf32> to vector<4x8x1xf32>
    %204 = tpu.concatenate %202, %203 in 2 : vector<4x8x20xf32>, vector<4x8x1xf32> -> vector<4x8x21xf32>
    %205 = arith.select %49, %198, %204 : vector<4x8x21xi1>, vector<4x8x21xf32>
    %206 = vector.extract_strided_slice %205 {offsets = [0, 0, 0], sizes = [4, 8, 20], strides = [1, 1, 1]} : vector<4x8x21xf32> to vector<4x8x20xf32>
    %207 = arith.addf %181, %206 : vector<4x8x20xf32>
    %cst_86 = arith.constant dense<0xFF800000> : vector<4x8xf32>
    %208 = vector.multi_reduction <maximumf>, %207, %cst_86 [2] : vector<4x8x20xf32> to vector<4x8xf32>
    %209 = vector.shape_cast %208 : vector<4x8xf32> to vector<4x8x1xf32>
    %210 = vector.broadcast %209 : vector<4x8x1xf32> to vector<4x8x20xf32>
    %211 = arith.subf %207, %210 : vector<4x8x20xf32>
    %212 = math.exp %211 : vector<4x8x20xf32>
    %cst_87 = arith.constant dense<0.000000e+00> : vector<4x8xf32>
    %213 = vector.multi_reduction <add>, %212, %cst_87 [2] : vector<4x8x20xf32> to vector<4x8xf32>
    %214 = vector.shape_cast %213 : vector<4x8xf32> to vector<4x8x1xf32>
    %215 = tpu.reciprocal %214 {approx = true} : vector<4x8x1xf32> -> vector<4x8x1xf32>
    %216 = vector.broadcast %215 : vector<4x8x1xf32> to vector<4x8x20xf32>
    %217 = arith.mulf %212, %216 : vector<4x8x20xf32>
    %cst_88 = arith.constant dense<0.000000e+00> : vector<4x8x8xf32>
    %218 = tpu.matmul %217, %174, %cst_88 {dimension_numbers = #tpu.dot_dimension_numbers<[2], [1], [1], [2], [0, 0, 0, 1, 1, 2], [0], [0]>} : vector<4x8x20xf32>, vector<4x20x8xf32>, vector<4x8x8xf32> -> vector<4x8x8xf32>
    %cst_89 = arith.constant dense<0.000000e+00> : vector<4x8x32xf32>
    %219 = tpu.matmul %218, %10, %cst_89 {dimension_numbers = #tpu.dot_dimension_numbers<[2], [1], [1], [2], [0, 0, 0, 1, 1, 2], [0], [0]>} : vector<4x8x8xf32>, vector<4x8x32xf32>, vector<4x8x32xf32> -> vector<4x8x32xf32>
    %cst_90 = arith.constant dense<0.000000e+00> : vector<8x32xf32>
    %220 = vector.multi_reduction <add>, %219, %cst_90 [0] : vector<4x8x32xf32> to vector<8x32xf32>
    %221 = arith.addf %165, %220 : vector<8x32xf32>
    %cst_91 = arith.constant dense<0.000000e+00> : vector<8xf32>
    %222 = vector.multi_reduction <add>, %221, %cst_91 [1] : vector<8x32xf32> to vector<8xf32>
    %223 = vector.shape_cast %222 : vector<8xf32> to vector<8x1xf32>
    %cst_92 = arith.constant 3.200000e+01 : f32
    %224 = vector.broadcast %cst_92 : f32 to vector<8x1xf32>
    %225 = arith.divf %223, %224 : vector<8x1xf32>
    %226 = vector.broadcast %225 : vector<8x1xf32> to vector<8x32xf32>
    %227 = arith.subf %221, %226 : vector<8x32xf32>
    %228 = arith.mulf %227, %227 : vector<8x32xf32>
    %cst_93 = arith.constant dense<0.000000e+00> : vector<8xf32>
    %229 = vector.multi_reduction <add>, %228, %cst_93 [1] : vector<8x32xf32> to vector<8xf32>
    %230 = vector.shape_cast %229 : vector<8xf32> to vector<8x1xf32>
    %cst_94 = arith.constant 3.200000e+01 : f32
    %231 = vector.broadcast %cst_94 : f32 to vector<8x1xf32>
    %232 = arith.divf %230, %231 : vector<8x1xf32>
    %233 = vector.broadcast %225 : vector<8x1xf32> to vector<8x32xf32>
    %234 = arith.subf %221, %233 : vector<8x32xf32>
    %cst_95 = arith.constant 9.99999974E-6 : f32
    %235 = vector.broadcast %cst_95 : f32 to vector<8x1xf32>
    %236 = arith.addf %232, %235 : vector<8x1xf32>
    %237 = math.rsqrt %236 : vector<8x1xf32>
    %238 = vector.broadcast %237 : vector<8x1xf32> to vector<8x32xf32>
    %239 = arith.mulf %234, %238 : vector<8x32xf32>
    %240 = vector.broadcast %0 : vector<1x32xf32> to vector<8x32xf32>
    %241 = arith.mulf %239, %240 : vector<8x32xf32>
    %242 = vector.broadcast %1 : vector<1x32xf32> to vector<8x32xf32>
    %243 = arith.addf %241, %242 : vector<8x32xf32>
    %cst_96 = arith.constant dense<0.000000e+00> : vector<8x64xf32>
    %244 = tpu.matmul %243, %11, %cst_96 {dimension_numbers = #tpu.dot_dimension_numbers<[1], [0], [0], [1], [0, 0, 1, 1], [], []>} : vector<8x32xf32>, vector<32x64xf32>, vector<8x64xf32> -> vector<8x64xf32>
    %245 = vector.broadcast %2 : vector<1x64xf32> to vector<8x64xf32>
    %246 = arith.addf %244, %245 : vector<8x64xf32>
    %cst_97 = arith.constant 0.000000e+00 : f32
    %247 = vector.broadcast %cst_97 : f32 to vector<8x64xf32>
    %248 = arith.maximumf %246, %247 : vector<8x64xf32>
    %cst_98 = arith.constant dense<0.000000e+00> : vector<8x32xf32>
    %249 = tpu.matmul %248, %12, %cst_98 {dimension_numbers = #tpu.dot_dimension_numbers<[1], [0], [0], [1], [0, 0, 1, 1], [], []>} : vector<8x64xf32>, vector<64x32xf32>, vector<8x32xf32> -> vector<8x32xf32>
    %250 = vector.broadcast %3 : vector<1x32xf32> to vector<8x32xf32>
    %251 = arith.addf %249, %250 : vector<8x32xf32>
    %252 = arith.addf %243, %251 : vector<8x32xf32>
    %cst_99 = arith.constant dense<0.000000e+00> : vector<8xf32>
    %253 = vector.multi_reduction <add>, %252, %cst_99 [1] : vector<8x32xf32> to vector<8xf32>
    %254 = vector.shape_cast %253 : vector<8xf32> to vector<8x1xf32>
    %cst_100 = arith.constant 3.200000e+01 : f32
    %255 = vector.broadcast %cst_100 : f32 to vector<8x1xf32>
    %256 = arith.divf %254, %255 : vector<8x1xf32>
    %257 = vector.broadcast %256 : vector<8x1xf32> to vector<8x32xf32>
    %258 = arith.subf %252, %257 : vector<8x32xf32>
    %259 = arith.mulf %258, %258 : vector<8x32xf32>
    %cst_101 = arith.constant dense<0.000000e+00> : vector<8xf32>
    %260 = vector.multi_reduction <add>, %259, %cst_101 [1] : vector<8x32xf32> to vector<8xf32>
    %261 = vector.shape_cast %260 : vector<8xf32> to vector<8x1xf32>
    %cst_102 = arith.constant 3.200000e+01 : f32
    %262 = vector.broadcast %cst_102 : f32 to vector<8x1xf32>
    %263 = arith.divf %261, %262 : vector<8x1xf32>
    %264 = vector.broadcast %256 : vector<8x1xf32> to vector<8x32xf32>
    %265 = arith.subf %252, %264 : vector<8x32xf32>
    %cst_103 = arith.constant 9.99999974E-6 : f32
    %266 = vector.broadcast %cst_103 : f32 to vector<8x1xf32>
    %267 = arith.addf %263, %266 : vector<8x1xf32>
    %268 = math.rsqrt %267 : vector<8x1xf32>
    %269 = vector.broadcast %268 : vector<8x1xf32> to vector<8x32xf32>
    %270 = arith.mulf %265, %269 : vector<8x32xf32>
    %271 = vector.broadcast %4 : vector<1x32xf32> to vector<8x32xf32>
    %272 = arith.mulf %270, %271 : vector<8x32xf32>
    %273 = vector.broadcast %5 : vector<1x32xf32> to vector<8x32xf32>
    %274 = arith.addf %272, %273 : vector<8x32xf32>
    %c1_104 = arith.constant 1 : index
    %c0_105 = arith.constant 0 : index
    %c0_106 = arith.constant 0 : index
    %275 = vector.load %arg13[%c1_104, %c0_105, %c0_106] : memref<2x8x32xf32, #tpu.memory_space<vmem>>, vector<1x8x32xf32>
    %276 = vector.shape_cast %275 : vector<1x8x32xf32> to vector<8x32xf32>
    %277 = vector.shape_cast %274 : vector<8x32xf32> to vector<1x8x32xf32>
    tpu.vector_store %arg13[%c1_104, %c0_105, %c0_106], %277 {strides = array<i32>} : memref<2x8x32xf32, #tpu.memory_space<vmem>>, vector<1x8x32xf32>,
    return
  }
}

</mosaic_0001>

<llo_original>
// kernel: tpu_custom_call.1
$region0: #{tpu_custom_call.1}
  #allocation0 [shape = 'u32[]', space=smem, size = 0x4, offset = 0x4, fixed_abs, tag = 'smem constant byte address 0x4 - core index']
  #allocation1 [shape = 'u32[144,128]{1,0:T(1,128)}', space=vmem, size = 0x12000, scoped, tag = 'internal scratch']
  %s0 = inlined_call_operand.vmem [shape: f32[2,8,32], index: 0, kind: input, shape index: {}]
  %s1 = inlined_call_operand.vmem [shape: f32[2,20,32], index: 1, kind: input, shape index: {}]
  %s2 = inlined_call_operand.vmem [shape: f32[21,32], index: 2, kind: input, shape index: {}]
  %s3 = inlined_call_operand.vmem [shape: f32[4,32,8], index: 3, kind: input, shape index: {}]
  %s4 = inlined_call_operand.vmem [shape: f32[4,32,8], index: 4, kind: input, shape index: {}]
  %s5 = inlined_call_operand.vmem [shape: f32[4,32,8], index: 5, kind: input, shape index: {}]
  %s6 = inlined_call_operand.vmem [shape: f32[4,32,8], index: 6, kind: input, shape index: {}]
  %s7 = inlined_call_operand.vmem [shape: f32[4,8,32], index: 7, kind: input, shape index: {}]
  %s8 = inlined_call_operand.vmem [shape: f32[32,64], index: 8, kind: input, shape index: {}]
  %s9 = inlined_call_operand.vmem [shape: f32[64,32], index: 9, kind: input, shape index: {}]
  %s10 = inlined_call_operand.vmem [shape: f32[4,1,8], index: 10, kind: input, shape index: {}]
  %s11 = inlined_call_operand.vmem [shape: f32[4,1,8], index: 11, kind: input, shape index: {}]
  %s12 = inlined_call_operand.vmem [shape: f32[6,64], index: 12, kind: input, shape index: {}]
  %s13 = inlined_call_operand.hbm [shape: f32[2,8,32], index: 13, kind: output, shape index: {}]
  %s14 = sld [smem:[#allocation0]]
  $region62: #{tpu_custom_call.1} parent=0
    _
  %s16 = ssub.s32 1, %s14
  %s17 = scalar_select 0, %s16, %s14
  $region1: #{tpu_custom_call.1} parent=0
    #allocation2 [shape = 'u8[8192]{0}', space=vmem, size = 0x2000, scoped, tag = 'output window, operand 0, single buffered']
    #allocation3 [shape = 's32[1]{0}', space=sflag, size = 0x4, scoped, tag = 'scoped memory for tpu_custom_call.1']
    %18 = vsyncpa [#allocation3], 0
    // Predicated region
    $region2: #{tpu_custom_call.1} parent=1 // pred_check
      _
    $region3: #{tpu_custom_call.1} parent=1 // pred_check_branch
      %20 = sbr.rel (0) target = $region5
    $region4: #{tpu_custom_call.1} parent=1 // pred_region
      _
    $region5: #{tpu_custom_call.1} parent=1 // pred_fallthru
      _
    // Predicated region
    $region6: #{tpu_custom_call.1} parent=1 // pred_check
      _
    $region7: #{tpu_custom_call.1} parent=1 // pred_check_branch
      %22 = sbr.rel (0) target = $region9
    $region8: #{tpu_custom_call.1} parent=1 // pred_region
      _
    $region9: #{tpu_custom_call.1} parent=1 // pred_fallthru
      _
    // Predicated region
    $region10: #{tpu_custom_call.1} parent=1 // pred_check
      _
    $region11: #{tpu_custom_call.1} parent=1 // pred_check_branch
      %24 = sbr.rel (0) target = $region13
    $region12: #{tpu_custom_call.1} parent=1 // pred_region
      _
    $region13: #{tpu_custom_call.1} parent=1 // pred_fallthru
      _
    // Predicated region
    $region14: #{tpu_custom_call.1} parent=1 // pred_check
      _
    $region15: #{tpu_custom_call.1} parent=1 // pred_check_branch
      %26 = sbr.rel (0) target = $region17
    $region16: #{tpu_custom_call.1} parent=1 // pred_region
      _
    $region17: #{tpu_custom_call.1} parent=1 // pred_fallthru
      _
    // Predicated region
    $region18: #{tpu_custom_call.1} parent=1 // pred_check
      _
    $region19: #{tpu_custom_call.1} parent=1 // pred_check_branch
      %28 = sbr.rel (0) target = $region21
    $region20: #{tpu_custom_call.1} parent=1 // pred_region
      _
    $region21: #{tpu_custom_call.1} parent=1 // pred_fallthru
      _
    // Predicated region
    $region22: #{tpu_custom_call.1} parent=1 // pred_check
      _
    $region23: #{tpu_custom_call.1} parent=1 // pred_check_branch
      %30 = sbr.rel (0) target = $region25
    $region24: #{tpu_custom_call.1} parent=1 // pred_region
      _
    $region25: #{tpu_custom_call.1} parent=1 // pred_fallthru
      _
    // Predicated region
    $region26: #{tpu_custom_call.1} parent=1 // pred_check
      _
    $region27: #{tpu_custom_call.1} parent=1 // pred_check_branch
      %32 = sbr.rel (0) target = $region29
    $region28: #{tpu_custom_call.1} parent=1 // pred_region
      _
    $region29: #{tpu_custom_call.1} parent=1 // pred_fallthru
      _
    // Predicated region
    $region30: #{tpu_custom_call.1} parent=1 // pred_check
      _
    $region31: #{tpu_custom_call.1} parent=1 // pred_check_branch
      %34 = sbr.rel (0) target = $region33
    $region32: #{tpu_custom_call.1} parent=1 // pred_region
      _
    $region33: #{tpu_custom_call.1} parent=1 // pred_fallthru
      _
    // Predicated region
    $region34: #{tpu_custom_call.1} parent=1 // pred_check
      _
    $region35: #{tpu_custom_call.1} parent=1 // pred_check_branch
      %36 = sbr.rel (0) target = $region37
    $region36: #{tpu_custom_call.1} parent=1 // pred_region
      _
    $region37: #{tpu_custom_call.1} parent=1 // pred_fallthru
      _
    // Predicated region
    $region38: #{tpu_custom_call.1} parent=1 // pred_check
      _
    $region39: #{tpu_custom_call.1} parent=1 // pred_check_branch
      %38 = sbr.rel (0) target = $region41
    $region40: #{tpu_custom_call.1} parent=1 // pred_region
      _
    $region41: #{tpu_custom_call.1} parent=1 // pred_fallthru
      _
    // Predicated region
    $region42: #{tpu_custom_call.1} parent=1 // pred_check
      _
    $region43: #{tpu_custom_call.1} parent=1 // pred_check_branch
      %40 = sbr.rel (0) target = $region45
    $region44: #{tpu_custom_call.1} parent=1 // pred_region
      _
    $region45: #{tpu_custom_call.1} parent=1 // pred_fallthru
      _
    // Predicated region
    $region46: #{tpu_custom_call.1} parent=1 // pred_check
      _
    $region47: #{tpu_custom_call.1} parent=1 // pred_check_branch
      %42 = sbr.rel (0) target = $region49
    $region48: #{tpu_custom_call.1} parent=1 // pred_region
      _
    $region49: #{tpu_custom_call.1} parent=1 // pred_fallthru
      _
    // Predicated region
    $region50: #{tpu_custom_call.1} parent=1 // pred_check
      _
    $region51: #{tpu_custom_call.1} parent=1 // pred_check_branch
      %44 = sbr.rel (0) target = $region53
    $region52: #{tpu_custom_call.1} parent=1 // pred_region
      _
    $region53: #{tpu_custom_call.1} parent=1 // pred_fallthru
      _
    %v45 = vld [vmem:[%s12] sm:$0x1]
    %v46 = vld [vmem:[%s12 + $0x1] sm:$0x1]
    %v47 = vld [vmem:[%s12 + $0x2] sm:$0x1]
    %v48 = vld [vmem:[%s12 + $0x3] sm:$0x1]
    %v49 = vld [vmem:[%s12 + $0x4] sm:$0x1]
    %v50 = vld [vmem:[%s12 + $0x5] sm:$0x1]
    %v51 = vld [vmem:[%s3] sm:$0xff]
    %v52 = vld [vmem:[%s3 + $0x8] sm:$0xff]
    %v53 = vld [vmem:[%s3 + $0x10] sm:$0xff]
    %v54 = vld [vmem:[%s3 + $0x18] sm:$0xff]
    %v55 = vld [vmem:[%s3 + $0x20] sm:$0xff]
    %v56 = vld [vmem:[%s3 + $0x28] sm:$0xff]
    %v57 = vld [vmem:[%s3 + $0x30] sm:$0xff]
    %v58 = vld [vmem:[%s3 + $0x38] sm:$0xff]
    %v59 = vld [vmem:[%s3 + $0x40] sm:$0xff]
    %v60 = vld [vmem:[%s3 + $0x48] sm:$0xff]
    %v61 = vld [vmem:[%s3 + $0x50] sm:$0xff]
    %v62 = vld [vmem:[%s3 + $0x58] sm:$0xff]
    %v63 = vld [vmem:[%s3 + $0x60] sm:$0xff]
    %v64 = vld [vmem:[%s3 + $0x68] sm:$0xff]
    %v65 = vld [vmem:[%s3 + $0x70] sm:$0xff]
    %v66 = vld [vmem:[%s3 + $0x78] sm:$0xff]
    %v67 = vld [vmem:[%s4] sm:$0xff]
    %v68 = vld [vmem:[%s4 + $0x8] sm:$0xff]
    %v69 = vld [vmem:[%s4 + $0x10] sm:$0xff]
    %v70 = vld [vmem:[%s4 + $0x18] sm:$0xff]
    %v71 = vld [vmem:[%s4 + $0x20] sm:$0xff]
    %v72 = vld [vmem:[%s4 + $0x28] sm:$0xff]
    %v73 = vld [vmem:[%s4 + $0x30] sm:$0xff]
    %v74 = vld [vmem:[%s4 + $0x38] sm:$0xff]
    %v75 = vld [vmem:[%s4 + $0x40] sm:$0xff]
    %v76 = vld [vmem:[%s4 + $0x48] sm:$0xff]
    %v77 = vld [vmem:[%s4 + $0x50] sm:$0xff]
    %v78 = vld [vmem:[%s4 + $0x58] sm:$0xff]
    %v79 = vld [vmem:[%s4 + $0x60] sm:$0xff]
    %v80 = vld [vmem:[%s4 + $0x68] sm:$0xff]
    %v81 = vld [vmem:[%s4 + $0x70] sm:$0xff]
    %v82 = vld [vmem:[%s4 + $0x78] sm:$0xff]
    %v83 = vld [vmem:[%s5] sm:$0xff]
    %v84 = vld [vmem:[%s5 + $0x8] sm:$0xff]
    %v85 = vld [vmem:[%s5 + $0x10] sm:$0xff]
    %v86 = vld [vmem:[%s5 + $0x18] sm:$0xff]
    %v87 = vld [vmem:[%s5 + $0x20] sm:$0xff]
    %v88 = vld [vmem:[%s5 + $0x28] sm:$0xff]
    %v89 = vld [vmem:[%s5 + $0x30] sm:$0xff]
    %v90 = vld [vmem:[%s5 + $0x38] sm:$0xff]
    %v91 = vld [vmem:[%s5 + $0x40] sm:$0xff]
    %v92 = vld [vmem:[%s5 + $0x48] sm:$0xff]
    %v93 = vld [vmem:[%s5 + $0x50] sm:$0xff]
    %v94 = vld [vmem:[%s5 + $0x58] sm:$0xff]
    %v95 = vld [vmem:[%s5 + $0x60] sm:$0xff]
    %v96 = vld [vmem:[%s5 + $0x68] sm:$0xff]
    %v97 = vld [vmem:[%s5 + $0x70] sm:$0xff]
    %v98 = vld [vmem:[%s5 + $0x78] sm:$0xff]
    %v99 = vld [vmem:[%s6] sm:$0xff]
    %v100 = vld [vmem:[%s6 + $0x8] sm:$0xff]
    %v101 = vld [vmem:[%s6 + $0x10] sm:$0xff]
    %v102 = vld [vmem:[%s6 + $0x18] sm:$0xff]
    %v103 = vld [vmem:[%s6 + $0x20] sm:$0xff]
    %v104 = vld [vmem:[%s6 + $0x28] sm:$0xff]
    %v105 = vld [vmem:[%s6 + $0x30] sm:$0xff]
    %v106 = vld [vmem:[%s6 + $0x38] sm:$0xff]
    %v107 = vld [vmem:[%s6 + $0x40] sm:$0xff]
    %v108 = vld [vmem:[%s6 + $0x48] sm:$0xff]
    %v109 = vld [vmem:[%s6 + $0x50] sm:$0xff]
    %v110 = vld [vmem:[%s6 + $0x58] sm:$0xff]
    %v111 = vld [vmem:[%s6 + $0x60] sm:$0xff]
    %v112 = vld [vmem:[%s6 + $0x68] sm:$0xff]
    %v113 = vld [vmem:[%s6 + $0x70] sm:$0xff]
    %v114 = vld [vmem:[%s6 + $0x78] sm:$0xff]
    %v115 = vld [vmem:[%s7] sm:$0xff]
    %v116 = vld [vmem:[%s7 + $0x8] sm:$0xff]
    %v117 = vld [vmem:[%s7 + $0x10] sm:$0xff]
    %v118 = vld [vmem:[%s7 + $0x18] sm:$0xff]
    %v119 = vld [vmem:[%s8] sm:$0xff]
    %v120 = vld [vmem:[%s8 + $0x8] sm:$0xff]
    %v121 = vld [vmem:[%s8 + $0x10] sm:$0xff]
    %v122 = vld [vmem:[%s8 + $0x18] sm:$0xff]
    %v123 = vld [vmem:[%s9] sm:$0xff]
    %v124 = vld [vmem:[%s9 + $0x8] sm:$0xff]
    %v125 = vld [vmem:[%s9 + $0x10] sm:$0xff]
    %v126 = vld [vmem:[%s9 + $0x18] sm:$0xff]
    %v127 = vld [vmem:[%s9 + $0x20] sm:$0xff]
    %v128 = vld [vmem:[%s9 + $0x28] sm:$0xff]
    %v129 = vld [vmem:[%s9 + $0x30] sm:$0xff]
    %v130 = vld [vmem:[%s9 + $0x38] sm:$0xff]
    %v131 = vld [vmem:[%s10] sm:$0x1]
    %v132 = vld [vmem:[%s10 + $0x1] sm:$0x1]
    %v133 = vld [vmem:[%s10 + $0x2] sm:$0x1]
    %v134 = vld [vmem:[%s10 + $0x3] sm:$0x1]
    %v135 = vmul.f32 %v131, 0.35355338
    %v136 = vmul.f32 %v132, 0.35355338
    %v137 = vmul.f32 %v133, 0.35355338
    %v138 = vmul.f32 %v134, 0.35355338
    %v143 = vlaneseq
    %v144 = vshrl.u32 %v143, 7
    %v145 = vsub.s32 0, %v144
    %v146 = vrot.slane %v135, %v145
    %v147 = vlaneseq
    %v148 = vshrl.u32 %v147, 7
    %v149 = vsub.s32 0, %v148
    %v150 = vrot.slane %v136, %v149
    %v151 = vlaneseq
    %v152 = vshrl.u32 %v151, 7
    %v153 = vsub.s32 0, %v152
    %v154 = vrot.slane %v137, %v153
    %v155 = vlaneseq
    %v156 = vshrl.u32 %v155, 7
    %v157 = vsub.s32 0, %v156
    %v158 = vrot.slane %v138, %v157
    %v163 = vld [vmem:[%s11] sm:$0x1]
    %v164 = vld [vmem:[%s11 + $0x1] sm:$0x1]
    %v165 = vld [vmem:[%s11 + $0x2] sm:$0x1]
    %v166 = vld [vmem:[%s11 + $0x3] sm:$0x1]
    %v167 = vmul.f32 %v163, 0.35355338
    %v168 = vmul.f32 %v164, 0.35355338
    %v169 = vmul.f32 %v165, 0.35355338
    %v170 = vmul.f32 %v166, 0.35355338
    %v175 = vlaneseq
    %v176 = vshrl.u32 %v175, 7
    %v177 = vsub.s32 0, %v176
    %v178 = vrot.slane %v167, %v177
    %v179 = vlaneseq
    %v180 = vshrl.u32 %v179, 7
    %v181 = vsub.s32 0, %v180
    %v182 = vrot.slane %v168, %v181
    %v183 = vlaneseq
    %v184 = vshrl.u32 %v183, 7
    %v185 = vsub.s32 0, %v184
    %v186 = vrot.slane %v169, %v185
    %v187 = vlaneseq
    %v188 = vshrl.u32 %v187, 7
    %v189 = vsub.s32 0, %v188
    %v190 = vrot.slane %v170, %v189
    %v195 = vld [vmem:[%s2] sm:$0xff]
    %v196 = vld [vmem:[%s2 + $0x8] sm:$0xff]
    %v197 = vld [vmem:[%s2 + $0x10] sm:$0x1f]
    %vm198 = vcmask 261120
    %v200 = vsel %vm198, %v195, 0
    %v203 = vsel %vm198, %v196, 0
    %v206 = vsel %vm198, %v197, 0
    %208 = vmatprep.subr.mxu0 0.0
    %209 = vmatpush1.msra.mxu0 %v99
    %210 = vmatprep.subr.mxu0 0.0
    %211 = vmatpush1.msra.mxu0 %v100
    %212 = vmatprep.subr.mxu0 0.0
    %213 = vmatpush1.msra.mxu0 %v101
    %214 = vmatprep.subr.mxu0 0.0
    %215 = vmatpush1.msra.mxu0 %v102
    %216 = vmatprep.subr.mxu0 0.0
    %217 = vmatpush1.msra.mxu0 0.0
    %218 = vmatprep.subr.mxu0 0.0
    %219 = vmatpush1.msra.mxu0 0.0
    %220 = vmatprep.subr.mxu0 0.0
    %221 = vmatpush1.msra.mxu0 0.0
    %222 = vmatprep.subr.mxu0 0.0
    %223 = vmatpush1.msra.mxu0 0.0
    %224 = vmatprep.subr.mxu0 0.0
    %225 = vmatpush1.msra.mxu0 0.0
    %226 = vmatprep.subr.mxu0 0.0
    %227 = vmatpush1.msra.mxu0 0.0
    %228 = vmatprep.subr.mxu0 0.0
    %229 = vmatpush1.msra.mxu0 0.0
    %230 = vmatprep.subr.mxu0 0.0
    %231 = vmatpush1.msra.mxu0 0.0
    %232 = vmatprep.subr.mxu0 0.0
    %233 = vmatpush1.msra.mxu0 0.0
    %234 = vmatprep.subr.mxu0 0.0
    %235 = vmatpush1.msra.mxu0 0.0
    %236 = vmatprep.subr.mxu0 0.0
    %237 = vmatpush1.msra.mxu0 0.0
    %238 = vmatprep.subr.mxu0 0.0
    %239 = vmatpush1.msra.mxu0 0.0
    %240 = vmatprep.subr.mxu0 0.0
    %241 = vmatpush1.msra.mxu0 0.0
    %242 = vmatprep.subr.mxu0 0.0
    %243 = vmatpush1.msra.mxu0 0.0
    %244 = vmatprep.subr.mxu0 0.0
    %245 = vmatpush1.msra.mxu0 0.0
    %246 = vmatprep.subr.mxu0 0.0
    %247 = vmatpush1.msra.mxu0 0.0
    %248 = vmatprep.subr.mxu0 0.0
    %249 = vmatpush1.msra.mxu0 0.0
    %250 = vmatprep.subr.mxu0 0.0
    %251 = vmatpush1.msra.mxu0 0.0
    %252 = vmatprep.subr.mxu0 0.0
    %253 = vmatpush1.msra.mxu0 0.0
    %254 = vmatprep.subr.mxu0 0.0
    %255 = vmatpush1.msra.mxu0 0.0
    %256 = vmatprep.subr.mxu0 0.0
    %257 = vmatpush1.msra.mxu0 0.0
    %258 = vmatprep.subr.mxu0 0.0
    %259 = vmatpush1.msra.mxu0 0.0
    %260 = vmatprep.subr.mxu0 0.0
    %261 = vmatpush1.msra.mxu0 0.0
    %262 = vmatprep.subr.mxu0 0.0
    %263 = vmatpush1.msra.mxu0 0.0
    %264 = vmatprep.subr.mxu0 0.0
    %265 = vmatpush1.msra.mxu0 0.0
    %266 = vmatprep.subr.mxu0 0.0
    %267 = vmatpush1.msra.mxu0 0.0
    %268 = vmatprep.subr.mxu0 0.0
    %269 = vmatpush1.msra.mxu0 0.0
    %270 = vmatprep.subr.mxu0 0.0
    %271 = vmatpush1.msra.mxu0 0.0
    %272 = vmatprep.mubr.f32.mxu0 0.0
    %273 = vmatmul.mubr.f32.gmra.mrb[0].mxu0 %v200
    %v274 = vpop.f32.mrb[0].mxu0
    %v275 = vadd.f32 0.0, %v274
    %v276 = vpop.f32.mrb[0].mxu0
    %277 = vmatprep.mubr.f32.mxu0 0.0
    %278 = vmatmul.mubr.f32.gmra.mrb[0].mxu0 %v203
    %v279 = vpop.f32.mrb[0].mxu0
    %v280 = vadd.f32 0.0, %v279
    %v281 = vpop.f32.mrb[0].mxu0
    %282 = vmatprep.mubr.f32.mxu0 0.0
    %283 = vmatmul.mubr.f32.gmra.mrb[0].mxu0 %v206
    %v284 = vpop.f32.mrb[0].mxu0
    %v285 = vadd.f32 0.0, %v284
    %v286 = vpop.f32.mrb[0].mxu0
    %287 = vdwg.mxu0
    %288 = vmatprep.subr.mxu0 0.0
    %289 = vmatpush1.msra.mxu0 %v103
    %290 = vmatprep.subr.mxu0 0.0
    %291 = vmatpush1.msra.mxu0 %v104
    %292 = vmatprep.subr.mxu0 0.0
    %293 = vmatpush1.msra.mxu0 %v105
    %294 = vmatprep.subr.mxu0 0.0
    %295 = vmatpush1.msra.mxu0 %v106
    %296 = vmatprep.subr.mxu0 0.0
    %297 = vmatpush1.msra.mxu0 0.0
    %298 = vmatprep.subr.mxu0 0.0
    %299 = vmatpush1.msra.mxu0 0.0
    %300 = vmatprep.subr.mxu0 0.0
    %301 = vmatpush1.msra.mxu0 0.0
    %302 = vmatprep.subr.mxu0 0.0
    %303 = vmatpush1.msra.mxu0 0.0
    %304 = vmatprep.subr.mxu0 0.0
    %305 = vmatpush1.msra.mxu0 0.0
    %306 = vmatprep.subr.mxu0 0.0
    %307 = vmatpush1.msra.mxu0 0.0
    %308 = vmatprep.subr.mxu0 0.0
    %309 = vmatpush1.msra.mxu0 0.0
    %310 = vmatprep.subr.mxu0 0.0
    %311 = vmatpush1.msra.mxu0 0.0
    %312 = vmatprep.subr.mxu0 0.0
    %313 = vmatpush1.msra.mxu0 0.0
    %314 = vmatprep.subr.mxu0 0.0
    %315 = vmatpush1.msra.mxu0 0.0
    %316 = vmatprep.subr.mxu0 0.0
    %317 = vmatpush1.msra.mxu0 0.0
    %318 = vmatprep.subr.mxu0 0.0
    %319 = vmatpush1.msra.mxu0 0.0
    %320 = vmatprep.subr.mxu0 0.0
    %321 = vmatpush1.msra.mxu0 0.0
    %322 = vmatprep.subr.mxu0 0.0
    %323 = vmatpush1.msra.mxu0 0.0
    %324 = vmatprep.subr.mxu0 0.0
    %325 = vmatpush1.msra.mxu0 0.0
    %326 = vmatprep.subr.mxu0 0.0
    %327 = vmatpush1.msra.mxu0 0.0
    %328 = vmatprep.subr.mxu0 0.0
    %329 = vmatpush1.msra.mxu0 0.0
    %330 = vmatprep.subr.mxu0 0.0
    %331 = vmatpush1.msra.mxu0 0.0
    %332 = vmatprep.subr.mxu0 0.0
    %333 = vmatpush1.msra.mxu0 0.0
    %334 = vmatprep.subr.mxu0 0.0
    %335 = vmatpush1.msra.mxu0 0.0
    %336 = vmatprep.subr.mxu0 0.0
    %337 = vmatpush1.msra.mxu0 0.0
    %338 = vmatprep.subr.mxu0 0.0
    %339 = vmatpush1.msra.mxu0 0.0
    %340 = vmatprep.subr.mxu0 0.0
    %341 = vmatpush1.msra.mxu0 0.0
    %342 = vmatprep.subr.mxu0 0.0
    %343 = vmatpush1.msra.mxu0 0.0
    %344 = vmatprep.subr.mxu0 0.0
    %345 = vmatpush1.msra.mxu0 0.0
    %346 = vmatprep.subr.mxu0 0.0
    %347 = vmatpush1.msra.mxu0 0.0
    %348 = vmatprep.subr.mxu0 0.0
    %349 = vmatpush1.msra.mxu0 0.0
    %350 = vmatprep.subr.mxu0 0.0
    %351 = vmatpush1.msra.mxu0 0.0
    %352 = vmatprep.mubr.f32.mxu0 0.0
    %353 = vmatmul.mubr.f32.gmra.mrb[0].mxu0 %v200
    %v354 = vpop.f32.mrb[0].mxu0
    %v355 = vadd.f32 0.0, %v354
    %v356 = vpop.f32.mrb[0].mxu0
    %357 = vmatprep.mubr.f32.mxu0 0.0
    %358 = vmatmul.mubr.f32.gmra.mrb[0].mxu0 %v203
    %v359 = vpop.f32.mrb[0].mxu0
    %v360 = vadd.f32 0.0, %v359
    %v361 = vpop.f32.mrb[0].mxu0
    %362 = vmatprep.mubr.f32.mxu0 0.0
    %363 = vmatmul.mubr.f32.gmra.mrb[0].mxu0 %v206
    %v364 = vpop.f32.mrb[0].mxu0
    %v365 = vadd.f32 0.0, %v364
    %v366 = vpop.f32.mrb[0].mxu0
    %367 = vdwg.mxu0
    %368 = vmatprep.subr.mxu0 0.0
    %369 = vmatpush1.msra.mxu0 %v107
    %370 = vmatprep.subr.mxu0 0.0
    %371 = vmatpush1.msra.mxu0 %v108
    %372 = vmatprep.subr.mxu0 0.0
    %373 = vmatpush1.msra.mxu0 %v109
    %374 = vmatprep.subr.mxu0 0.0
    %375 = vmatpush1.msra.mxu0 %v110
    %376 = vmatprep.subr.mxu0 0.0
    %377 = vmatpush1.msra.mxu0 0.0
    %378 = vmatprep.subr.mxu0 0.0
    %379 = vmatpush1.msra.mxu0 0.0
    %380 = vmatprep.subr.mxu0 0.0
    %381 = vmatpush1.msra.mxu0 0.0
    %382 = vmatprep.subr.mxu0 0.0
    %383 = vmatpush1.msra.mxu0 0.0
    %384 = vmatprep.subr.mxu0 0.0
    %385 = vmatpush1.msra.mxu0 0.0
    %386 = vmatprep.subr.mxu0 0.0
    %387 = vmatpush1.msra.mxu0 0.0
    %388 = vmatprep.subr.mxu0 0.0
    %389 = vmatpush1.msra.mxu0 0.0
    %390 = vmatprep.subr.mxu0 0.0
    %391 = vmatpush1.msra.mxu0 0.0
    %392 = vmatprep.subr.mxu0 0.0
    %393 = vmatpush1.msra.mxu0 0.0
    %394 = vmatprep.subr.mxu0 0.0
    %395 = vmatpush1.msra.mxu0 0.0
    %396 = vmatprep.subr.mxu0 0.0
    %397 = vmatpush1.msra.mxu0 0.0
    %398 = vmatprep.subr.mxu0 0.0
    %399 = vmatpush1.msra.mxu0 0.0
    %400 = vmatprep.subr.mxu0 0.0
    %401 = vmatpush1.msra.mxu0 0.0
    %402 = vmatprep.subr.mxu0 0.0
    %403 = vmatpush1.msra.mxu0 0.0
    %404 = vmatprep.subr.mxu0 0.0
    %405 = vmatpush1.msra.mxu0 0.0
    %406 = vmatprep.subr.mxu0 0.0
    %407 = vmatpush1.msra.mxu0 0.0
    %408 = vmatprep.subr.mxu0 0.0
    %409 = vmatpush1.msra.mxu0 0.0
    %410 = vmatprep.subr.mxu0 0.0
    %411 = vmatpush1.msra.mxu0 0.0
    %412 = vmatprep.subr.mxu0 0.0
    %413 = vmatpush1.msra.mxu0 0.0
    %414 = vmatprep.subr.mxu0 0.0
    %415 = vmatpush1.msra.mxu0 0.0
    %416 = vmatprep.subr.mxu0 0.0
    %417 = vmatpush1.msra.mxu0 0.0
    %418 = vmatprep.subr.mxu0 0.0
    %419 = vmatpush1.msra.mxu0 0.0
    %420 = vmatprep.subr.mxu0 0.0
    %421 = vmatpush1.msra.mxu0 0.0
    %422 = vmatprep.subr.mxu0 0.0
    %423 = vmatpush1.msra.mxu0 0.0
    %424 = vmatprep.subr.mxu0 0.0
    %425 = vmatpush1.msra.mxu0 0.0
    %426 = vmatprep.subr.mxu0 0.0
    %427 = vmatpush1.msra.mxu0 0.0
    %428 = vmatprep.subr.mxu0 0.0
    %429 = vmatpush1.msra.mxu0 0.0
    %430 = vmatprep.subr.mxu0 0.0
    %431 = vmatpush1.msra.mxu0 0.0
    %432 = vmatprep.mubr.f32.mxu0 0.0
    %433 = vmatmul.mubr.f32.gmra.mrb[0].mxu0 %v200
    %v434 = vpop.f32.mrb[0].mxu0
    %v435 = vadd.f32 0.0, %v434
    %v436 = vpop.f32.mrb[0].mxu0
    %437 = vmatprep.mubr.f32.mxu0 0.0
    %438 = vmatmul.mubr.f32.gmra.mrb[0].mxu0 %v203
    %v439 = vpop.f32.mrb[0].mxu0
    %v440 = vadd.f32 0.0, %v439
    %v441 = vpop.f32.mrb[0].mxu0
    %442 = vmatprep.mubr.f32.mxu0 0.0
    %443 = vmatmul.mubr.f32.gmra.mrb[0].mxu0 %v206
    %v444 = vpop.f32.mrb[0].mxu0
    %v445 = vadd.f32 0.0, %v444
    %v446 = vpop.f32.mrb[0].mxu0
    %447 = vdwg.mxu0
    %448 = vmatprep.subr.mxu0 0.0
    %449 = vmatpush1.msra.mxu0 %v111
    %450 = vmatprep.subr.mxu0 0.0
    %451 = vmatpush1.msra.mxu0 %v112
    %452 = vmatprep.subr.mxu0 0.0
    %453 = vmatpush1.msra.mxu0 %v113
    %454 = vmatprep.subr.mxu0 0.0
    %455 = vmatpush1.msra.mxu0 %v114
    %456 = vmatprep.subr.mxu0 0.0
    %457 = vmatpush1.msra.mxu0 0.0
    %458 = vmatprep.subr.mxu0 0.0
    %459 = vmatpush1.msra.mxu0 0.0
    %460 = vmatprep.subr.mxu0 0.0
    %461 = vmatpush1.msra.mxu0 0.0
    %462 = vmatprep.subr.mxu0 0.0
    %463 = vmatpush1.msra.mxu0 0.0
    %464 = vmatprep.subr.mxu0 0.0
    %465 = vmatpush1.msra.mxu0 0.0
    %466 = vmatprep.subr.mxu0 0.0
    %467 = vmatpush1.msra.mxu0 0.0
    %468 = vmatprep.subr.mxu0 0.0
    %469 = vmatpush1.msra.mxu0 0.0
    %470 = vmatprep.subr.mxu0 0.0
    %471 = vmatpush1.msra.mxu0 0.0
    %472 = vmatprep.subr.mxu0 0.0
    %473 = vmatpush1.msra.mxu0 0.0
    %474 = vmatprep.subr.mxu0 0.0
    %475 = vmatpush1.msra.mxu0 0.0
    %476 = vmatprep.subr.mxu0 0.0
    %477 = vmatpush1.msra.mxu0 0.0
    %478 = vmatprep.subr.mxu0 0.0
    %479 = vmatpush1.msra.mxu0 0.0
    %480 = vmatprep.subr.mxu0 0.0
    %481 = vmatpush1.msra.mxu0 0.0
    %482 = vmatprep.subr.mxu0 0.0
    %483 = vmatpush1.msra.mxu0 0.0
    %484 = vmatprep.subr.mxu0 0.0
    %485 = vmatpush1.msra.mxu0 0.0
    %486 = vmatprep.subr.mxu0 0.0
    %487 = vmatpush1.msra.mxu0 0.0
    %488 = vmatprep.subr.mxu0 0.0
    %489 = vmatpush1.msra.mxu0 0.0
    %490 = vmatprep.subr.mxu0 0.0
    %491 = vmatpush1.msra.mxu0 0.0
    %492 = vmatprep.subr.mxu0 0.0
    %493 = vmatpush1.msra.mxu0 0.0
    %494 = vmatprep.subr.mxu0 0.0
    %495 = vmatpush1.msra.mxu0 0.0
    %496 = vmatprep.subr.mxu0 0.0
    %497 = vmatpush1.msra.mxu0 0.0
    %498 = vmatprep.subr.mxu0 0.0
    %499 = vmatpush1.msra.mxu0 0.0
    %500 = vmatprep.subr.mxu0 0.0
    %501 = vmatpush1.msra.mxu0 0.0
    %502 = vmatprep.subr.mxu0 0.0
    %503 = vmatpush1.msra.mxu0 0.0
    %504 = vmatprep.subr.mxu0 0.0
    %505 = vmatpush1.msra.mxu0 0.0
    %506 = vmatprep.subr.mxu0 0.0
    %507 = vmatpush1.msra.mxu0 0.0
    %508 = vmatprep.subr.mxu0 0.0
    %509 = vmatpush1.msra.mxu0 0.0
    %510 = vmatprep.subr.mxu0 0.0
    %511 = vmatpush1.msra.mxu0 0.0
    %512 = vmatprep.mubr.f32.mxu0 0.0
    %513 = vmatmul.mubr.f32.gmra.mrb[0].mxu0 %v200
    %v514 = vpop.f32.mrb[0].mxu0
    %v515 = vadd.f32 0.0, %v514
    %v516 = vpop.f32.mrb[0].mxu0
    %517 = vmatprep.mubr.f32.mxu0 0.0
    %518 = vmatmul.mubr.f32.gmra.mrb[0].mxu0 %v203
    %v519 = vpop.f32.mrb[0].mxu0
    %v520 = vadd.f32 0.0, %v519
    %v521 = vpop.f32.mrb[0].mxu0
    %522 = vmatprep.mubr.f32.mxu0 0.0
    %523 = vmatmul.mubr.f32.gmra.mrb[0].mxu0 %v206
    %v524 = vpop.f32.mrb[0].mxu0
    %v525 = vadd.f32 0.0, %v524
    %v526 = vpop.f32.mrb[0].mxu0
    %527 = vdwg.mxu0
    %v528 = vlaneseq
    %v529 = vshrl.u32 %v528, 7
    %v530 = vlaneseq
    %v531 = vand.u32 %v530, 127
    %v532 = vsub.s32 8, %v529
    %v533 = vand.u32 %v532, 1
    %vm534 = vcmp.ne.s32.totalorder %v533, 0
    %v535 = vand.u32 %v532, 2
    %vm536 = vcmp.ne.s32.totalorder %v535, 0
    %v537 = vand.u32 %v532, 4
    %vm538 = vcmp.ne.s32.totalorder %v537, 0
    %v539 = vand.u32 %v532, 8
    %vm540 = vcmp.ne.s32.totalorder %v539, 0
    %v541 = vadd.s32 %v529, 13
    %vm542 = vcmp.lt.s32.totalorder %v531, %v541
    %v543 = vld [vmem:[%s0] sm:$0xff]
    %v544 = vld [vmem:[%s1] sm:$0xff]
    %v545 = vld [vmem:[%s1 + $0x8] sm:$0xff]
    %v546 = vld [vmem:[%s1 + $0x10] sm:$0xf]
    %v548 = vsel %vm198, %v543, 0
    %550 = vmatprep.subr.mxu0 0.0
    %551 = vmatpush1.msra.mxu0 %v51
    %552 = vmatprep.subr.mxu0 0.0
    %553 = vmatpush1.msra.mxu0 %v52
    %554 = vmatprep.subr.mxu0 0.0
    %555 = vmatpush1.msra.mxu0 %v53
    %556 = vmatprep.subr.mxu0 0.0
    %557 = vmatpush1.msra.mxu0 %v54
    %558 = vmatprep.subr.mxu0 0.0
    %559 = vmatpush1.msra.mxu0 0.0
    %560 = vmatprep.subr.mxu0 0.0
    %561 = vmatpush1.msra.mxu0 0.0
    %562 = vmatprep.subr.mxu0 0.0
    %563 = vmatpush1.msra.mxu0 0.0
    %564 = vmatprep.subr.mxu0 0.0
    %565 = vmatpush1.msra.mxu0 0.0
    %566 = vmatprep.subr.mxu0 0.0
    %567 = vmatpush1.msra.mxu0 0.0
    %568 = vmatprep.subr.mxu0 0.0
    %569 = vmatpush1.msra.mxu0 0.0
    %570 = vmatprep.subr.mxu0 0.0
    %571 = vmatpush1.msra.mxu0 0.0
    %572 = vmatprep.subr.mxu0 0.0
    %573 = vmatpush1.msra.mxu0 0.0
    %574 = vmatprep.subr.mxu0 0.0
    %575 = vmatpush1.msra.mxu0 0.0
    %576 = vmatprep.subr.mxu0 0.0
    %577 = vmatpush1.msra.mxu0 0.0
    %578 = vmatprep.subr.mxu0 0.0
    %579 = vmatpush1.msra.mxu0 0.0
    %580 = vmatprep.subr.mxu0 0.0
    %581 = vmatpush1.msra.mxu0 0.0
    %582 = vmatprep.subr.mxu0 0.0
    %583 = vmatpush1.msra.mxu0 0.0
    %584 = vmatprep.subr.mxu0 0.0
    %585 = vmatpush1.msra.mxu0 0.0
    %586 = vmatprep.subr.mxu0 0.0
    %587 = vmatpush1.msra.mxu0 0.0
    %588 = vmatprep.subr.mxu0 0.0
    %589 = vmatpush1.msra.mxu0 0.0
    %590 = vmatprep.subr.mxu0 0.0
    %591 = vmatpush1.msra.mxu0 0.0
    %592 = vmatprep.subr.mxu0 0.0
    %593 = vmatpush1.msra.mxu0 0.0
    %594 = vmatprep.subr.mxu0 0.0
    %595 = vmatpush1.msra.mxu0 0.0
    %596 = vmatprep.subr.mxu0 0.0
    %597 = vmatpush1.msra.mxu0 0.0
    %598 = vmatprep.subr.mxu0 0.0
    %599 = vmatpush1.msra.mxu0 0.0
    %600 = vmatprep.subr.mxu0 0.0
    %601 = vmatpush1.msra.mxu0 0.0
    %602 = vmatprep.subr.mxu0 0.0
    %603 = vmatpush1.msra.mxu0 0.0
    %604 = vmatprep.subr.mxu0 0.0
    %605 = vmatpush1.msra.mxu0 0.0
    %606 = vmatprep.subr.mxu0 0.0
    %607 = vmatpush1.msra.mxu0 0.0
    %608 = vmatprep.subr.mxu0 0.0
    %609 = vmatpush1.msra.mxu0 0.0
    %610 = vmatprep.subr.mxu0 0.0
    %611 = vmatpush1.msra.mxu0 0.0
    %612 = vmatprep.subr.mxu0 0.0
    %613 = vmatpush1.msra.mxu0 0.0
    %614 = vmatprep.mubr.f32.mxu0 0.0
    %615 = vmatmul.mubr.f32.gmra.mrb[0].mxu0 %v548
    %v616 = vpop.f32.mrb[0].mxu0
    %v617 = vadd.f32 0.0, %v616
    %v618 = vpop.f32.mrb[0].mxu0
    %619 = vdwg.mxu0
    %620 = vmatprep.subr.mxu0 0.0
    %621 = vmatpush1.msra.mxu0 %v55
    %622 = vmatprep.subr.mxu0 0.0
    %623 = vmatpush1.msra.mxu0 %v56
    %624 = vmatprep.subr.mxu0 0.0
    %625 = vmatpush1.msra.mxu0 %v57
    %626 = vmatprep.subr.mxu0 0.0
    %627 = vmatpush1.msra.mxu0 %v58
    %628 = vmatprep.subr.mxu0 0.0
    %629 = vmatpush1.msra.mxu0 0.0
    %630 = vmatprep.subr.mxu0 0.0
    %631 = vmatpush1.msra.mxu0 0.0
    %632 = vmatprep.subr.mxu0 0.0
    %633 = vmatpush1.msra.mxu0 0.0
    %634 = vmatprep.subr.mxu0 0.0
    %635 = vmatpush1.msra.mxu0 0.0
    %636 = vmatprep.subr.mxu0 0.0
    %637 = vmatpush1.msra.mxu0 0.0
    %638 = vmatprep.subr.mxu0 0.0
    %639 = vmatpush1.msra.mxu0 0.0
    %640 = vmatprep.subr.mxu0 0.0
    %641 = vmatpush1.msra.mxu0 0.0
    %642 = vmatprep.subr.mxu0 0.0
    %643 = vmatpush1.msra.mxu0 0.0
    %644 = vmatprep.subr.mxu0 0.0
    %645 = vmatpush1.msra.mxu0 0.0
    %646 = vmatprep.subr.mxu0 0.0
    %647 = vmatpush1.msra.mxu0 0.0
    %648 = vmatprep.subr.mxu0 0.0
    %649 = vmatpush1.msra.mxu0 0.0
    %650 = vmatprep.subr.mxu0 0.0
    %651 = vmatpush1.msra.mxu0 0.0
    %652 = vmatprep.subr.mxu0 0.0
    %653 = vmatpush1.msra.mxu0 0.0
    %654 = vmatprep.subr.mxu0 0.0
    %655 = vmatpush1.msra.mxu0 0.0
    %656 = vmatprep.subr.mxu0 0.0
    %657 = vmatpush1.msra.mxu0 0.0
    %658 = vmatprep.subr.mxu0 0.0
    %659 = vmatpush1.msra.mxu0 0.0
    %660 = vmatprep.subr.mxu0 0.0
    %661 = vmatpush1.msra.mxu0 0.0
    %662 = vmatprep.subr.mxu0 0.0
    %663 = vmatpush1.msra.mxu0 0.0
    %664 = vmatprep.subr.mxu0 0.0
    %665 = vmatpush1.msra.mxu0 0.0
    %666 = vmatprep.subr.mxu0 0.0
    %667 = vmatpush1.msra.mxu0 0.0
    %668 = vmatprep.subr.mxu0 0.0
    %669 = vmatpush1.msra.mxu0 0.0
    %670 = vmatprep.subr.mxu0 0.0
    %671 = vmatpush1.msra.mxu0 0.0
    %672 = vmatprep.subr.mxu0 0.0
    %673 = vmatpush1.msra.mxu0 0.0
    %674 = vmatprep.subr.mxu0 0.0
    %675 = vmatpush1.msra.mxu0 0.0
    %676 = vmatprep.subr.mxu0 0.0
    %677 = vmatpush1.msra.mxu0 0.0
    %678 = vmatprep.subr.mxu0 0.0
    %679 = vmatpush1.msra.mxu0 0.0
    %680 = vmatprep.subr.mxu0 0.0
    %681 = vmatpush1.msra.mxu0 0.0
    %682 = vmatprep.subr.mxu0 0.0
    %683 = vmatpush1.msra.mxu0 0.0
    %684 = vmatprep.mubr.f32.mxu0 0.0
    %685 = vmatmul.mubr.f32.gmra.mrb[0].mxu0 %v548
    %v686 = vpop.f32.mrb[0].mxu0
    %v687 = vadd.f32 0.0, %v686
    %v688 = vpop.f32.mrb[0].mxu0
    %689 = vdwg.mxu0
    %690 = vmatprep.subr.mxu0 0.0
    %691 = vmatpush1.msra.mxu0 %v59
    %692 = vmatprep.subr.mxu0 0.0
    %693 = vmatpush1.msra.mxu0 %v60
    %694 = vmatprep.subr.mxu0 0.0
    %695 = vmatpush1.msra.mxu0 %v61
    %696 = vmatprep.subr.mxu0 0.0
    %697 = vmatpush1.msra.mxu0 %v62
    %698 = vmatprep.subr.mxu0 0.0
    %699 = vmatpush1.msra.mxu0 0.0
    %700 = vmatprep.subr.mxu0 0.0
    %701 = vmatpush1.msra.mxu0 0.0
    %702 = vmatprep.subr.mxu0 0.0
    %703 = vmatpush1.msra.mxu0 0.0
    %704 = vmatprep.subr.mxu0 0.0
    %705 = vmatpush1.msra.mxu0 0.0
    %706 = vmatprep.subr.mxu0 0.0
    %707 = vmatpush1.msra.mxu0 0.0
    %708 = vmatprep.subr.mxu0 0.0
    %709 = vmatpush1.msra.mxu0 0.0
    %710 = vmatprep.subr.mxu0 0.0
    %711 = vmatpush1.msra.mxu0 0.0
    %712 = vmatprep.subr.mxu0 0.0
    %713 = vmatpush1.msra.mxu0 0.0
    %714 = vmatprep.subr.mxu0 0.0
    %715 = vmatpush1.msra.mxu0 0.0
    %716 = vmatprep.subr.mxu0 0.0
    %717 = vmatpush1.msra.mxu0 0.0
    %718 = vmatprep.subr.mxu0 0.0
    %719 = vmatpush1.msra.mxu0 0.0
    %720 = vmatprep.subr.mxu0 0.0
    %721 = vmatpush1.msra.mxu0 0.0
    %722 = vmatprep.subr.mxu0 0.0
    %723 = vmatpush1.msra.mxu0 0.0
    %724 = vmatprep.subr.mxu0 0.0
    %725 = vmatpush1.msra.mxu0 0.0
    %726 = vmatprep.subr.mxu0 0.0
    %727 = vmatpush1.msra.mxu0 0.0
    %728 = vmatprep.subr.mxu0 0.0
    %729 = vmatpush1.msra.mxu0 0.0
    %730 = vmatprep.subr.mxu0 0.0
    %731 = vmatpush1.msra.mxu0 0.0
    %732 = vmatprep.subr.mxu0 0.0
    %733 = vmatpush1.msra.mxu0 0.0
    %734 = vmatprep.subr.mxu0 0.0
    %735 = vmatpush1.msra.mxu0 0.0
    %736 = vmatprep.subr.mxu0 0.0
    %737 = vmatpush1.msra.mxu0 0.0
    %738 = vmatprep.subr.mxu0 0.0
    %739 = vmatpush1.msra.mxu0 0.0
    %740 = vmatprep.subr.mxu0 0.0
    %741 = vmatpush1.msra.mxu0 0.0
    %742 = vmatprep.subr.mxu0 0.0
    %743 = vmatpush1.msra.mxu0 0.0
    %744 = vmatprep.subr.mxu0 0.0
    %745 = vmatpush1.msra.mxu0 0.0
    %746 = vmatprep.subr.mxu0 0.0
    %747 = vmatpush1.msra.mxu0 0.0
    %748 = vmatprep.subr.mxu0 0.0
    %749 = vmatpush1.msra.mxu0 0.0
    %750 = vmatprep.subr.mxu0 0.0
    %751 = vmatpush1.msra.mxu0 0.0
    %752 = vmatprep.subr.mxu0 0.0
    %753 = vmatpush1.msra.mxu0 0.0
    %754 = vmatprep.mubr.f32.mxu0 0.0
    %755 = vmatmul.mubr.f32.gmra.mrb[0].mxu0 %v548
    %v756 = vpop.f32.mrb[0].mxu0
    %v757 = vadd.f32 0.0, %v756
    %v758 = vpop.f32.mrb[0].mxu0
    %759 = vdwg.mxu0
    %760 = vmatprep.subr.mxu0 0.0
    %761 = vmatpush1.msra.mxu0 %v63
    %762 = vmatprep.subr.mxu0 0.0
    %763 = vmatpush1.msra.mxu0 %v64
    %764 = vmatprep.subr.mxu0 0.0
    %765 = vmatpush1.msra.mxu0 %v65
    %766 = vmatprep.subr.mxu0 0.0
    %767 = vmatpush1.msra.mxu0 %v66
    %768 = vmatprep.subr.mxu0 0.0
    %769 = vmatpush1.msra.mxu0 0.0
    %770 = vmatprep.subr.mxu0 0.0
    %771 = vmatpush1.msra.mxu0 0.0
    %772 = vmatprep.subr.mxu0 0.0
    %773 = vmatpush1.msra.mxu0 0.0
    %774 = vmatprep.subr.mxu0 0.0
    %775 = vmatpush1.msra.mxu0 0.0
    %776 = vmatprep.subr.mxu0 0.0
    %777 = vmatpush1.msra.mxu0 0.0
    %778 = vmatprep.subr.mxu0 0.0
    %779 = vmatpush1.msra.mxu0 0.0
    %780 = vmatprep.subr.mxu0 0.0
    %781 = vmatpush1.msra.mxu0 0.0
    %782 = vmatprep.subr.mxu0 0.0
    %783 = vmatpush1.msra.mxu0 0.0
    %784 = vmatprep.subr.mxu0 0.0
    %785 = vmatpush1.msra.mxu0 0.0
    %786 = vmatprep.subr.mxu0 0.0
    %787 = vmatpush1.msra.mxu0 0.0
    %788 = vmatprep.subr.mxu0 0.0
    %789 = vmatpush1.msra.mxu0 0.0
    %790 = vmatprep.subr.mxu0 0.0
    %791 = vmatpush1.msra.mxu0 0.0
    %792 = vmatprep.subr.mxu0 0.0
    %793 = vmatpush1.msra.mxu0 0.0
    %794 = vmatprep.subr.mxu0 0.0
    %795 = vmatpush1.msra.mxu0 0.0
    %796 = vmatprep.subr.mxu0 0.0
    %797 = vmatpush1.msra.mxu0 0.0
    %798 = vmatprep.subr.mxu0 0.0
    %799 = vmatpush1.msra.mxu0 0.0
    %800 = vmatprep.subr.mxu0 0.0
    %801 = vmatpush1.msra.mxu0 0.0
    %802 = vmatprep.subr.mxu0 0.0
    %803 = vmatpush1.msra.mxu0 0.0
    %804 = vmatprep.subr.mxu0 0.0
    %805 = vmatpush1.msra.mxu0 0.0
    %806 = vmatprep.subr.mxu0 0.0
    %807 = vmatpush1.msra.mxu0 0.0
    %808 = vmatprep.subr.mxu0 0.0
    %809 = vmatpush1.msra.mxu0 0.0
    %810 = vmatprep.subr.mxu0 0.0
    %811 = vmatpush1.msra.mxu0 0.0
    %812 = vmatprep.subr.mxu0 0.0
    %813 = vmatpush1.msra.mxu0 0.0
    %814 = vmatprep.subr.mxu0 0.0
    %815 = vmatpush1.msra.mxu0 0.0
    %816 = vmatprep.subr.mxu0 0.0
    %817 = vmatpush1.msra.mxu0 0.0
    %818 = vmatprep.subr.mxu0 0.0
    %819 = vmatpush1.msra.mxu0 0.0
    %820 = vmatprep.subr.mxu0 0.0
    %821 = vmatpush1.msra.mxu0 0.0
    %822 = vmatprep.subr.mxu0 0.0
    %823 = vmatpush1.msra.mxu0 0.0
    %824 = vmatprep.mubr.f32.mxu0 0.0
    %825 = vmatmul.mubr.f32.gmra.mrb[0].mxu0 %v548
    %v826 = vpop.f32.mrb[0].mxu0
    %v827 = vadd.f32 0.0, %v826
    %v828 = vpop.f32.mrb[0].mxu0
    %829 = vdwg.mxu0
    %v831 = vsel %vm198, %v544, 0
    %v834 = vsel %vm198, %v545, 0
    %v837 = vsel %vm198, %v546, 0
    %839 = vmatprep.subr.mxu0 0.0
    %840 = vmatpush1.msra.mxu0 %v67
    %841 = vmatprep.subr.mxu0 0.0
    %842 = vmatpush1.msra.mxu0 %v68
    %843 = vmatprep.subr.mxu0 0.0
    %844 = vmatpush1.msra.mxu0 %v69
    %845 = vmatprep.subr.mxu0 0.0
    %846 = vmatpush1.msra.mxu0 %v70
    %847 = vmatprep.subr.mxu0 0.0
    %848 = vmatpush1.msra.mxu0 0.0
    %849 = vmatprep.subr.mxu0 0.0
    %850 = vmatpush1.msra.mxu0 0.0
    %851 = vmatprep.subr.mxu0 0.0
    %852 = vmatpush1.msra.mxu0 0.0
    %853 = vmatprep.subr.mxu0 0.0
    %854 = vmatpush1.msra.mxu0 0.0
    %855 = vmatprep.subr.mxu0 0.0
    %856 = vmatpush1.msra.mxu0 0.0
    %857 = vmatprep.subr.mxu0 0.0
    %858 = vmatpush1.msra.mxu0 0.0
    %859 = vmatprep.subr.mxu0 0.0
    %860 = vmatpush1.msra.mxu0 0.0
    %861 = vmatprep.subr.mxu0 0.0
    %862 = vmatpush1.msra.mxu0 0.0
    %863 = vmatprep.subr.mxu0 0.0
    %864 = vmatpush1.msra.mxu0 0.0
    %865 = vmatprep.subr.mxu0 0.0
    %866 = vmatpush1.msra.mxu0 0.0
    %867 = vmatprep.subr.mxu0 0.0
    %868 = vmatpush1.msra.mxu0 0.0
    %869 = vmatprep.subr.mxu0 0.0
    %870 = vmatpush1.msra.mxu0 0.0
    %871 = vmatprep.subr.mxu0 0.0
    %872 = vmatpush1.msra.mxu0 0.0
    %873 = vmatprep.subr.mxu0 0.0
    %874 = vmatpush1.msra.mxu0 0.0
    %875 = vmatprep.subr.mxu0 0.0
    %876 = vmatpush1.msra.mxu0 0.0
    %877 = vmatprep.subr.mxu0 0.0
    %878 = vmatpush1.msra.mxu0 0.0
    %879 = vmatprep.subr.mxu0 0.0
    %880 = vmatpush1.msra.mxu0 0.0
    %881 = vmatprep.subr.mxu0 0.0
    %882 = vmatpush1.msra.mxu0 0.0
    %883 = vmatprep.subr.mxu0 0.0
    %884 = vmatpush1.msra.mxu0 0.0
    %885 = vmatprep.subr.mxu0 0.0
    %886 = vmatpush1.msra.mxu0 0.0
    %887 = vmatprep.subr.mxu0 0.0
    %888 = vmatpush1.msra.mxu0 0.0
    %889 = vmatprep.subr.mxu0 0.0
    %890 = vmatpush1.msra.mxu0 0.0
    %891 = vmatprep.subr.mxu0 0.0
    %892 = vmatpush1.msra.mxu0 0.0
    %893 = vmatprep.subr.mxu0 0.0
    %894 = vmatpush1.msra.mxu0 0.0
    %895 = vmatprep.subr.mxu0 0.0
    %896 = vmatpush1.msra.mxu0 0.0
    %897 = vmatprep.subr.mxu0 0.0
    %898 = vmatpush1.msra.mxu0 0.0
    %899 = vmatprep.subr.mxu0 0.0
    %900 = vmatpush1.msra.mxu0 0.0
    %901 = vmatprep.subr.mxu0 0.0
    %902 = vmatpush1.msra.mxu0 0.0
    %903 = vmatprep.mubr.f32.mxu0 0.0
    %904 = vmatmul.mubr.f32.gmra.mrb[0].mxu0 %v831
    %v905 = vpop.f32.mrb[0].mxu0
    %v906 = vadd.f32 0.0, %v905
    %v907 = vpop.f32.mrb[0].mxu0
    %908 = vmatprep.mubr.f32.mxu0 0.0
    %909 = vmatmul.mubr.f32.gmra.mrb[0].mxu0 %v834
    %v910 = vpop.f32.mrb[0].mxu0
    %v911 = vadd.f32 0.0, %v910
    %v912 = vpop.f32.mrb[0].mxu0
    %913 = vmatprep.mubr.f32.mxu0 0.0
    %914 = vmatmul.mubr.f32.gmra.mrb[0].mxu0 %v837
    %v915 = vpop.f32.mrb[0].mxu0
    %v916 = vadd.f32 0.0, %v915
    %v917 = vpop.f32.mrb[0].mxu0
    %918 = vdwg.mxu0
    %919 = vmatprep.subr.mxu0 0.0
    %920 = vmatpush1.msra.mxu0 %v71
    %921 = vmatprep.subr.mxu0 0.0
    %922 = vmatpush1.msra.mxu0 %v72
    %923 = vmatprep.subr.mxu0 0.0
    %924 = vmatpush1.msra.mxu0 %v73
    %925 = vmatprep.subr.mxu0 0.0
    %926 = vmatpush1.msra.mxu0 %v74
    %927 = vmatprep.subr.mxu0 0.0
    %928 = vmatpush1.msra.mxu0 0.0
    %929 = vmatprep.subr.mxu0 0.0
    %930 = vmatpush1.msra.mxu0 0.0
    %931 = vmatprep.subr.mxu0 0.0
    %932 = vmatpush1.msra.mxu0 0.0
    %933 = vmatprep.subr.mxu0 0.0
    %934 = vmatpush1.msra.mxu0 0.0
    %935 = vmatprep.subr.mxu0 0.0
    %936 = vmatpush1.msra.mxu0 0.0
    %937 = vmatprep.subr.mxu0 0.0
    %938 = vmatpush1.msra.mxu0 0.0
    %939 = vmatprep.subr.mxu0 0.0
    %940 = vmatpush1.msra.mxu0 0.0
    %941 = vmatprep.subr.mxu0 0.0
    %942 = vmatpush1.msra.mxu0 0.0
    %943 = vmatprep.subr.mxu0 0.0
    %944 = vmatpush1.msra.mxu0 0.0
    %945 = vmatprep.subr.mxu0 0.0
    %946 = vmatpush1.msra.mxu0 0.0
    %947 = vmatprep.subr.mxu0 0.0
    %948 = vmatpush1.msra.mxu0 0.0
    %949 = vmatprep.subr.mxu0 0.0
    %950 = vmatpush1.msra.mxu0 0.0
    %951 = vmatprep.subr.mxu0 0.0
    %952 = vmatpush1.msra.mxu0 0.0
    %953 = vmatprep.subr.mxu0 0.0
    %954 = vmatpush1.msra.mxu0 0.0
    %955 = vmatprep.subr.mxu0 0.0
    %956 = vmatpush1.msra.mxu0 0.0
    %957 = vmatprep.subr.mxu0 0.0
    %958 = vmatpush1.msra.mxu0 0.0
    %959 = vmatprep.subr.mxu0 0.0
    %960 = vmatpush1.msra.mxu0 0.0
    %961 = vmatprep.subr.mxu0 0.0
    %962 = vmatpush1.msra.mxu0 0.0
    %963 = vmatprep.subr.mxu0 0.0
    %964 = vmatpush1.msra.mxu0 0.0
    %965 = vmatprep.subr.mxu0 0.0
    %966 = vmatpush1.msra.mxu0 0.0
    %967 = vmatprep.subr.mxu0 0.0
    %968 = vmatpush1.msra.mxu0 0.0
    %969 = vmatprep.subr.mxu0 0.0
    %970 = vmatpush1.msra.mxu0 0.0
    %971 = vmatprep.subr.mxu0 0.0
    %972 = vmatpush1.msra.mxu0 0.0
    %973 = vmatprep.subr.mxu0 0.0
    %974 = vmatpush1.msra.mxu0 0.0
    %975 = vmatprep.subr.mxu0 0.0
    %976 = vmatpush1.msra.mxu0 0.0
    %977 = vmatprep.subr.mxu0 0.0
    %978 = vmatpush1.msra.mxu0 0.0
    %979 = vmatprep.subr.mxu0 0.0
    %980 = vmatpush1.msra.mxu0 0.0
    %981 = vmatprep.subr.mxu0 0.0
    %982 = vmatpush1.msra.mxu0 0.0
    %983 = vmatprep.mubr.f32.mxu0 0.0
    %984 = vmatmul.mubr.f32.gmra.mrb[0].mxu0 %v831
    %v985 = vpop.f32.mrb[0].mxu0
    %v986 = vadd.f32 0.0, %v985
    %v987 = vpop.f32.mrb[0].mxu0
    %988 = vmatprep.mubr.f32.mxu0 0.0
    %989 = vmatmul.mubr.f32.gmra.mrb[0].mxu0 %v834
    %v990 = vpop.f32.mrb[0].mxu0
    %v991 = vadd.f32 0.0, %v990
    %v992 = vpop.f32.mrb[0].mxu0
    %993 = vmatprep.mubr.f32.mxu0 0.0
    %994 = vmatmul.mubr.f32.gmra.mrb[0].mxu0 %v837
    %v995 = vpop.f32.mrb[0].mxu0
    %v996 = vadd.f32 0.0, %v995
    %v997 = vpop.f32.mrb[0].mxu0
    %998 = vdwg.mxu0
    %999 = vmatprep.subr.mxu0 0.0
    %1000 = vmatpush1.msra.mxu0 %v75
    %1001 = vmatprep.subr.mxu0 0.0
    %1002 = vmatpush1.msra.mxu0 %v76
    %1003 = vmatprep.subr.mxu0 0.0
    %1004 = vmatpush1.msra.mxu0 %v77
    %1005 = vmatprep.subr.mxu0 0.0
    %1006 = vmatpush1.msra.mxu0 %v78
    %1007 = vmatprep.subr.mxu0 0.0
    %1008 = vmatpush1.msra.mxu0 0.0
    %1009 = vmatprep.subr.mxu0 0.0
    %1010 = vmatpush1.msra.mxu0 0.0
    %1011 = vmatprep.subr.mxu0 0.0
    %1012 = vmatpush1.msra.mxu0 0.0
    %1013 = vmatprep.subr.mxu0 0.0
    %1014 = vmatpush1.msra.mxu0 0.0
    %1015 = vmatprep.subr.mxu0 0.0
    %1016 = vmatpush1.msra.mxu0 0.0
    %1017 = vmatprep.subr.mxu0 0.0
    %1018 = vmatpush1.msra.mxu0 0.0
    %1019 = vmatprep.subr.mxu0 0.0
    %1020 = vmatpush1.msra.mxu0 0.0
    %1021 = vmatprep.subr.mxu0 0.0
    %1022 = vmatpush1.msra.mxu0 0.0
    %1023 = vmatprep.subr.mxu0 0.0
    %1024 = vmatpush1.msra.mxu0 0.0
    %1025 = vmatprep.subr.mxu0 0.0
    %1026 = vmatpush1.msra.mxu0 0.0
    %1027 = vmatprep.subr.mxu0 0.0
    %1028 = vmatpush1.msra.mxu0 0.0
    %1029 = vmatprep.subr.mxu0 0.0
    %1030 = vmatpush1.msra.mxu0 0.0
    %1031 = vmatprep.subr.mxu0 0.0
    %1032 = vmatpush1.msra.mxu0 0.0
    %1033 = vmatprep.subr.mxu0 0.0
    %1034 = vmatpush1.msra.mxu0 0.0
    %1035 = vmatprep.subr.mxu0 0.0
    %1036 = vmatpush1.msra.mxu0 0.0
    %1037 = vmatprep.subr.mxu0 0.0
    %1038 = vmatpush1.msra.mxu0 0.0
    %1039 = vmatprep.subr.mxu0 0.0
    %1040 = vmatpush1.msra.mxu0 0.0
    %1041 = vmatprep.subr.mxu0 0.0
    %1042 = vmatpush1.msra.mxu0 0.0
    %1043 = vmatprep.subr.mxu0 0.0
    %1044 = vmatpush1.msra.mxu0 0.0
    %1045 = vmatprep.subr.mxu0 0.0
    %1046 = vmatpush1.msra.mxu0 0.0
    %1047 = vmatprep.subr.mxu0 0.0
    %1048 = vmatpush1.msra.mxu0 0.0
    %1049 = vmatprep.subr.mxu0 0.0
    %1050 = vmatpush1.msra.mxu0 0.0
    %1051 = vmatprep.subr.mxu0 0.0
    %1052 = vmatpush1.msra.mxu0 0.0
    %1053 = vmatprep.subr.mxu0 0.0
    %1054 = vmatpush1.msra.mxu0 0.0
    %1055 = vmatprep.subr.mxu0 0.0
    %1056 = vmatpush1.msra.mxu0 0.0
    %1057 = vmatprep.subr.mxu0 0.0
    %1058 = vmatpush1.msra.mxu0 0.0
    %1059 = vmatprep.subr.mxu0 0.0
    %1060 = vmatpush1.msra.mxu0 0.0
    %1061 = vmatprep.subr.mxu0 0.0
    %1062 = vmatpush1.msra.mxu0 0.0
    %1063 = vmatprep.mubr.f32.mxu0 0.0
    %1064 = vmatmul.mubr.f32.gmra.mrb[0].mxu0 %v831
    %v1065 = vpop.f32.mrb[0].mxu0
    %v1066 = vadd.f32 0.0, %v1065
    %v1067 = vpop.f32.mrb[0].mxu0
    %1068 = vmatprep.mubr.f32.mxu0 0.0
    %1069 = vmatmul.mubr.f32.gmra.mrb[0].mxu0 %v834
    %v1070 = vpop.f32.mrb[0].mxu0
    %v1071 = vadd.f32 0.0, %v1070
    %v1072 = vpop.f32.mrb[0].mxu0
    %1073 = vmatprep.mubr.f32.mxu0 0.0
    %1074 = vmatmul.mubr.f32.gmra.mrb[0].mxu0 %v837
    %v1075 = vpop.f32.mrb[0].mxu0
    %v1076 = vadd.f32 0.0, %v1075
    %v1077 = vpop.f32.mrb[0].mxu0
    %1078 = vdwg.mxu0
    %1079 = vmatprep.subr.mxu0 0.0
    %1080 = vmatpush1.msra.mxu0 %v79
    %1081 = vmatprep.subr.mxu0 0.0
    %1082 = vmatpush1.msra.mxu0 %v80
    %1083 = vmatprep.subr.mxu0 0.0
    %1084 = vmatpush1.msra.mxu0 %v81
    %1085 = vmatprep.subr.mxu0 0.0
    %1086 = vmatpush1.msra.mxu0 %v82
    %1087 = vmatprep.subr.mxu0 0.0
    %1088 = vmatpush1.msra.mxu0 0.0
    %1089 = vmatprep.subr.mxu0 0.0
    %1090 = vmatpush1.msra.mxu0 0.0
    %1091 = vmatprep.subr.mxu0 0.0
    %1092 = vmatpush1.msra.mxu0 0.0
    %1093 = vmatprep.subr.mxu0 0.0
    %1094 = vmatpush1.msra.mxu0 0.0
    %1095 = vmatprep.subr.mxu0 0.0
    %1096 = vmatpush1.msra.mxu0 0.0
    %1097 = vmatprep.subr.mxu0 0.0
    %1098 = vmatpush1.msra.mxu0 0.0
    %1099 = vmatprep.subr.mxu0 0.0
    %1100 = vmatpush1.msra.mxu0 0.0
    %1101 = vmatprep.subr.mxu0 0.0
    %1102 = vmatpush1.msra.mxu0 0.0
    %1103 = vmatprep.subr.mxu0 0.0
    %1104 = vmatpush1.msra.mxu0 0.0
    %1105 = vmatprep.subr.mxu0 0.0
    %1106 = vmatpush1.msra.mxu0 0.0
    %1107 = vmatprep.subr.mxu0 0.0
    %1108 = vmatpush1.msra.mxu0 0.0
    %1109 = vmatprep.subr.mxu0 0.0
    %1110 = vmatpush1.msra.mxu0 0.0
    %1111 = vmatprep.subr.mxu0 0.0
    %1112 = vmatpush1.msra.mxu0 0.0
    %1113 = vmatprep.subr.mxu0 0.0
    %1114 = vmatpush1.msra.mxu0 0.0
    %1115 = vmatprep.subr.mxu0 0.0
    %1116 = vmatpush1.msra.mxu0 0.0
    %1117 = vmatprep.subr.mxu0 0.0
    %1118 = vmatpush1.msra.mxu0 0.0
    %1119 = vmatprep.subr.mxu0 0.0
    %1120 = vmatpush1.msra.mxu0 0.0
    %1121 = vmatprep.subr.mxu0 0.0
    %1122 = vmatpush1.msra.mxu0 0.0
    %1123 = vmatprep.subr.mxu0 0.0
    %1124 = vmatpush1.msra.mxu0 0.0
    %1125 = vmatprep.subr.mxu0 0.0
    %1126 = vmatpush1.msra.mxu0 0.0
    %1127 = vmatprep.subr.mxu0 0.0
    %1128 = vmatpush1.msra.mxu0 0.0
    %1129 = vmatprep.subr.mxu0 0.0
    %1130 = vmatpush1.msra.mxu0 0.0
    %1131 = vmatprep.subr.mxu0 0.0
    %1132 = vmatpush1.msra.mxu0 0.0
    %1133 = vmatprep.subr.mxu0 0.0
    %1134 = vmatpush1.msra.mxu0 0.0
    %1135 = vmatprep.subr.mxu0 0.0
    %1136 = vmatpush1.msra.mxu0 0.0
    %1137 = vmatprep.subr.mxu0 0.0
    %1138 = vmatpush1.msra.mxu0 0.0
    %1139 = vmatprep.subr.mxu0 0.0
    %1140 = vmatpush1.msra.mxu0 0.0
    %1141 = vmatprep.subr.mxu0 0.0
    %1142 = vmatpush1.msra.mxu0 0.0
    %1143 = vmatprep.mubr.f32.mxu0 0.0
    %1144 = vmatmul.mubr.f32.gmra.mrb[0].mxu0 %v831
    %v1145 = vpop.f32.mrb[0].mxu0
    %v1146 = vadd.f32 0.0, %v1145
    %v1147 = vpop.f32.mrb[0].mxu0
    %1148 = vmatprep.mubr.f32.mxu0 0.0
    %1149 = vmatmul.mubr.f32.gmra.mrb[0].mxu0 %v834
    %v1150 = vpop.f32.mrb[0].mxu0
    %v1151 = vadd.f32 0.0, %v1150
    %v1152 = vpop.f32.mrb[0].mxu0
    %1153 = vmatprep.mubr.f32.mxu0 0.0
    %1154 = vmatmul.mubr.f32.gmra.mrb[0].mxu0 %v837
    %v1155 = vpop.f32.mrb[0].mxu0
    %v1156 = vadd.f32 0.0, %v1155
    %v1157 = vpop.f32.mrb[0].mxu0
    %1158 = vdwg.mxu0
    %1159 = vmatprep.subr.mxu0 0.0
    %1160 = vmatpush1.msra.mxu0 %v83
    %1161 = vmatprep.subr.mxu0 0.0
    %1162 = vmatpush1.msra.mxu0 %v84
    %1163 = vmatprep.subr.mxu0 0.0
    %1164 = vmatpush1.msra.mxu0 %v85
    %1165 = vmatprep.subr.mxu0 0.0
    %1166 = vmatpush1.msra.mxu0 %v86
    %1167 = vmatprep.subr.mxu0 0.0
    %1168 = vmatpush1.msra.mxu0 0.0
    %1169 = vmatprep.subr.mxu0 0.0
    %1170 = vmatpush1.msra.mxu0 0.0
    %1171 = vmatprep.subr.mxu0 0.0
    %1172 = vmatpush1.msra.mxu0 0.0
    %1173 = vmatprep.subr.mxu0 0.0
    %1174 = vmatpush1.msra.mxu0 0.0
    %1175 = vmatprep.subr.mxu0 0.0
    %1176 = vmatpush1.msra.mxu0 0.0
    %1177 = vmatprep.subr.mxu0 0.0
    %1178 = vmatpush1.msra.mxu0 0.0
    %1179 = vmatprep.subr.mxu0 0.0
    %1180 = vmatpush1.msra.mxu0 0.0
    %1181 = vmatprep.subr.mxu0 0.0
    %1182 = vmatpush1.msra.mxu0 0.0
    %1183 = vmatprep.subr.mxu0 0.0
    %1184 = vmatpush1.msra.mxu0 0.0
    %1185 = vmatprep.subr.mxu0 0.0
    %1186 = vmatpush1.msra.mxu0 0.0
    %1187 = vmatprep.subr.mxu0 0.0
    %1188 = vmatpush1.msra.mxu0 0.0
    %1189 = vmatprep.subr.mxu0 0.0
    %1190 = vmatpush1.msra.mxu0 0.0
    %1191 = vmatprep.subr.mxu0 0.0
    %1192 = vmatpush1.msra.mxu0 0.0
    %1193 = vmatprep.subr.mxu0 0.0
    %1194 = vmatpush1.msra.mxu0 0.0
    %1195 = vmatprep.subr.mxu0 0.0
    %1196 = vmatpush1.msra.mxu0 0.0
    %1197 = vmatprep.subr.mxu0 0.0
    %1198 = vmatpush1.msra.mxu0 0.0
    %1199 = vmatprep.subr.mxu0 0.0
    %1200 = vmatpush1.msra.mxu0 0.0
    %1201 = vmatprep.subr.mxu0 0.0
    %1202 = vmatpush1.msra.mxu0 0.0
    %1203 = vmatprep.subr.mxu0 0.0
    %1204 = vmatpush1.msra.mxu0 0.0
    %1205 = vmatprep.subr.mxu0 0.0
    %1206 = vmatpush1.msra.mxu0 0.0
    %1207 = vmatprep.subr.mxu0 0.0
    %1208 = vmatpush1.msra.mxu0 0.0
    %1209 = vmatprep.subr.mxu0 0.0
    %1210 = vmatpush1.msra.mxu0 0.0
    %1211 = vmatprep.subr.mxu0 0.0
    %1212 = vmatpush1.msra.mxu0 0.0
    %1213 = vmatprep.subr.mxu0 0.0
    %1214 = vmatpush1.msra.mxu0 0.0
    %1215 = vmatprep.subr.mxu0 0.0
    %1216 = vmatpush1.msra.mxu0 0.0
    %1217 = vmatprep.subr.mxu0 0.0
    %1218 = vmatpush1.msra.mxu0 0.0
    %1219 = vmatprep.subr.mxu0 0.0
    %1220 = vmatpush1.msra.mxu0 0.0
    %1221 = vmatprep.subr.mxu0 0.0
    %1222 = vmatpush1.msra.mxu0 0.0
    %1223 = vmatprep.mubr.f32.mxu0 0.0
    %1224 = vmatmul.mubr.f32.gmra.mrb[0].mxu0 %v831
    %v1225 = vpop.f32.mrb[0].mxu0
    %v1226 = vadd.f32 0.0, %v1225
    %v1227 = vpop.f32.mrb[0].mxu0
    %1228 = vmatprep.mubr.f32.mxu0 0.0
    %1229 = vmatmul.mubr.f32.gmra.mrb[0].mxu0 %v834
    %v1230 = vpop.f32.mrb[0].mxu0
    %v1231 = vadd.f32 0.0, %v1230
    %v1232 = vpop.f32.mrb[0].mxu0
    %1233 = vmatprep.mubr.f32.mxu0 0.0
    %1234 = vmatmul.mubr.f32.gmra.mrb[0].mxu0 %v837
    %v1235 = vpop.f32.mrb[0].mxu0
    %v1236 = vadd.f32 0.0, %v1235
    %v1237 = vpop.f32.mrb[0].mxu0
    %1238 = vdwg.mxu0
    %1239 = vmatprep.subr.mxu0 0.0
    %1240 = vmatpush1.msra.mxu0 %v87
    %1241 = vmatprep.subr.mxu0 0.0
    %1242 = vmatpush1.msra.mxu0 %v88
    %1243 = vmatprep.subr.mxu0 0.0
    %1244 = vmatpush1.msra.mxu0 %v89
    %1245 = vmatprep.subr.mxu0 0.0
    %1246 = vmatpush1.msra.mxu0 %v90
    %1247 = vmatprep.subr.mxu0 0.0
    %1248 = vmatpush1.msra.mxu0 0.0
    %1249 = vmatprep.subr.mxu0 0.0
    %1250 = vmatpush1.msra.mxu0 0.0
    %1251 = vmatprep.subr.mxu0 0.0
    %1252 = vmatpush1.msra.mxu0 0.0
    %1253 = vmatprep.subr.mxu0 0.0
    %1254 = vmatpush1.msra.mxu0 0.0
    %1255 = vmatprep.subr.mxu0 0.0
    %1256 = vmatpush1.msra.mxu0 0.0
    %1257 = vmatprep.subr.mxu0 0.0
    %1258 = vmatpush1.msra.mxu0 0.0
    %1259 = vmatprep.subr.mxu0 0.0
    %1260 = vmatpush1.msra.mxu0 0.0
    %1261 = vmatprep.subr.mxu0 0.0
    %1262 = vmatpush1.msra.mxu0 0.0
    %1263 = vmatprep.subr.mxu0 0.0
    %1264 = vmatpush1.msra.mxu0 0.0
    %1265 = vmatprep.subr.mxu0 0.0
    %1266 = vmatpush1.msra.mxu0 0.0
    %1267 = vmatprep.subr.mxu0 0.0
    %1268 = vmatpush1.msra.mxu0 0.0
    %1269 = vmatprep.subr.mxu0 0.0
    %1270 = vmatpush1.msra.mxu0 0.0
    %1271 = vmatprep.subr.mxu0 0.0
    %1272 = vmatpush1.msra.mxu0 0.0
    %1273 = vmatprep.subr.mxu0 0.0
    %1274 = vmatpush1.msra.mxu0 0.0
    %1275 = vmatprep.subr.mxu0 0.0
    %1276 = vmatpush1.msra.mxu0 0.0
    %1277 = vmatprep.subr.mxu0 0.0
    %1278 = vmatpush1.msra.mxu0 0.0
    %1279 = vmatprep.subr.mxu0 0.0
    %1280 = vmatpush1.msra.mxu0 0.0
    %1281 = vmatprep.subr.mxu0 0.0
    %1282 = vmatpush1.msra.mxu0 0.0
    %1283 = vmatprep.subr.mxu0 0.0
    %1284 = vmatpush1.msra.mxu0 0.0
    %1285 = vmatprep.subr.mxu0 0.0
    %1286 = vmatpush1.msra.mxu0 0.0
    %1287 = vmatprep.subr.mxu0 0.0
    %1288 = vmatpush1.msra.mxu0 0.0
    %1289 = vmatprep.subr.mxu0 0.0
    %1290 = vmatpush1.msra.mxu0 0.0
    %1291 = vmatprep.subr.mxu0 0.0
    %1292 = vmatpush1.msra.mxu0 0.0
    %1293 = vmatprep.subr.mxu0 0.0
    %1294 = vmatpush1.msra.mxu0 0.0
    %1295 = vmatprep.subr.mxu0 0.0
    %1296 = vmatpush1.msra.mxu0 0.0
    %1297 = vmatprep.subr.mxu0 0.0
    %1298 = vmatpush1.msra.mxu0 0.0
    %1299 = vmatprep.subr.mxu0 0.0
    %1300 = vmatpush1.msra.mxu0 0.0
    %1301 = vmatprep.subr.mxu0 0.0
    %1302 = vmatpush1.msra.mxu0 0.0
    %1303 = vmatprep.mubr.f32.mxu0 0.0
    %1304 = vmatmul.mubr.f32.gmra.mrb[0].mxu0 %v831
    %v1305 = vpop.f32.mrb[0].mxu0
    %v1306 = vadd.f32 0.0, %v1305
    %v1307 = vpop.f32.mrb[0].mxu0
    %1308 = vmatprep.mubr.f32.mxu0 0.0
    %1309 = vmatmul.mubr.f32.gmra.mrb[0].mxu0 %v834
    %v1310 = vpop.f32.mrb[0].mxu0
    %v1311 = vadd.f32 0.0, %v1310
    %v1312 = vpop.f32.mrb[0].mxu0
    %1313 = vmatprep.mubr.f32.mxu0 0.0
    %1314 = vmatmul.mubr.f32.gmra.mrb[0].mxu0 %v837
    %v1315 = vpop.f32.mrb[0].mxu0
    %v1316 = vadd.f32 0.0, %v1315
    %v1317 = vpop.f32.mrb[0].mxu0
    %1318 = vdwg.mxu0
    %1319 = vmatprep.subr.mxu0 0.0
    %1320 = vmatpush1.msra.mxu0 %v91
    %1321 = vmatprep.subr.mxu0 0.0
    %1322 = vmatpush1.msra.mxu0 %v92
    %1323 = vmatprep.subr.mxu0 0.0
    %1324 = vmatpush1.msra.mxu0 %v93
    %1325 = vmatprep.subr.mxu0 0.0
    %1326 = vmatpush1.msra.mxu0 %v94
    %1327 = vmatprep.subr.mxu0 0.0
    %1328 = vmatpush1.msra.mxu0 0.0
    %1329 = vmatprep.subr.mxu0 0.0
    %1330 = vmatpush1.msra.mxu0 0.0
    %1331 = vmatprep.subr.mxu0 0.0
    %1332 = vmatpush1.msra.mxu0 0.0
    %1333 = vmatprep.subr.mxu0 0.0
    %1334 = vmatpush1.msra.mxu0 0.0
    %1335 = vmatprep.subr.mxu0 0.0
    %1336 = vmatpush1.msra.mxu0 0.0
    %1337 = vmatprep.subr.mxu0 0.0
    %1338 = vmatpush1.msra.mxu0 0.0
    %1339 = vmatprep.subr.mxu0 0.0
    %1340 = vmatpush1.msra.mxu0 0.0
    %1341 = vmatprep.subr.mxu0 0.0
    %1342 = vmatpush1.msra.mxu0 0.0
    %1343 = vmatprep.subr.mxu0 0.0
    %1344 = vmatpush1.msra.mxu0 0.0
    %1345 = vmatprep.subr.mxu0 0.0
    %1346 = vmatpush1.msra.mxu0 0.0
    %1347 = vmatprep.subr.mxu0 0.0
    %1348 = vmatpush1.msra.mxu0 0.0
    %1349 = vmatprep.subr.mxu0 0.0
    %1350 = vmatpush1.msra.mxu0 0.0
    %1351 = vmatprep.subr.mxu0 0.0
    %1352 = vmatpush1.msra.mxu0 0.0
    %1353 = vmatprep.subr.mxu0 0.0
    %1354 = vmatpush1.msra.mxu0 0.0
    %1355 = vmatprep.subr.mxu0 0.0
    %1356 = vmatpush1.msra.mxu0 0.0
    %1357 = vmatprep.subr.mxu0 0.0
    %1358 = vmatpush1.msra.mxu0 0.0
    %1359 = vmatprep.subr.mxu0 0.0
    %1360 = vmatpush1.msra.mxu0 0.0
    %1361 = vmatprep.subr.mxu0 0.0
    %1362 = vmatpush1.msra.mxu0 0.0
    %1363 = vmatprep.subr.mxu0 0.0
    %1364 = vmatpush1.msra.mxu0 0.0
    %1365 = vmatprep.subr.mxu0 0.0
    %1366 = vmatpush1.msra.mxu0 0.0
    %1367 = vmatprep.subr.mxu0 0.0
    %1368 = vmatpush1.msra.mxu0 0.0
    %1369 = vmatprep.subr.mxu0 0.0
    %1370 = vmatpush1.msra.mxu0 0.0
    %1371 = vmatprep.subr.mxu0 0.0
    %1372 = vmatpush1.msra.mxu0 0.0
    %1373 = vmatprep.subr.mxu0 0.0
    %1374 = vmatpush1.msra.mxu0 0.0
    %1375 = vmatprep.subr.mxu0 0.0
    %1376 = vmatpush1.msra.mxu0 0.0
    %1377 = vmatprep.subr.mxu0 0.0
    %1378 = vmatpush1.msra.mxu0 0.0
    %1379 = vmatprep.subr.mxu0 0.0
    %1380 = vmatpush1.msra.mxu0 0.0
    %1381 = vmatprep.subr.mxu0 0.0
    %1382 = vmatpush1.msra.mxu0 0.0
    %1383 = vmatprep.mubr.f32.mxu0 0.0
    %1384 = vmatmul.mubr.f32.gmra.mrb[0].mxu0 %v831
    %v1385 = vpop.f32.mrb[0].mxu0
    %v1386 = vadd.f32 0.0, %v1385
    %v1387 = vpop.f32.mrb[0].mxu0
    %1388 = vmatprep.mubr.f32.mxu0 0.0
    %1389 = vmatmul.mubr.f32.gmra.mrb[0].mxu0 %v834
    %v1390 = vpop.f32.mrb[0].mxu0
    %v1391 = vadd.f32 0.0, %v1390
    %v1392 = vpop.f32.mrb[0].mxu0
    %1393 = vmatprep.mubr.f32.mxu0 0.0
    %1394 = vmatmul.mubr.f32.gmra.mrb[0].mxu0 %v837
    %v1395 = vpop.f32.mrb[0].mxu0
    %v1396 = vadd.f32 0.0, %v1395
    %v1397 = vpop.f32.mrb[0].mxu0
    %1398 = vdwg.mxu0
    %1399 = vmatprep.subr.mxu0 0.0
    %1400 = vmatpush1.msra.mxu0 %v95
    %1401 = vmatprep.subr.mxu0 0.0
    %1402 = vmatpush1.msra.mxu0 %v96
    %1403 = vmatprep.subr.mxu0 0.0
    %1404 = vmatpush1.msra.mxu0 %v97
    %1405 = vmatprep.subr.mxu0 0.0
    %1406 = vmatpush1.msra.mxu0 %v98
    %1407 = vmatprep.subr.mxu0 0.0
    %1408 = vmatpush1.msra.mxu0 0.0
    %1409 = vmatprep.subr.mxu0 0.0
    %1410 = vmatpush1.msra.mxu0 0.0
    %1411 = vmatprep.subr.mxu0 0.0
    %1412 = vmatpush1.msra.mxu0 0.0
    %1413 = vmatprep.subr.mxu0 0.0
    %1414 = vmatpush1.msra.mxu0 0.0
    %1415 = vmatprep.subr.mxu0 0.0
    %1416 = vmatpush1.msra.mxu0 0.0
    %1417 = vmatprep.subr.mxu0 0.0
    %1418 = vmatpush1.msra.mxu0 0.0
    %1419 = vmatprep.subr.mxu0 0.0
    %1420 = vmatpush1.msra.mxu0 0.0
    %1421 = vmatprep.subr.mxu0 0.0
    %1422 = vmatpush1.msra.mxu0 0.0
    %1423 = vmatprep.subr.mxu0 0.0
    %1424 = vmatpush1.msra.mxu0 0.0
    %1425 = vmatprep.subr.mxu0 0.0
    %1426 = vmatpush1.msra.mxu0 0.0
    %1427 = vmatprep.subr.mxu0 0.0
    %1428 = vmatpush1.msra.mxu0 0.0
    %1429 = vmatprep.subr.mxu0 0.0
    %1430 = vmatpush1.msra.mxu0 0.0
    %1431 = vmatprep.subr.mxu0 0.0
    %1432 = vmatpush1.msra.mxu0 0.0
    %1433 = vmatprep.subr.mxu0 0.0
    %1434 = vmatpush1.msra.mxu0 0.0
    %1435 = vmatprep.subr.mxu0 0.0
    %1436 = vmatpush1.msra.mxu0 0.0
    %1437 = vmatprep.subr.mxu0 0.0
    %1438 = vmatpush1.msra.mxu0 0.0
    %1439 = vmatprep.subr.mxu0 0.0
    %1440 = vmatpush1.msra.mxu0 0.0
    %1441 = vmatprep.subr.mxu0 0.0
    %1442 = vmatpush1.msra.mxu0 0.0
    %1443 = vmatprep.subr.mxu0 0.0
    %1444 = vmatpush1.msra.mxu0 0.0
    %1445 = vmatprep.subr.mxu0 0.0
    %1446 = vmatpush1.msra.mxu0 0.0
    %1447 = vmatprep.subr.mxu0 0.0
    %1448 = vmatpush1.msra.mxu0 0.0
    %1449 = vmatprep.subr.mxu0 0.0
    %1450 = vmatpush1.msra.mxu0 0.0
    %1451 = vmatprep.subr.mxu0 0.0
    %1452 = vmatpush1.msra.mxu0 0.0
    %1453 = vmatprep.subr.mxu0 0.0
    %1454 = vmatpush1.msra.mxu0 0.0
    %1455 = vmatprep.subr.mxu0 0.0
    %1456 = vmatpush1.msra.mxu0 0.0
    %1457 = vmatprep.subr.mxu0 0.0
    %1458 = vmatpush1.msra.mxu0 0.0
    %1459 = vmatprep.subr.mxu0 0.0
    %1460 = vmatpush1.msra.mxu0 0.0
    %1461 = vmatprep.subr.mxu0 0.0
    %1462 = vmatpush1.msra.mxu0 0.0
    %1463 = vmatprep.mubr.f32.mxu0 0.0
    %1464 = vmatmul.mubr.f32.gmra.mrb[0].mxu0 %v831
    %v1465 = vpop.f32.mrb[0].mxu0
    %v1466 = vadd.f32 0.0, %v1465
    %v1467 = vpop.f32.mrb[0].mxu0
    %1468 = vmatprep.mubr.f32.mxu0 0.0
    %1469 = vmatmul.mubr.f32.gmra.mrb[0].mxu0 %v834
    %v1470 = vpop.f32.mrb[0].mxu0
    %v1471 = vadd.f32 0.0, %v1470
    %v1472 = vpop.f32.mrb[0].mxu0
    %1473 = vmatprep.mubr.f32.mxu0 0.0
    %1474 = vmatmul.mubr.f32.gmra.mrb[0].mxu0 %v837
    %v1475 = vpop.f32.mrb[0].mxu0
    %v1476 = vadd.f32 0.0, %v1475
    %v1477 = vpop.f32.mrb[0].mxu0
    %1478 = vdwg.mxu0
    %v1479 = vmul.f32 %v617, 0.35355338
    %v1480 = vmul.f32 %v687, 0.35355338
    %v1481 = vmul.f32 %v757, 0.35355338
    %v1482 = vmul.f32 %v827, 0.35355338
    %v1483 = vadd.f32 %v1479, %v146
    %v1484 = vadd.f32 %v1480, %v150
    %v1485 = vadd.f32 %v1481, %v154
    %v1486 = vadd.f32 %v1482, %v158
    %v1487 = vadd.f32 %v1479, %v178
    %v1488 = vadd.f32 %v1480, %v182
    %v1489 = vadd.f32 %v1481, %v186
    %v1490 = vadd.f32 %v1482, %v190
    %vm1491 = vcmask 64512
    %v1493 = vsel %vm1491, %v1487, 0
    %v1496 = vsel %vm1491, %v275, 0
    %v1499 = vsel %vm1491, %v280, 0
    %v1502 = vsel %vm1491, %v285, 0
    %1504 = vmatprep.subr.mxu0 0.0
    %1505 = vmatpush1.xpose.msra.mxu0 %v1496
    %1506 = vmatprep.subr.mxu0 0.0
    %1507 = vmatpush1.xpose.msra.mxu0 %v1499
    %1508 = vmatprep.subr.mxu0 0.0
    %1509 = vmatpush1.xpose.msra.mxu0 %v1502
    %1510 = vmatprep.subr.mxu0 0.0
    %1511 = vmatpush1.xpose.msra.mxu0 0.0
    %1512 = vmatprep.subr.mxu0 0.0
    %1513 = vmatpush1.xpose.msra.mxu0 0.0
    %1514 = vmatprep.subr.mxu0 0.0
    %1515 = vmatpush1.xpose.msra.mxu0 0.0
    %1516 = vmatprep.subr.mxu0 0.0
    %1517 = vmatpush1.xpose.msra.mxu0 0.0
    %1518 = vmatprep.subr.mxu0 0.0
    %1519 = vmatpush1.xpose.msra.mxu0 0.0
    %1520 = vmatprep.subr.mxu0 0.0
    %1521 = vmatpush1.xpose.msra.mxu0 0.0
    %1522 = vmatprep.subr.mxu0 0.0
    %1523 = vmatpush1.xpose.msra.mxu0 0.0
    %1524 = vmatprep.subr.mxu0 0.0
    %1525 = vmatpush1.xpose.msra.mxu0 0.0
    %1526 = vmatprep.subr.mxu0 0.0
    %1527 = vmatpush1.xpose.msra.mxu0 0.0
    %1528 = vmatprep.subr.mxu0 0.0
    %1529 = vmatpush1.xpose.msra.mxu0 0.0
    %1530 = vmatprep.subr.mxu0 0.0
    %1531 = vmatpush1.xpose.msra.mxu0 0.0
    %1532 = vmatprep.subr.mxu0 0.0
    %1533 = vmatpush1.xpose.msra.mxu0 0.0
    %1534 = vmatprep.subr.mxu0 0.0
    %1535 = vmatpush1.xpose.msra.mxu0 0.0
    %1536 = vmatprep.subr.mxu0 0.0
    %1537 = vmatpush1.xpose.msra.mxu0 0.0
    %1538 = vmatprep.subr.mxu0 0.0
    %1539 = vmatpush1.xpose.msra.mxu0 0.0
    %1540 = vmatprep.subr.mxu0 0.0
    %1541 = vmatpush1.xpose.msra.mxu0 0.0
    %1542 = vmatprep.subr.mxu0 0.0
    %1543 = vmatpush1.xpose.msra.mxu0 0.0
    %1544 = vmatprep.subr.mxu0 0.0
    %1545 = vmatpush1.xpose.msra.mxu0 0.0
    %1546 = vmatprep.subr.mxu0 0.0
    %1547 = vmatpush1.xpose.msra.mxu0 0.0
    %1548 = vmatprep.subr.mxu0 0.0
    %1549 = vmatpush1.xpose.msra.mxu0 0.0
    %1550 = vmatprep.subr.mxu0 0.0
    %1551 = vmatpush1.xpose.msra.mxu0 0.0
    %1552 = vmatprep.subr.mxu0 0.0
    %1553 = vmatpush1.xpose.msra.mxu0 0.0
    %1554 = vmatprep.subr.mxu0 0.0
    %1555 = vmatpush1.xpose.msra.mxu0 0.0
    %1556 = vmatprep.subr.mxu0 0.0
    %1557 = vmatpush1.xpose.msra.mxu0 0.0
    %1558 = vmatprep.subr.mxu0 0.0
    %1559 = vmatpush1.xpose.msra.mxu0 0.0
    %1560 = vmatprep.subr.mxu0 0.0
    %1561 = vmatpush1.xpose.msra.mxu0 0.0
    %1562 = vmatprep.subr.mxu0 0.0
    %1563 = vmatpush1.xpose.msra.mxu0 0.0
    %1564 = vmatprep.subr.mxu0 0.0
    %1565 = vmatpush1.xpose.msra.mxu0 0.0
    %1566 = vmatprep.subr.mxu0 0.0
    %1567 = vmatpush1.xpose.msra.mxu0 0.0
    %1568 = vmatprep.mubr.f32.mxu0 0.0
    %1569 = vmatmul.mubr.f32.gmra.mrb[0].mxu0 %v1493
    %v1570 = vpop.f32.mrb[0].mxu0
    %v1571 = vadd.f32 0.0, %v1570
    %v1572 = vpop.f32.mrb[0].mxu0
    %1573 = vdwg.mxu0
    %v1575 = vsel %vm1491, %v1488, 0
    %v1578 = vsel %vm1491, %v355, 0
    %v1581 = vsel %vm1491, %v360, 0
    %v1584 = vsel %vm1491, %v365, 0
    %1586 = vmatprep.subr.mxu0 0.0
    %1587 = vmatpush1.xpose.msra.mxu0 %v1578
    %1588 = vmatprep.subr.mxu0 0.0
    %1589 = vmatpush1.xpose.msra.mxu0 %v1581
    %1590 = vmatprep.subr.mxu0 0.0
    %1591 = vmatpush1.xpose.msra.mxu0 %v1584
    %1592 = vmatprep.subr.mxu0 0.0
    %1593 = vmatpush1.xpose.msra.mxu0 0.0
    %1594 = vmatprep.subr.mxu0 0.0
    %1595 = vmatpush1.xpose.msra.mxu0 0.0
    %1596 = vmatprep.subr.mxu0 0.0
    %1597 = vmatpush1.xpose.msra.mxu0 0.0
    %1598 = vmatprep.subr.mxu0 0.0
    %1599 = vmatpush1.xpose.msra.mxu0 0.0
    %1600 = vmatprep.subr.mxu0 0.0
    %1601 = vmatpush1.xpose.msra.mxu0 0.0
    %1602 = vmatprep.subr.mxu0 0.0
    %1603 = vmatpush1.xpose.msra.mxu0 0.0
    %1604 = vmatprep.subr.mxu0 0.0
    %1605 = vmatpush1.xpose.msra.mxu0 0.0
    %1606 = vmatprep.subr.mxu0 0.0
    %1607 = vmatpush1.xpose.msra.mxu0 0.0
    %1608 = vmatprep.subr.mxu0 0.0
    %1609 = vmatpush1.xpose.msra.mxu0 0.0
    %1610 = vmatprep.subr.mxu0 0.0
    %1611 = vmatpush1.xpose.msra.mxu0 0.0
    %1612 = vmatprep.subr.mxu0 0.0
    %1613 = vmatpush1.xpose.msra.mxu0 0.0
    %1614 = vmatprep.subr.mxu0 0.0
    %1615 = vmatpush1.xpose.msra.mxu0 0.0
    %1616 = vmatprep.subr.mxu0 0.0
    %1617 = vmatpush1.xpose.msra.mxu0 0.0
    %1618 = vmatprep.subr.mxu0 0.0
    %1619 = vmatpush1.xpose.msra.mxu0 0.0
    %1620 = vmatprep.subr.mxu0 0.0
    %1621 = vmatpush1.xpose.msra.mxu0 0.0
    %1622 = vmatprep.subr.mxu0 0.0
    %1623 = vmatpush1.xpose.msra.mxu0 0.0
    %1624 = vmatprep.subr.mxu0 0.0
    %1625 = vmatpush1.xpose.msra.mxu0 0.0
    %1626 = vmatprep.subr.mxu0 0.0
    %1627 = vmatpush1.xpose.msra.mxu0 0.0
    %1628 = vmatprep.subr.mxu0 0.0
    %1629 = vmatpush1.xpose.msra.mxu0 0.0
    %1630 = vmatprep.subr.mxu0 0.0
    %1631 = vmatpush1.xpose.msra.mxu0 0.0
    %1632 = vmatprep.subr.mxu0 0.0
    %1633 = vmatpush1.xpose.msra.mxu0 0.0
    %1634 = vmatprep.subr.mxu0 0.0
    %1635 = vmatpush1.xpose.msra.mxu0 0.0
    %1636 = vmatprep.subr.mxu0 0.0
    %1637 = vmatpush1.xpose.msra.mxu0 0.0
    %1638 = vmatprep.subr.mxu0 0.0
    %1639 = vmatpush1.xpose.msra.mxu0 0.0
    %1640 = vmatprep.subr.mxu0 0.0
    %1641 = vmatpush1.xpose.msra.mxu0 0.0
    %1642 = vmatprep.subr.mxu0 0.0
    %1643 = vmatpush1.xpose.msra.mxu0 0.0
    %1644 = vmatprep.subr.mxu0 0.0
    %1645 = vmatpush1.xpose.msra.mxu0 0.0
    %1646 = vmatprep.subr.mxu0 0.0
    %1647 = vmatpush1.xpose.msra.mxu0 0.0
    %1648 = vmatprep.subr.mxu0 0.0
    %1649 = vmatpush1.xpose.msra.mxu0 0.0
    %1650 = vmatprep.mubr.f32.mxu0 0.0
    %1651 = vmatmul.mubr.f32.gmra.mrb[0].mxu0 %v1575
    %v1652 = vpop.f32.mrb[0].mxu0
    %v1653 = vadd.f32 0.0, %v1652
    %v1654 = vpop.f32.mrb[0].mxu0
    %1655 = vdwg.mxu0
    %v1657 = vsel %vm1491, %v1489, 0
    %v1660 = vsel %vm1491, %v435, 0
    %v1663 = vsel %vm1491, %v440, 0
    %v1666 = vsel %vm1491, %v445, 0
    %1668 = vmatprep.subr.mxu0 0.0
    %1669 = vmatpush1.xpose.msra.mxu0 %v1660
    %1670 = vmatprep.subr.mxu0 0.0
    %1671 = vmatpush1.xpose.msra.mxu0 %v1663
    %1672 = vmatprep.subr.mxu0 0.0
    %1673 = vmatpush1.xpose.msra.mxu0 %v1666
    %1674 = vmatprep.subr.mxu0 0.0
    %1675 = vmatpush1.xpose.msra.mxu0 0.0
    %1676 = vmatprep.subr.mxu0 0.0
    %1677 = vmatpush1.xpose.msra.mxu0 0.0
    %1678 = vmatprep.subr.mxu0 0.0
    %1679 = vmatpush1.xpose.msra.mxu0 0.0
    %1680 = vmatprep.subr.mxu0 0.0
    %1681 = vmatpush1.xpose.msra.mxu0 0.0
    %1682 = vmatprep.subr.mxu0 0.0
    %1683 = vmatpush1.xpose.msra.mxu0 0.0
    %1684 = vmatprep.subr.mxu0 0.0
    %1685 = vmatpush1.xpose.msra.mxu0 0.0
    %1686 = vmatprep.subr.mxu0 0.0
    %1687 = vmatpush1.xpose.msra.mxu0 0.0
    %1688 = vmatprep.subr.mxu0 0.0
    %1689 = vmatpush1.xpose.msra.mxu0 0.0
    %1690 = vmatprep.subr.mxu0 0.0
    %1691 = vmatpush1.xpose.msra.mxu0 0.0
    %1692 = vmatprep.subr.mxu0 0.0
    %1693 = vmatpush1.xpose.msra.mxu0 0.0
    %1694 = vmatprep.subr.mxu0 0.0
    %1695 = vmatpush1.xpose.msra.mxu0 0.0
    %1696 = vmatprep.subr.mxu0 0.0
    %1697 = vmatpush1.xpose.msra.mxu0 0.0
    %1698 = vmatprep.subr.mxu0 0.0
    %1699 = vmatpush1.xpose.msra.mxu0 0.0
    %1700 = vmatprep.subr.mxu0 0.0
    %1701 = vmatpush1.xpose.msra.mxu0 0.0
    %1702 = vmatprep.subr.mxu0 0.0
    %1703 = vmatpush1.xpose.msra.mxu0 0.0
    %1704 = vmatprep.subr.mxu0 0.0
    %1705 = vmatpush1.xpose.msra.mxu0 0.0
    %1706 = vmatprep.subr.mxu0 0.0
    %1707 = vmatpush1.xpose.msra.mxu0 0.0
    %1708 = vmatprep.subr.mxu0 0.0
    %1709 = vmatpush1.xpose.msra.mxu0 0.0
    %1710 = vmatprep.subr.mxu0 0.0
    %1711 = vmatpush1.xpose.msra.mxu0 0.0
    %1712 = vmatprep.subr.mxu0 0.0
    %1713 = vmatpush1.xpose.msra.mxu0 0.0
    %1714 = vmatprep.subr.mxu0 0.0
    %1715 = vmatpush1.xpose.msra.mxu0 0.0
    %1716 = vmatprep.subr.mxu0 0.0
    %1717 = vmatpush1.xpose.msra.mxu0 0.0
    %1718 = vmatprep.subr.mxu0 0.0
    %1719 = vmatpush1.xpose.msra.mxu0 0.0
    %1720 = vmatprep.subr.mxu0 0.0
    %1721 = vmatpush1.xpose.msra.mxu0 0.0
    %1722 = vmatprep.subr.mxu0 0.0
    %1723 = vmatpush1.xpose.msra.mxu0 0.0
    %1724 = vmatprep.subr.mxu0 0.0
    %1725 = vmatpush1.xpose.msra.mxu0 0.0
    %1726 = vmatprep.subr.mxu0 0.0
    %1727 = vmatpush1.xpose.msra.mxu0 0.0
    %1728 = vmatprep.subr.mxu0 0.0
    %1729 = vmatpush1.xpose.msra.mxu0 0.0
    %1730 = vmatprep.subr.mxu0 0.0
    %1731 = vmatpush1.xpose.msra.mxu0 0.0
    %1732 = vmatprep.mubr.f32.mxu0 0.0
    %1733 = vmatmul.mubr.f32.gmra.mrb[0].mxu0 %v1657
    %v1734 = vpop.f32.mrb[0].mxu0
    %v1735 = vadd.f32 0.0, %v1734
    %v1736 = vpop.f32.mrb[0].mxu0
    %1737 = vdwg.mxu0
    %v1739 = vsel %vm1491, %v1490, 0
    %v1742 = vsel %vm1491, %v515, 0
    %v1745 = vsel %vm1491, %v520, 0
    %v1748 = vsel %vm1491, %v525, 0
    %1750 = vmatprep.subr.mxu0 0.0
    %1751 = vmatpush1.xpose.msra.mxu0 %v1742
    %1752 = vmatprep.subr.mxu0 0.0
    %1753 = vmatpush1.xpose.msra.mxu0 %v1745
    %1754 = vmatprep.subr.mxu0 0.0
    %1755 = vmatpush1.xpose.msra.mxu0 %v1748
    %1756 = vmatprep.subr.mxu0 0.0
    %1757 = vmatpush1.xpose.msra.mxu0 0.0
    %1758 = vmatprep.subr.mxu0 0.0
    %1759 = vmatpush1.xpose.msra.mxu0 0.0
    %1760 = vmatprep.subr.mxu0 0.0
    %1761 = vmatpush1.xpose.msra.mxu0 0.0
    %1762 = vmatprep.subr.mxu0 0.0
    %1763 = vmatpush1.xpose.msra.mxu0 0.0
    %1764 = vmatprep.subr.mxu0 0.0
    %1765 = vmatpush1.xpose.msra.mxu0 0.0
    %1766 = vmatprep.subr.mxu0 0.0
    %1767 = vmatpush1.xpose.msra.mxu0 0.0
    %1768 = vmatprep.subr.mxu0 0.0
    %1769 = vmatpush1.xpose.msra.mxu0 0.0
    %1770 = vmatprep.subr.mxu0 0.0
    %1771 = vmatpush1.xpose.msra.mxu0 0.0
    %1772 = vmatprep.subr.mxu0 0.0
    %1773 = vmatpush1.xpose.msra.mxu0 0.0
    %1774 = vmatprep.subr.mxu0 0.0
    %1775 = vmatpush1.xpose.msra.mxu0 0.0
    %1776 = vmatprep.subr.mxu0 0.0
    %1777 = vmatpush1.xpose.msra.mxu0 0.0
    %1778 = vmatprep.subr.mxu0 0.0
    %1779 = vmatpush1.xpose.msra.mxu0 0.0
    %1780 = vmatprep.subr.mxu0 0.0
    %1781 = vmatpush1.xpose.msra.mxu0 0.0
    %1782 = vmatprep.subr.mxu0 0.0
    %1783 = vmatpush1.xpose.msra.mxu0 0.0
    %1784 = vmatprep.subr.mxu0 0.0
    %1785 = vmatpush1.xpose.msra.mxu0 0.0
    %1786 = vmatprep.subr.mxu0 0.0
    %1787 = vmatpush1.xpose.msra.mxu0 0.0
    %1788 = vmatprep.subr.mxu0 0.0
    %1789 = vmatpush1.xpose.msra.mxu0 0.0
    %1790 = vmatprep.subr.mxu0 0.0
    %1791 = vmatpush1.xpose.msra.mxu0 0.0
    %1792 = vmatprep.subr.mxu0 0.0
    %1793 = vmatpush1.xpose.msra.mxu0 0.0
    %1794 = vmatprep.subr.mxu0 0.0
    %1795 = vmatpush1.xpose.msra.mxu0 0.0
    %1796 = vmatprep.subr.mxu0 0.0
    %1797 = vmatpush1.xpose.msra.mxu0 0.0
    %1798 = vmatprep.subr.mxu0 0.0
    %1799 = vmatpush1.xpose.msra.mxu0 0.0
    %1800 = vmatprep.subr.mxu0 0.0
    %1801 = vmatpush1.xpose.msra.mxu0 0.0
    %1802 = vmatprep.subr.mxu0 0.0
    %1803 = vmatpush1.xpose.msra.mxu0 0.0
    %1804 = vmatprep.subr.mxu0 0.0
    %1805 = vmatpush1.xpose.msra.mxu0 0.0
    %1806 = vmatprep.subr.mxu0 0.0
    %1807 = vmatpush1.xpose.msra.mxu0 0.0
    %1808 = vmatprep.subr.mxu0 0.0
    %1809 = vmatpush1.xpose.msra.mxu0 0.0
    %1810 = vmatprep.subr.mxu0 0.0
    %1811 = vmatpush1.xpose.msra.mxu0 0.0
    %1812 = vmatprep.subr.mxu0 0.0
    %1813 = vmatpush1.xpose.msra.mxu0 0.0
    %1814 = vmatprep.mubr.f32.mxu0 0.0
    %1815 = vmatmul.mubr.f32.gmra.mrb[0].mxu0 %v1739
    %v1816 = vpop.f32.mrb[0].mxu0
    %v1817 = vadd.f32 0.0, %v1816
    %v1818 = vpop.f32.mrb[0].mxu0
    %1819 = vdwg.mxu0
    %1824 = vrot.lane.b32.xlu0 %v1571, 127
    %v1825 = vpop.permute.xlu0 %1824
    %1826 = vrot.lane.b32.xlu0 %v1653, 127
    %v1827 = vpop.permute.xlu0 %1826
    %1828 = vrot.lane.b32.xlu0 %v1735, 127
    %v1829 = vpop.permute.xlu0 %1828
    %1830 = vrot.lane.b32.xlu0 %v1817, 127
    %v1831 = vpop.permute.xlu0 %1830
    %1836 = vrot.lane.b32.xlu0 %v1571, 20
    %v1837 = vpop.permute.xlu0 %1836
    %1838 = vrot.lane.b32.xlu0 %v1653, 20
    %v1839 = vpop.permute.xlu0 %1838
    %1840 = vrot.lane.b32.xlu0 %v1735, 20
    %v1841 = vpop.permute.xlu0 %1840
    %1842 = vrot.lane.b32.xlu0 %v1817, 20
    %v1843 = vpop.permute.xlu0 %1842
    %vm1848 = vcmask 162816
    %v1849 = vsel %vm1848, %v1825, %v1837
    %v1850 = vsel %vm1848, %v1827, %v1839
    %v1851 = vsel %vm1848, %v1829, %v1841
    %v1852 = vsel %vm1848, %v1831, %v1843
    %v1853 = vsel %vm534, %v1849, %v1571
    %v1854 = vsel %vm534, %v1850, %v1653
    %v1855 = vsel %vm534, %v1851, %v1735
    %v1856 = vsel %vm534, %v1852, %v1817
    %1861 = vrot.lane.b32.xlu0 %v1853, 126
    %v1862 = vpop.permute.xlu0 %1861
    %1863 = vrot.lane.b32.xlu0 %v1854, 126
    %v1864 = vpop.permute.xlu0 %1863
    %1865 = vrot.lane.b32.xlu0 %v1855, 126
    %v1866 = vpop.permute.xlu0 %1865
    %1867 = vrot.lane.b32.xlu0 %v1856, 126
    %v1868 = vpop.permute.xlu0 %1867
    %1873 = vrot.lane.b32.xlu0 %v1853, 19
    %v1874 = vpop.permute.xlu0 %1873
    %1875 = vrot.lane.b32.xlu0 %v1854, 19
    %v1876 = vpop.permute.xlu0 %1875
    %1877 = vrot.lane.b32.xlu0 %v1855, 19
    %v1878 = vpop.permute.xlu0 %1877
    %1879 = vrot.lane.b32.xlu0 %v1856, 19
    %v1880 = vpop.permute.xlu0 %1879
    %vm1885 = vcmask 154624
    %v1886 = vsel %vm1885, %v1862, %v1874
    %v1887 = vsel %vm1885, %v1864, %v1876
    %v1888 = vsel %vm1885, %v1866, %v1878
    %v1889 = vsel %vm1885, %v1868, %v1880
    %v1890 = vsel %vm536, %v1886, %v1853
    %v1891 = vsel %vm536, %v1887, %v1854
    %v1892 = vsel %vm536, %v1888, %v1855
    %v1893 = vsel %vm536, %v1889, %v1856
    %1898 = vrot.lane.b32.xlu0 %v1890, 124
    %v1899 = vpop.permute.xlu0 %1898
    %1900 = vrot.lane.b32.xlu0 %v1891, 124
    %v1901 = vpop.permute.xlu0 %1900
    %1902 = vrot.lane.b32.xlu0 %v1892, 124
    %v1903 = vpop.permute.xlu0 %1902
    %1904 = vrot.lane.b32.xlu0 %v1893, 124
    %v1905 = vpop.permute.xlu0 %1904
    %1910 = vrot.lane.b32.xlu0 %v1890, 17
    %v1911 = vpop.permute.xlu0 %1910
    %1912 = vrot.lane.b32.xlu0 %v1891, 17
    %v1913 = vpop.permute.xlu0 %1912
    %1914 = vrot.lane.b32.xlu0 %v1892, 17
    %v1915 = vpop.permute.xlu0 %1914
    %1916 = vrot.lane.b32.xlu0 %v1893, 17
    %v1917 = vpop.permute.xlu0 %1916
    %vm1922 = vcmask 138240
    %v1923 = vsel %vm1922, %v1899, %v1911
    %v1924 = vsel %vm1922, %v1901, %v1913
    %v1925 = vsel %vm1922, %v1903, %v1915
    %v1926 = vsel %vm1922, %v1905, %v1917
    %v1927 = vsel %vm538, %v1923, %v1890
    %v1928 = vsel %vm538, %v1924, %v1891
    %v1929 = vsel %vm538, %v1925, %v1892
    %v1930 = vsel %vm538, %v1926, %v1893
    %1935 = vrot.lane.b32.xlu0 %v1927, 120
    %v1936 = vpop.permute.xlu0 %1935
    %1937 = vrot.lane.b32.xlu0 %v1928, 120
    %v1938 = vpop.permute.xlu0 %1937
    %1939 = vrot.lane.b32.xlu0 %v1929, 120
    %v1940 = vpop.permute.xlu0 %1939
    %1941 = vrot.lane.b32.xlu0 %v1930, 120
    %v1942 = vpop.permute.xlu0 %1941
    %1947 = vrot.lane.b32.xlu0 %v1927, 13
    %v1948 = vpop.permute.xlu0 %1947
    %1949 = vrot.lane.b32.xlu0 %v1928, 13
    %v1950 = vpop.permute.xlu0 %1949
    %1951 = vrot.lane.b32.xlu0 %v1929, 13
    %v1952 = vpop.permute.xlu0 %1951
    %1953 = vrot.lane.b32.xlu0 %v1930, 13
    %v1954 = vpop.permute.xlu0 %1953
    %vm1959 = vcmask 105472
    %v1960 = vsel %vm1959, %v1936, %v1948
    %v1961 = vsel %vm1959, %v1938, %v1950
    %v1962 = vsel %vm1959, %v1940, %v1952
    %v1963 = vsel %vm1959, %v1942, %v1954
    %v1964 = vsel %vm540, %v1960, %v1927
    %v1965 = vsel %vm540, %v1961, %v1928
    %v1966 = vsel %vm540, %v1962, %v1929
    %v1967 = vsel %vm540, %v1963, %v1930
    %v1972 = vrot.slane %v1964, 1
    %v1973 = vrot.slane %v1965, 1
    %v1974 = vrot.slane %v1966, 1
    %v1975 = vrot.slane %v1967, 1
    %vm1980 = vcmask 1046528
    %v1981 = vsel %vm1980, %v1972, %v1972
    %v1982 = vsel %vm1980, %v1973, %v1973
    %v1983 = vsel %vm1980, %v1974, %v1974
    %v1984 = vsel %vm1980, %v1975, %v1975
    %1989 = vrot.lane.b32.xlu0 %v1981, 127
    %v1990 = vpop.permute.xlu0 %1989
    %1991 = vrot.lane.b32.xlu0 %v1982, 127
    %v1992 = vpop.permute.xlu0 %1991
    %1993 = vrot.lane.b32.xlu0 %v1983, 127
    %v1994 = vpop.permute.xlu0 %1993
    %1995 = vrot.lane.b32.xlu0 %v1984, 127
    %v1996 = vpop.permute.xlu0 %1995
    %2001 = vrot.lane.b32.xlu0 %v1981, 20
    %v2002 = vpop.permute.xlu0 %2001
    %2003 = vrot.lane.b32.xlu0 %v1982, 20
    %v2004 = vpop.permute.xlu0 %2003
    %2005 = vrot.lane.b32.xlu0 %v1983, 20
    %v2006 = vpop.permute.xlu0 %2005
    %2007 = vrot.lane.b32.xlu0 %v1984, 20
    %v2008 = vpop.permute.xlu0 %2007
    %v2013 = vsel %vm1848, %v1990, %v2002
    %v2014 = vsel %vm1848, %v1992, %v2004
    %v2015 = vsel %vm1848, %v1994, %v2006
    %v2016 = vsel %vm1848, %v1996, %v2008
    %v2017 = vsel %vm542, %v1964, %v2013
    %v2018 = vsel %vm542, %v1965, %v2014
    %v2019 = vsel %vm542, %v1966, %v2015
    %v2020 = vsel %vm542, %v1967, %v2016
    %v2022 = vsel %vm1491, %v1483, 0
    %v2025 = vsel %vm1491, %v906, 0
    %v2028 = vsel %vm1491, %v911, 0
    %v2031 = vsel %vm1491, %v916, 0
    %2033 = vmatprep.subr.mxu0 0.0
    %2034 = vmatpush1.xpose.msra.mxu0 %v2025
    %2035 = vmatprep.subr.mxu0 0.0
    %2036 = vmatpush1.xpose.msra.mxu0 %v2028
    %2037 = vmatprep.subr.mxu0 0.0
    %2038 = vmatpush1.xpose.msra.mxu0 %v2031
    %2039 = vmatprep.subr.mxu0 0.0
    %2040 = vmatpush1.xpose.msra.mxu0 0.0
    %2041 = vmatprep.subr.mxu0 0.0
    %2042 = vmatpush1.xpose.msra.mxu0 0.0
    %2043 = vmatprep.subr.mxu0 0.0
    %2044 = vmatpush1.xpose.msra.mxu0 0.0
    %2045 = vmatprep.subr.mxu0 0.0
    %2046 = vmatpush1.xpose.msra.mxu0 0.0
    %2047 = vmatprep.subr.mxu0 0.0
    %2048 = vmatpush1.xpose.msra.mxu0 0.0
    %2049 = vmatprep.subr.mxu0 0.0
    %2050 = vmatpush1.xpose.msra.mxu0 0.0
    %2051 = vmatprep.subr.mxu0 0.0
    %2052 = vmatpush1.xpose.msra.mxu0 0.0
    %2053 = vmatprep.subr.mxu0 0.0
    %2054 = vmatpush1.xpose.msra.mxu0 0.0
    %2055 = vmatprep.subr.mxu0 0.0
    %2056 = vmatpush1.xpose.msra.mxu0 0.0
    %2057 = vmatprep.subr.mxu0 0.0
    %2058 = vmatpush1.xpose.msra.mxu0 0.0
    %2059 = vmatprep.subr.mxu0 0.0
    %2060 = vmatpush1.xpose.msra.mxu0 0.0
    %2061 = vmatprep.subr.mxu0 0.0
    %2062 = vmatpush1.xpose.msra.mxu0 0.0
    %2063 = vmatprep.subr.mxu0 0.0
    %2064 = vmatpush1.xpose.msra.mxu0 0.0
    %2065 = vmatprep.subr.mxu0 0.0
    %2066 = vmatpush1.xpose.msra.mxu0 0.0
    %2067 = vmatprep.subr.mxu0 0.0
    %2068 = vmatpush1.xpose.msra.mxu0 0.0
    %2069 = vmatprep.subr.mxu0 0.0
    %2070 = vmatpush1.xpose.msra.mxu0 0.0
    %2071 = vmatprep.subr.mxu0 0.0
    %2072 = vmatpush1.xpose.msra.mxu0 0.0
    %2073 = vmatprep.subr.mxu0 0.0
    %2074 = vmatpush1.xpose.msra.mxu0 0.0
    %2075 = vmatprep.subr.mxu0 0.0
    %2076 = vmatpush1.xpose.msra.mxu0 0.0
    %2077 = vmatprep.subr.mxu0 0.0
    %2078 = vmatpush1.xpose.msra.mxu0 0.0
    %2079 = vmatprep.subr.mxu0 0.0
    %2080 = vmatpush1.xpose.msra.mxu0 0.0
    %2081 = vmatprep.subr.mxu0 0.0
    %2082 = vmatpush1.xpose.msra.mxu0 0.0
    %2083 = vmatprep.subr.mxu0 0.0
    %2084 = vmatpush1.xpose.msra.mxu0 0.0
    %2085 = vmatprep.subr.mxu0 0.0
    %2086 = vmatpush1.xpose.msra.mxu0 0.0
    %2087 = vmatprep.subr.mxu0 0.0
    %2088 = vmatpush1.xpose.msra.mxu0 0.0
    %2089 = vmatprep.subr.mxu0 0.0
    %2090 = vmatpush1.xpose.msra.mxu0 0.0
    %2091 = vmatprep.subr.mxu0 0.0
    %2092 = vmatpush1.xpose.msra.mxu0 0.0
    %2093 = vmatprep.subr.mxu0 0.0
    %2094 = vmatpush1.xpose.msra.mxu0 0.0
    %2095 = vmatprep.subr.mxu0 0.0
    %2096 = vmatpush1.xpose.msra.mxu0 0.0
    %2097 = vmatprep.mubr.f32.mxu0 0.0
    %2098 = vmatmul.mubr.f32.gmra.mrb[0].mxu0 %v2022
    %v2099 = vpop.f32.mrb[0].mxu0
    %v2100 = vadd.f32 %v2017, %v2099
    %v2101 = vpop.f32.mrb[0].mxu0
    %2102 = vdwg.mxu0
    %v2104 = vsel %vm1491, %v1484, 0
    %v2107 = vsel %vm1491, %v986, 0
    %v2110 = vsel %vm1491, %v991, 0
    %v2113 = vsel %vm1491, %v996, 0
    %2115 = vmatprep.subr.mxu0 0.0
    %2116 = vmatpush1.xpose.msra.mxu0 %v2107
    %2117 = vmatprep.subr.mxu0 0.0
    %2118 = vmatpush1.xpose.msra.mxu0 %v2110
    %2119 = vmatprep.subr.mxu0 0.0
    %2120 = vmatpush1.xpose.msra.mxu0 %v2113
    %2121 = vmatprep.subr.mxu0 0.0
    %2122 = vmatpush1.xpose.msra.mxu0 0.0
    %2123 = vmatprep.subr.mxu0 0.0
    %2124 = vmatpush1.xpose.msra.mxu0 0.0
    %2125 = vmatprep.subr.mxu0 0.0
    %2126 = vmatpush1.xpose.msra.mxu0 0.0
    %2127 = vmatprep.subr.mxu0 0.0
    %2128 = vmatpush1.xpose.msra.mxu0 0.0
    %2129 = vmatprep.subr.mxu0 0.0
    %2130 = vmatpush1.xpose.msra.mxu0 0.0
    %2131 = vmatprep.subr.mxu0 0.0
    %2132 = vmatpush1.xpose.msra.mxu0 0.0
    %2133 = vmatprep.subr.mxu0 0.0
    %2134 = vmatpush1.xpose.msra.mxu0 0.0
    %2135 = vmatprep.subr.mxu0 0.0
    %2136 = vmatpush1.xpose.msra.mxu0 0.0
    %2137 = vmatprep.subr.mxu0 0.0
    %2138 = vmatpush1.xpose.msra.mxu0 0.0
    %2139 = vmatprep.subr.mxu0 0.0
    %2140 = vmatpush1.xpose.msra.mxu0 0.0
    %2141 = vmatprep.subr.mxu0 0.0
    %2142 = vmatpush1.xpose.msra.mxu0 0.0
    %2143 = vmatprep.subr.mxu0 0.0
    %2144 = vmatpush1.xpose.msra.mxu0 0.0
    %2145 = vmatprep.subr.mxu0 0.0
    %2146 = vmatpush1.xpose.msra.mxu0 0.0
    %2147 = vmatprep.subr.mxu0 0.0
    %2148 = vmatpush1.xpose.msra.mxu0 0.0
    %2149 = vmatprep.subr.mxu0 0.0
    %2150 = vmatpush1.xpose.msra.mxu0 0.0
    %2151 = vmatprep.subr.mxu0 0.0
    %2152 = vmatpush1.xpose.msra.mxu0 0.0
    %2153 = vmatprep.subr.mxu0 0.0
    %2154 = vmatpush1.xpose.msra.mxu0 0.0
    %2155 = vmatprep.subr.mxu0 0.0
    %2156 = vmatpush1.xpose.msra.mxu0 0.0
    %2157 = vmatprep.subr.mxu0 0.0
    %2158 = vmatpush1.xpose.msra.mxu0 0.0
    %2159 = vmatprep.subr.mxu0 0.0
    %2160 = vmatpush1.xpose.msra.mxu0 0.0
    %2161 = vmatprep.subr.mxu0 0.0
    %2162 = vmatpush1.xpose.msra.mxu0 0.0
    %2163 = vmatprep.subr.mxu0 0.0
    %2164 = vmatpush1.xpose.msra.mxu0 0.0
    %2165 = vmatprep.subr.mxu0 0.0
    %2166 = vmatpush1.xpose.msra.mxu0 0.0
    %2167 = vmatprep.subr.mxu0 0.0
    %2168 = vmatpush1.xpose.msra.mxu0 0.0
    %2169 = vmatprep.subr.mxu0 0.0
    %2170 = vmatpush1.xpose.msra.mxu0 0.0
    %2171 = vmatprep.subr.mxu0 0.0
    %2172 = vmatpush1.xpose.msra.mxu0 0.0
    %2173 = vmatprep.subr.mxu0 0.0
    %2174 = vmatpush1.xpose.msra.mxu0 0.0
    %2175 = vmatprep.subr.mxu0 0.0
    %2176 = vmatpush1.xpose.msra.mxu0 0.0
    %2177 = vmatprep.subr.mxu0 0.0
    %2178 = vmatpush1.xpose.msra.mxu0 0.0
    %2179 = vmatprep.mubr.f32.mxu0 0.0
    %2180 = vmatmul.mubr.f32.gmra.mrb[0].mxu0 %v2104
    %v2181 = vpop.f32.mrb[0].mxu0
    %v2182 = vadd.f32 %v2018, %v2181
    %v2183 = vpop.f32.mrb[0].mxu0
    %2184 = vdwg.mxu0
    %v2186 = vsel %vm1491, %v1485, 0
    %v2189 = vsel %vm1491, %v1066, 0
    %v2192 = vsel %vm1491, %v1071, 0
    %v2195 = vsel %vm1491, %v1076, 0
    %2197 = vmatprep.subr.mxu0 0.0
    %2198 = vmatpush1.xpose.msra.mxu0 %v2189
    %2199 = vmatprep.subr.mxu0 0.0
    %2200 = vmatpush1.xpose.msra.mxu0 %v2192
    %2201 = vmatprep.subr.mxu0 0.0
    %2202 = vmatpush1.xpose.msra.mxu0 %v2195
    %2203 = vmatprep.subr.mxu0 0.0
    %2204 = vmatpush1.xpose.msra.mxu0 0.0
    %2205 = vmatprep.subr.mxu0 0.0
    %2206 = vmatpush1.xpose.msra.mxu0 0.0
    %2207 = vmatprep.subr.mxu0 0.0
    %2208 = vmatpush1.xpose.msra.mxu0 0.0
    %2209 = vmatprep.subr.mxu0 0.0
    %2210 = vmatpush1.xpose.msra.mxu0 0.0
    %2211 = vmatprep.subr.mxu0 0.0
    %2212 = vmatpush1.xpose.msra.mxu0 0.0
    %2213 = vmatprep.subr.mxu0 0.0
    %2214 = vmatpush1.xpose.msra.mxu0 0.0
    %2215 = vmatprep.subr.mxu0 0.0
    %2216 = vmatpush1.xpose.msra.mxu0 0.0
    %2217 = vmatprep.subr.mxu0 0.0
    %2218 = vmatpush1.xpose.msra.mxu0 0.0
    %2219 = vmatprep.subr.mxu0 0.0
    %2220 = vmatpush1.xpose.msra.mxu0 0.0
    %2221 = vmatprep.subr.mxu0 0.0
    %2222 = vmatpush1.xpose.msra.mxu0 0.0
    %2223 = vmatprep.subr.mxu0 0.0
    %2224 = vmatpush1.xpose.msra.mxu0 0.0
    %2225 = vmatprep.subr.mxu0 0.0
    %2226 = vmatpush1.xpose.msra.mxu0 0.0
    %2227 = vmatprep.subr.mxu0 0.0
    %2228 = vmatpush1.xpose.msra.mxu0 0.0
    %2229 = vmatprep.subr.mxu0 0.0
    %2230 = vmatpush1.xpose.msra.mxu0 0.0
    %2231 = vmatprep.subr.mxu0 0.0
    %2232 = vmatpush1.xpose.msra.mxu0 0.0
    %2233 = vmatprep.subr.mxu0 0.0
    %2234 = vmatpush1.xpose.msra.mxu0 0.0
    %2235 = vmatprep.subr.mxu0 0.0
    %2236 = vmatpush1.xpose.msra.mxu0 0.0
    %2237 = vmatprep.subr.mxu0 0.0
    %2238 = vmatpush1.xpose.msra.mxu0 0.0
    %2239 = vmatprep.subr.mxu0 0.0
    %2240 = vmatpush1.xpose.msra.mxu0 0.0
    %2241 = vmatprep.subr.mxu0 0.0
    %2242 = vmatpush1.xpose.msra.mxu0 0.0
    %2243 = vmatprep.subr.mxu0 0.0
    %2244 = vmatpush1.xpose.msra.mxu0 0.0
    %2245 = vmatprep.subr.mxu0 0.0
    %2246 = vmatpush1.xpose.msra.mxu0 0.0
    %2247 = vmatprep.subr.mxu0 0.0
    %2248 = vmatpush1.xpose.msra.mxu0 0.0
    %2249 = vmatprep.subr.mxu0 0.0
    %2250 = vmatpush1.xpose.msra.mxu0 0.0
    %2251 = vmatprep.subr.mxu0 0.0
    %2252 = vmatpush1.xpose.msra.mxu0 0.0
    %2253 = vmatprep.subr.mxu0 0.0
    %2254 = vmatpush1.xpose.msra.mxu0 0.0
    %2255 = vmatprep.subr.mxu0 0.0
    %2256 = vmatpush1.xpose.msra.mxu0 0.0
    %2257 = vmatprep.subr.mxu0 0.0
    %2258 = vmatpush1.xpose.msra.mxu0 0.0
    %2259 = vmatprep.subr.mxu0 0.0
    %2260 = vmatpush1.xpose.msra.mxu0 0.0
    %2261 = vmatprep.mubr.f32.mxu0 0.0
    %2262 = vmatmul.mubr.f32.gmra.mrb[0].mxu0 %v2186
    %v2263 = vpop.f32.mrb[0].mxu0
    %v2264 = vadd.f32 %v2019, %v2263
    %v2265 = vpop.f32.mrb[0].mxu0
    %2266 = vdwg.mxu0
    %v2268 = vsel %vm1491, %v1486, 0
    %v2271 = vsel %vm1491, %v1146, 0
    %v2274 = vsel %vm1491, %v1151, 0
    %v2277 = vsel %vm1491, %v1156, 0
    %2279 = vmatprep.subr.mxu0 0.0
    %2280 = vmatpush1.xpose.msra.mxu0 %v2271
    %2281 = vmatprep.subr.mxu0 0.0
    %2282 = vmatpush1.xpose.msra.mxu0 %v2274
    %2283 = vmatprep.subr.mxu0 0.0
    %2284 = vmatpush1.xpose.msra.mxu0 %v2277
    %2285 = vmatprep.subr.mxu0 0.0
    %2286 = vmatpush1.xpose.msra.mxu0 0.0
    %2287 = vmatprep.subr.mxu0 0.0
    %2288 = vmatpush1.xpose.msra.mxu0 0.0
    %2289 = vmatprep.subr.mxu0 0.0
    %2290 = vmatpush1.xpose.msra.mxu0 0.0
    %2291 = vmatprep.subr.mxu0 0.0
    %2292 = vmatpush1.xpose.msra.mxu0 0.0
    %2293 = vmatprep.subr.mxu0 0.0
    %2294 = vmatpush1.xpose.msra.mxu0 0.0
    %2295 = vmatprep.subr.mxu0 0.0
    %2296 = vmatpush1.xpose.msra.mxu0 0.0
    %2297 = vmatprep.subr.mxu0 0.0
    %2298 = vmatpush1.xpose.msra.mxu0 0.0
    %2299 = vmatprep.subr.mxu0 0.0
    %2300 = vmatpush1.xpose.msra.mxu0 0.0
    %2301 = vmatprep.subr.mxu0 0.0
    %2302 = vmatpush1.xpose.msra.mxu0 0.0
    %2303 = vmatprep.subr.mxu0 0.0
    %2304 = vmatpush1.xpose.msra.mxu0 0.0
    %2305 = vmatprep.subr.mxu0 0.0
    %2306 = vmatpush1.xpose.msra.mxu0 0.0
    %2307 = vmatprep.subr.mxu0 0.0
    %2308 = vmatpush1.xpose.msra.mxu0 0.0
    %2309 = vmatprep.subr.mxu0 0.0
    %2310 = vmatpush1.xpose.msra.mxu0 0.0
    %2311 = vmatprep.subr.mxu0 0.0
    %2312 = vmatpush1.xpose.msra.mxu0 0.0
    %2313 = vmatprep.subr.mxu0 0.0
    %2314 = vmatpush1.xpose.msra.mxu0 0.0
    %2315 = vmatprep.subr.mxu0 0.0
    %2316 = vmatpush1.xpose.msra.mxu0 0.0
    %2317 = vmatprep.subr.mxu0 0.0
    %2318 = vmatpush1.xpose.msra.mxu0 0.0
    %2319 = vmatprep.subr.mxu0 0.0
    %2320 = vmatpush1.xpose.msra.mxu0 0.0
    %2321 = vmatprep.subr.mxu0 0.0
    %2322 = vmatpush1.xpose.msra.mxu0 0.0
    %2323 = vmatprep.subr.mxu0 0.0
    %2324 = vmatpush1.xpose.msra.mxu0 0.0
    %2325 = vmatprep.subr.mxu0 0.0
    %2326 = vmatpush1.xpose.msra.mxu0 0.0
    %2327 = vmatprep.subr.mxu0 0.0
    %2328 = vmatpush1.xpose.msra.mxu0 0.0
    %2329 = vmatprep.subr.mxu0 0.0
    %2330 = vmatpush1.xpose.msra.mxu0 0.0
    %2331 = vmatprep.subr.mxu0 0.0
    %2332 = vmatpush1.xpose.msra.mxu0 0.0
    %2333 = vmatprep.subr.mxu0 0.0
    %2334 = vmatpush1.xpose.msra.mxu0 0.0
    %2335 = vmatprep.subr.mxu0 0.0
    %2336 = vmatpush1.xpose.msra.mxu0 0.0
    %2337 = vmatprep.subr.mxu0 0.0
    %2338 = vmatpush1.xpose.msra.mxu0 0.0
    %2339 = vmatprep.subr.mxu0 0.0
    %2340 = vmatpush1.xpose.msra.mxu0 0.0
    %2341 = vmatprep.subr.mxu0 0.0
    %2342 = vmatpush1.xpose.msra.mxu0 0.0
    %2343 = vmatprep.mubr.f32.mxu0 0.0
    %2344 = vmatmul.mubr.f32.gmra.mrb[0].mxu0 %v2268
    %v2345 = vpop.f32.mrb[0].mxu0
    %v2346 = vadd.f32 %v2020, %v2345
    %v2347 = vpop.f32.mrb[0].mxu0
    %2348 = vdwg.mxu0
    %v2349 = vsel %vm1848, %v2100, -inf
    %2350 = vmax.xlane.f32.xlu0 %v2349
    %v2351 = vpop.xlane.xlu0 %2350
    %v2352 = vsel %vm1848, %v2182, -inf
    %2353 = vmax.xlane.f32.xlu0 %v2352
    %v2354 = vpop.xlane.xlu0 %2353
    %v2355 = vsel %vm1848, %v2264, -inf
    %2356 = vmax.xlane.f32.xlu0 %v2355
    %v2357 = vpop.xlane.xlu0 %2356
    %v2358 = vsel %vm1848, %v2346, -inf
    %2359 = vmax.xlane.f32.xlu0 %v2358
    %v2360 = vpop.xlane.xlu0 %2359
    %v2361 = vsub.f32 %v2100, %v2351
    %v2362 = vsub.f32 %v2182, %v2354
    %v2363 = vsub.f32 %v2264, %v2357
    %v2364 = vsub.f32 %v2346, %v2360
    %v2365 = vmul.f32 %v2361, 1.442695
    %v2366 = vpow.pop %v2365
    %v2367 = vmul.f32 %v2362, 1.442695
    %v2368 = vpow.pop %v2367
    %v2369 = vmul.f32 %v2363, 1.442695
    %v2370 = vpow.pop %v2369
    %v2371 = vmul.f32 %v2364, 1.442695
    %v2372 = vpow.pop %v2371
    %v2373 = vsel %vm1848, %v2366, 0.0
    %2374 = vadd.xlane.f32.xlu0 %v2373
    %v2375 = vpop.xlane.xlu0 %2374
    %v2376 = vsel %vm1848, %v2368, 0.0
    %2377 = vadd.xlane.f32.xlu0 %v2376
    %v2378 = vpop.xlane.xlu0 %2377
    %v2379 = vsel %vm1848, %v2370, 0.0
    %2380 = vadd.xlane.f32.xlu0 %v2379
    %v2381 = vpop.xlane.xlu0 %2380
    %v2382 = vsel %vm1848, %v2372, 0.0
    %2383 = vadd.xlane.f32.xlu0 %v2382
    %v2384 = vpop.xlane.xlu0 %2383
    %v2385 = vrcp.pop %v2375
    %v2386 = vrcp.pop %v2378
    %v2387 = vrcp.pop %v2381
    %v2388 = vrcp.pop %v2384
    %v2389 = vmul.f32 %v2366, %v2385
    %v2390 = vmul.f32 %v2368, %v2386
    %v2391 = vmul.f32 %v2370, %v2387
    %v2392 = vmul.f32 %v2372, %v2388
    %v2394 = vsel %vm1848, %v2389, 0
    %vm2396 = vcmask 1043456
    %v2398 = vsel %vm2396, %v1236, 0
    %2400 = vmatprep.subr.mxu0 0.0
    %2401 = vmatpush1.msra.mxu0 %v1226
    %2402 = vmatprep.subr.mxu0 0.0
    %2403 = vmatpush1.msra.mxu0 %v1231
    %2404 = vmatprep.subr.mxu0 0.0
    %2405 = vmatpush1.msra.mxu0 %v2398
    %2406 = vmatprep.subr.mxu0 0.0
    %2407 = vmatpush1.msra.mxu0 0.0
    %2408 = vmatprep.subr.mxu0 0.0
    %2409 = vmatpush1.msra.mxu0 0.0
    %2410 = vmatprep.subr.mxu0 0.0
    %2411 = vmatpush1.msra.mxu0 0.0
    %2412 = vmatprep.subr.mxu0 0.0
    %2413 = vmatpush1.msra.mxu0 0.0
    %2414 = vmatprep.subr.mxu0 0.0
    %2415 = vmatpush1.msra.mxu0 0.0
    %2416 = vmatprep.subr.mxu0 0.0
    %2417 = vmatpush1.msra.mxu0 0.0
    %2418 = vmatprep.subr.mxu0 0.0
    %2419 = vmatpush1.msra.mxu0 0.0
    %2420 = vmatprep.subr.mxu0 0.0
    %2421 = vmatpush1.msra.mxu0 0.0
    %2422 = vmatprep.subr.mxu0 0.0
    %2423 = vmatpush1.msra.mxu0 0.0
    %2424 = vmatprep.subr.mxu0 0.0
    %2425 = vmatpush1.msra.mxu0 0.0
    %2426 = vmatprep.subr.mxu0 0.0
    %2427 = vmatpush1.msra.mxu0 0.0
    %2428 = vmatprep.subr.mxu0 0.0
    %2429 = vmatpush1.msra.mxu0 0.0
    %2430 = vmatprep.subr.mxu0 0.0
    %2431 = vmatpush1.msra.mxu0 0.0
    %2432 = vmatprep.subr.mxu0 0.0
    %2433 = vmatpush1.msra.mxu0 0.0
    %2434 = vmatprep.subr.mxu0 0.0
    %2435 = vmatpush1.msra.mxu0 0.0
    %2436 = vmatprep.subr.mxu0 0.0
    %2437 = vmatpush1.msra.mxu0 0.0
    %2438 = vmatprep.subr.mxu0 0.0
    %2439 = vmatpush1.msra.mxu0 0.0
    %2440 = vmatprep.subr.mxu0 0.0
    %2441 = vmatpush1.msra.mxu0 0.0
    %2442 = vmatprep.subr.mxu0 0.0
    %2443 = vmatpush1.msra.mxu0 0.0
    %2444 = vmatprep.subr.mxu0 0.0
    %2445 = vmatpush1.msra.mxu0 0.0
    %2446 = vmatprep.subr.mxu0 0.0
    %2447 = vmatpush1.msra.mxu0 0.0
    %2448 = vmatprep.subr.mxu0 0.0
    %2449 = vmatpush1.msra.mxu0 0.0
    %2450 = vmatprep.subr.mxu0 0.0
    %2451 = vmatpush1.msra.mxu0 0.0
    %2452 = vmatprep.subr.mxu0 0.0
    %2453 = vmatpush1.msra.mxu0 0.0
    %2454 = vmatprep.subr.mxu0 0.0
    %2455 = vmatpush1.msra.mxu0 0.0
    %2456 = vmatprep.subr.mxu0 0.0
    %2457 = vmatpush1.msra.mxu0 0.0
    %2458 = vmatprep.subr.mxu0 0.0
    %2459 = vmatpush1.msra.mxu0 0.0
    %2460 = vmatprep.subr.mxu0 0.0
    %2461 = vmatpush1.msra.mxu0 0.0
    %2462 = vmatprep.subr.mxu0 0.0
    %2463 = vmatpush1.msra.mxu0 0.0
    %2464 = vmatprep.mubr.f32.mxu0 0.0
    %2465 = vmatmul.mubr.f32.gmra.mrb[0].mxu0 %v2394
    %v2466 = vpop.f32.mrb[0].mxu0
    %v2467 = vadd.f32 0.0, %v2466
    %v2468 = vpop.f32.mrb[0].mxu0
    %2469 = vdwg.mxu0
    %v2471 = vsel %vm1848, %v2390, 0
    %v2474 = vsel %vm2396, %v1316, 0
    %2476 = vmatprep.subr.mxu0 0.0
    %2477 = vmatpush1.msra.mxu0 %v1306
    %2478 = vmatprep.subr.mxu0 0.0
    %2479 = vmatpush1.msra.mxu0 %v1311
    %2480 = vmatprep.subr.mxu0 0.0
    %2481 = vmatpush1.msra.mxu0 %v2474
    %2482 = vmatprep.subr.mxu0 0.0
    %2483 = vmatpush1.msra.mxu0 0.0
    %2484 = vmatprep.subr.mxu0 0.0
    %2485 = vmatpush1.msra.mxu0 0.0
    %2486 = vmatprep.subr.mxu0 0.0
    %2487 = vmatpush1.msra.mxu0 0.0
    %2488 = vmatprep.subr.mxu0 0.0
    %2489 = vmatpush1.msra.mxu0 0.0
    %2490 = vmatprep.subr.mxu0 0.0
    %2491 = vmatpush1.msra.mxu0 0.0
    %2492 = vmatprep.subr.mxu0 0.0
    %2493 = vmatpush1.msra.mxu0 0.0
    %2494 = vmatprep.subr.mxu0 0.0
    %2495 = vmatpush1.msra.mxu0 0.0
    %2496 = vmatprep.subr.mxu0 0.0
    %2497 = vmatpush1.msra.mxu0 0.0
    %2498 = vmatprep.subr.mxu0 0.0
    %2499 = vmatpush1.msra.mxu0 0.0
    %2500 = vmatprep.subr.mxu0 0.0
    %2501 = vmatpush1.msra.mxu0 0.0
    %2502 = vmatprep.subr.mxu0 0.0
    %2503 = vmatpush1.msra.mxu0 0.0
    %2504 = vmatprep.subr.mxu0 0.0
    %2505 = vmatpush1.msra.mxu0 0.0
    %2506 = vmatprep.subr.mxu0 0.0
    %2507 = vmatpush1.msra.mxu0 0.0
    %2508 = vmatprep.subr.mxu0 0.0
    %2509 = vmatpush1.msra.mxu0 0.0
    %2510 = vmatprep.subr.mxu0 0.0
    %2511 = vmatpush1.msra.mxu0 0.0
    %2512 = vmatprep.subr.mxu0 0.0
    %2513 = vmatpush1.msra.mxu0 0.0
    %2514 = vmatprep.subr.mxu0 0.0
    %2515 = vmatpush1.msra.mxu0 0.0
    %2516 = vmatprep.subr.mxu0 0.0
    %2517 = vmatpush1.msra.mxu0 0.0
    %2518 = vmatprep.subr.mxu0 0.0
    %2519 = vmatpush1.msra.mxu0 0.0
    %2520 = vmatprep.subr.mxu0 0.0
    %2521 = vmatpush1.msra.mxu0 0.0
    %2522 = vmatprep.subr.mxu0 0.0
    %2523 = vmatpush1.msra.mxu0 0.0
    %2524 = vmatprep.subr.mxu0 0.0
    %2525 = vmatpush1.msra.mxu0 0.0
    %2526 = vmatprep.subr.mxu0 0.0
    %2527 = vmatpush1.msra.mxu0 0.0
    %2528 = vmatprep.subr.mxu0 0.0
    %2529 = vmatpush1.msra.mxu0 0.0
    %2530 = vmatprep.subr.mxu0 0.0
    %2531 = vmatpush1.msra.mxu0 0.0
    %2532 = vmatprep.subr.mxu0 0.0
    %2533 = vmatpush1.msra.mxu0 0.0
    %2534 = vmatprep.subr.mxu0 0.0
    %2535 = vmatpush1.msra.mxu0 0.0
    %2536 = vmatprep.subr.mxu0 0.0
    %2537 = vmatpush1.msra.mxu0 0.0
    %2538 = vmatprep.subr.mxu0 0.0
    %2539 = vmatpush1.msra.mxu0 0.0
    %2540 = vmatprep.mubr.f32.mxu0 0.0
    %2541 = vmatmul.mubr.f32.gmra.mrb[0].mxu0 %v2471
    %v2542 = vpop.f32.mrb[0].mxu0
    %v2543 = vadd.f32 0.0, %v2542
    %v2544 = vpop.f32.mrb[0].mxu0
    %2545 = vdwg.mxu0
    %v2547 = vsel %vm1848, %v2391, 0
    %v2550 = vsel %vm2396, %v1396, 0
    %2552 = vmatprep.subr.mxu0 0.0
    %2553 = vmatpush1.msra.mxu0 %v1386
    %2554 = vmatprep.subr.mxu0 0.0
    %2555 = vmatpush1.msra.mxu0 %v1391
    %2556 = vmatprep.subr.mxu0 0.0
    %2557 = vmatpush1.msra.mxu0 %v2550
    %2558 = vmatprep.subr.mxu0 0.0
    %2559 = vmatpush1.msra.mxu0 0.0
    %2560 = vmatprep.subr.mxu0 0.0
    %2561 = vmatpush1.msra.mxu0 0.0
    %2562 = vmatprep.subr.mxu0 0.0
    %2563 = vmatpush1.msra.mxu0 0.0
    %2564 = vmatprep.subr.mxu0 0.0
    %2565 = vmatpush1.msra.mxu0 0.0
    %2566 = vmatprep.subr.mxu0 0.0
    %2567 = vmatpush1.msra.mxu0 0.0
    %2568 = vmatprep.subr.mxu0 0.0
    %2569 = vmatpush1.msra.mxu0 0.0
    %2570 = vmatprep.subr.mxu0 0.0
    %2571 = vmatpush1.msra.mxu0 0.0
    %2572 = vmatprep.subr.mxu0 0.0
    %2573 = vmatpush1.msra.mxu0 0.0
    %2574 = vmatprep.subr.mxu0 0.0
    %2575 = vmatpush1.msra.mxu0 0.0
    %2576 = vmatprep.subr.mxu0 0.0
    %2577 = vmatpush1.msra.mxu0 0.0
    %2578 = vmatprep.subr.mxu0 0.0
    %2579 = vmatpush1.msra.mxu0 0.0
    %2580 = vmatprep.subr.mxu0 0.0
    %2581 = vmatpush1.msra.mxu0 0.0
    %2582 = vmatprep.subr.mxu0 0.0
    %2583 = vmatpush1.msra.mxu0 0.0
    %2584 = vmatprep.subr.mxu0 0.0
    %2585 = vmatpush1.msra.mxu0 0.0
    %2586 = vmatprep.subr.mxu0 0.0
    %2587 = vmatpush1.msra.mxu0 0.0
    %2588 = vmatprep.subr.mxu0 0.0
    %2589 = vmatpush1.msra.mxu0 0.0
    %2590 = vmatprep.subr.mxu0 0.0
    %2591 = vmatpush1.msra.mxu0 0.0
    %2592 = vmatprep.subr.mxu0 0.0
    %2593 = vmatpush1.msra.mxu0 0.0
    %2594 = vmatprep.subr.mxu0 0.0
    %2595 = vmatpush1.msra.mxu0 0.0
    %2596 = vmatprep.subr.mxu0 0.0
    %2597 = vmatpush1.msra.mxu0 0.0
    %2598 = vmatprep.subr.mxu0 0.0
    %2599 = vmatpush1.msra.mxu0 0.0
    %2600 = vmatprep.subr.mxu0 0.0
    %2601 = vmatpush1.msra.mxu0 0.0
    %2602 = vmatprep.subr.mxu0 0.0
    %2603 = vmatpush1.msra.mxu0 0.0
    %2604 = vmatprep.subr.mxu0 0.0
    %2605 = vmatpush1.msra.mxu0 0.0
    %2606 = vmatprep.subr.mxu0 0.0
    %2607 = vmatpush1.msra.mxu0 0.0
    %2608 = vmatprep.subr.mxu0 0.0
    %2609 = vmatpush1.msra.mxu0 0.0
    %2610 = vmatprep.subr.mxu0 0.0
    %2611 = vmatpush1.msra.mxu0 0.0
    %2612 = vmatprep.subr.mxu0 0.0
    %2613 = vmatpush1.msra.mxu0 0.0
    %2614 = vmatprep.subr.mxu0 0.0
    %2615 = vmatpush1.msra.mxu0 0.0
    %2616 = vmatprep.mubr.f32.mxu0 0.0
    %2617 = vmatmul.mubr.f32.gmra.mrb[0].mxu0 %v2547
    %v2618 = vpop.f32.mrb[0].mxu0
    %v2619 = vadd.f32 0.0, %v2618
    %v2620 = vpop.f32.mrb[0].mxu0
    %2621 = vdwg.mxu0
    %v2623 = vsel %vm1848, %v2392, 0
    %v2626 = vsel %vm2396, %v1476, 0
    %2628 = vmatprep.subr.mxu0 0.0
    %2629 = vmatpush1.msra.mxu0 %v1466
    %2630 = vmatprep.subr.mxu0 0.0
    %2631 = vmatpush1.msra.mxu0 %v1471
    %2632 = vmatprep.subr.mxu0 0.0
    %2633 = vmatpush1.msra.mxu0 %v2626
    %2634 = vmatprep.subr.mxu0 0.0
    %2635 = vmatpush1.msra.mxu0 0.0
    %2636 = vmatprep.subr.mxu0 0.0
    %2637 = vmatpush1.msra.mxu0 0.0
    %2638 = vmatprep.subr.mxu0 0.0
    %2639 = vmatpush1.msra.mxu0 0.0
    %2640 = vmatprep.subr.mxu0 0.0
    %2641 = vmatpush1.msra.mxu0 0.0
    %2642 = vmatprep.subr.mxu0 0.0
    %2643 = vmatpush1.msra.mxu0 0.0
    %2644 = vmatprep.subr.mxu0 0.0
    %2645 = vmatpush1.msra.mxu0 0.0
    %2646 = vmatprep.subr.mxu0 0.0
    %2647 = vmatpush1.msra.mxu0 0.0
    %2648 = vmatprep.subr.mxu0 0.0
    %2649 = vmatpush1.msra.mxu0 0.0
    %2650 = vmatprep.subr.mxu0 0.0
    %2651 = vmatpush1.msra.mxu0 0.0
    %2652 = vmatprep.subr.mxu0 0.0
    %2653 = vmatpush1.msra.mxu0 0.0
    %2654 = vmatprep.subr.mxu0 0.0
    %2655 = vmatpush1.msra.mxu0 0.0
    %2656 = vmatprep.subr.mxu0 0.0
    %2657 = vmatpush1.msra.mxu0 0.0
    %2658 = vmatprep.subr.mxu0 0.0
    %2659 = vmatpush1.msra.mxu0 0.0
    %2660 = vmatprep.subr.mxu0 0.0
    %2661 = vmatpush1.msra.mxu0 0.0
    %2662 = vmatprep.subr.mxu0 0.0
    %2663 = vmatpush1.msra.mxu0 0.0
    %2664 = vmatprep.subr.mxu0 0.0
    %2665 = vmatpush1.msra.mxu0 0.0
    %2666 = vmatprep.subr.mxu0 0.0
    %2667 = vmatpush1.msra.mxu0 0.0
    %2668 = vmatprep.subr.mxu0 0.0
    %2669 = vmatpush1.msra.mxu0 0.0
    %2670 = vmatprep.subr.mxu0 0.0
    %2671 = vmatpush1.msra.mxu0 0.0
    %2672 = vmatprep.subr.mxu0 0.0
    %2673 = vmatpush1.msra.mxu0 0.0
    %2674 = vmatprep.subr.mxu0 0.0
    %2675 = vmatpush1.msra.mxu0 0.0
    %2676 = vmatprep.subr.mxu0 0.0
    %2677 = vmatpush1.msra.mxu0 0.0
    %2678 = vmatprep.subr.mxu0 0.0
    %2679 = vmatpush1.msra.mxu0 0.0
    %2680 = vmatprep.subr.mxu0 0.0
    %2681 = vmatpush1.msra.mxu0 0.0
    %2682 = vmatprep.subr.mxu0 0.0
    %2683 = vmatpush1.msra.mxu0 0.0
    %2684 = vmatprep.subr.mxu0 0.0
    %2685 = vmatpush1.msra.mxu0 0.0
    %2686 = vmatprep.subr.mxu0 0.0
    %2687 = vmatpush1.msra.mxu0 0.0
    %2688 = vmatprep.subr.mxu0 0.0
    %2689 = vmatpush1.msra.mxu0 0.0
    %2690 = vmatprep.subr.mxu0 0.0
    %2691 = vmatpush1.msra.mxu0 0.0
    %2692 = vmatprep.mubr.f32.mxu0 0.0
    %2693 = vmatmul.mubr.f32.gmra.mrb[0].mxu0 %v2623
    %v2694 = vpop.f32.mrb[0].mxu0
    %v2695 = vadd.f32 0.0, %v2694
    %v2696 = vpop.f32.mrb[0].mxu0
    %2697 = vdwg.mxu0
    %v2699 = vsel %vm1491, %v2467, 0
    %2701 = vmatprep.subr.mxu0 0.0
    %2702 = vmatpush1.msra.mxu0 %v115
    %2703 = vmatprep.subr.mxu0 0.0
    %2704 = vmatpush1.msra.mxu0 0.0
    %2705 = vmatprep.subr.mxu0 0.0
    %2706 = vmatpush1.msra.mxu0 0.0
    %2707 = vmatprep.subr.mxu0 0.0
    %2708 = vmatpush1.msra.mxu0 0.0
    %2709 = vmatprep.subr.mxu0 0.0
    %2710 = vmatpush1.msra.mxu0 0.0
    %2711 = vmatprep.subr.mxu0 0.0
    %2712 = vmatpush1.msra.mxu0 0.0
    %2713 = vmatprep.subr.mxu0 0.0
    %2714 = vmatpush1.msra.mxu0 0.0
    %2715 = vmatprep.subr.mxu0 0.0
    %2716 = vmatpush1.msra.mxu0 0.0
    %2717 = vmatprep.subr.mxu0 0.0
    %2718 = vmatpush1.msra.mxu0 0.0
    %2719 = vmatprep.subr.mxu0 0.0
    %2720 = vmatpush1.msra.mxu0 0.0
    %2721 = vmatprep.subr.mxu0 0.0
    %2722 = vmatpush1.msra.mxu0 0.0
    %2723 = vmatprep.subr.mxu0 0.0
    %2724 = vmatpush1.msra.mxu0 0.0
    %2725 = vmatprep.subr.mxu0 0.0
    %2726 = vmatpush1.msra.mxu0 0.0
    %2727 = vmatprep.subr.mxu0 0.0
    %2728 = vmatpush1.msra.mxu0 0.0
    %2729 = vmatprep.subr.mxu0 0.0
    %2730 = vmatpush1.msra.mxu0 0.0
    %2731 = vmatprep.subr.mxu0 0.0
    %2732 = vmatpush1.msra.mxu0 0.0
    %2733 = vmatprep.subr.mxu0 0.0
    %2734 = vmatpush1.msra.mxu0 0.0
    %2735 = vmatprep.subr.mxu0 0.0
    %2736 = vmatpush1.msra.mxu0 0.0
    %2737 = vmatprep.subr.mxu0 0.0
    %2738 = vmatpush1.msra.mxu0 0.0
    %2739 = vmatprep.subr.mxu0 0.0
    %2740 = vmatpush1.msra.mxu0 0.0
    %2741 = vmatprep.subr.mxu0 0.0
    %2742 = vmatpush1.msra.mxu0 0.0
    %2743 = vmatprep.subr.mxu0 0.0
    %2744 = vmatpush1.msra.mxu0 0.0
    %2745 = vmatprep.subr.mxu0 0.0
    %2746 = vmatpush1.msra.mxu0 0.0
    %2747 = vmatprep.subr.mxu0 0.0
    %2748 = vmatpush1.msra.mxu0 0.0
    %2749 = vmatprep.subr.mxu0 0.0
    %2750 = vmatpush1.msra.mxu0 0.0
    %2751 = vmatprep.subr.mxu0 0.0
    %2752 = vmatpush1.msra.mxu0 0.0
    %2753 = vmatprep.subr.mxu0 0.0
    %2754 = vmatpush1.msra.mxu0 0.0
    %2755 = vmatprep.subr.mxu0 0.0
    %2756 = vmatpush1.msra.mxu0 0.0
    %2757 = vmatprep.subr.mxu0 0.0
    %2758 = vmatpush1.msra.mxu0 0.0
    %2759 = vmatprep.subr.mxu0 0.0
    %2760 = vmatpush1.msra.mxu0 0.0
    %2761 = vmatprep.subr.mxu0 0.0
    %2762 = vmatpush1.msra.mxu0 0.0
    %2763 = vmatprep.subr.mxu0 0.0
    %2764 = vmatpush1.msra.mxu0 0.0
    %2765 = vmatprep.mubr.f32.mxu0 0.0
    %2766 = vmatmul.mubr.f32.gmra.mrb[0].mxu0 %v2699
    %v2767 = vpop.f32.mrb[0].mxu0
    %v2768 = vadd.f32 0.0, %v2767
    %v2769 = vpop.f32.mrb[0].mxu0
    %2770 = vdwg.mxu0
    %v2772 = vsel %vm1491, %v2543, 0
    %2774 = vmatprep.subr.mxu0 0.0
    %2775 = vmatpush1.msra.mxu0 %v116
    %2776 = vmatprep.subr.mxu0 0.0
    %2777 = vmatpush1.msra.mxu0 0.0
    %2778 = vmatprep.subr.mxu0 0.0
    %2779 = vmatpush1.msra.mxu0 0.0
    %2780 = vmatprep.subr.mxu0 0.0
    %2781 = vmatpush1.msra.mxu0 0.0
    %2782 = vmatprep.subr.mxu0 0.0
    %2783 = vmatpush1.msra.mxu0 0.0
    %2784 = vmatprep.subr.mxu0 0.0
    %2785 = vmatpush1.msra.mxu0 0.0
    %2786 = vmatprep.subr.mxu0 0.0
    %2787 = vmatpush1.msra.mxu0 0.0
    %2788 = vmatprep.subr.mxu0 0.0
    %2789 = vmatpush1.msra.mxu0 0.0
    %2790 = vmatprep.subr.mxu0 0.0
    %2791 = vmatpush1.msra.mxu0 0.0
    %2792 = vmatprep.subr.mxu0 0.0
    %2793 = vmatpush1.msra.mxu0 0.0
    %2794 = vmatprep.subr.mxu0 0.0
    %2795 = vmatpush1.msra.mxu0 0.0
    %2796 = vmatprep.subr.mxu0 0.0
    %2797 = vmatpush1.msra.mxu0 0.0
    %2798 = vmatprep.subr.mxu0 0.0
    %2799 = vmatpush1.msra.mxu0 0.0
    %2800 = vmatprep.subr.mxu0 0.0
    %2801 = vmatpush1.msra.mxu0 0.0
    %2802 = vmatprep.subr.mxu0 0.0
    %2803 = vmatpush1.msra.mxu0 0.0
    %2804 = vmatprep.subr.mxu0 0.0
    %2805 = vmatpush1.msra.mxu0 0.0
    %2806 = vmatprep.subr.mxu0 0.0
    %2807 = vmatpush1.msra.mxu0 0.0
    %2808 = vmatprep.subr.mxu0 0.0
    %2809 = vmatpush1.msra.mxu0 0.0
    %2810 = vmatprep.subr.mxu0 0.0
    %2811 = vmatpush1.msra.mxu0 0.0
    %2812 = vmatprep.subr.mxu0 0.0
    %2813 = vmatpush1.msra.mxu0 0.0
    %2814 = vmatprep.subr.mxu0 0.0
    %2815 = vmatpush1.msra.mxu0 0.0
    %2816 = vmatprep.subr.mxu0 0.0
    %2817 = vmatpush1.msra.mxu0 0.0
    %2818 = vmatprep.subr.mxu0 0.0
    %2819 = vmatpush1.msra.mxu0 0.0
    %2820 = vmatprep.subr.mxu0 0.0
    %2821 = vmatpush1.msra.mxu0 0.0
    %2822 = vmatprep.subr.mxu0 0.0
    %2823 = vmatpush1.msra.mxu0 0.0
    %2824 = vmatprep.subr.mxu0 0.0
    %2825 = vmatpush1.msra.mxu0 0.0
    %2826 = vmatprep.subr.mxu0 0.0
    %2827 = vmatpush1.msra.mxu0 0.0
    %2828 = vmatprep.subr.mxu0 0.0
    %2829 = vmatpush1.msra.mxu0 0.0
    %2830 = vmatprep.subr.mxu0 0.0
    %2831 = vmatpush1.msra.mxu0 0.0
    %2832 = vmatprep.subr.mxu0 0.0
    %2833 = vmatpush1.msra.mxu0 0.0
    %2834 = vmatprep.subr.mxu0 0.0
    %2835 = vmatpush1.msra.mxu0 0.0
    %2836 = vmatprep.subr.mxu0 0.0
    %2837 = vmatpush1.msra.mxu0 0.0
    %2838 = vmatprep.mubr.f32.mxu0 0.0
    %2839 = vmatmul.mubr.f32.gmra.mrb[0].mxu0 %v2772
    %v2840 = vpop.f32.mrb[0].mxu0
    %v2841 = vadd.f32 0.0, %v2840
    %v2842 = vpop.f32.mrb[0].mxu0
    %2843 = vdwg.mxu0
    %v2845 = vsel %vm1491, %v2619, 0
    %2847 = vmatprep.subr.mxu0 0.0
    %2848 = vmatpush1.msra.mxu0 %v117
    %2849 = vmatprep.subr.mxu0 0.0
    %2850 = vmatpush1.msra.mxu0 0.0
    %2851 = vmatprep.subr.mxu0 0.0
    %2852 = vmatpush1.msra.mxu0 0.0
    %2853 = vmatprep.subr.mxu0 0.0
    %2854 = vmatpush1.msra.mxu0 0.0
    %2855 = vmatprep.subr.mxu0 0.0
    %2856 = vmatpush1.msra.mxu0 0.0
    %2857 = vmatprep.subr.mxu0 0.0
    %2858 = vmatpush1.msra.mxu0 0.0
    %2859 = vmatprep.subr.mxu0 0.0
    %2860 = vmatpush1.msra.mxu0 0.0
    %2861 = vmatprep.subr.mxu0 0.0
    %2862 = vmatpush1.msra.mxu0 0.0
    %2863 = vmatprep.subr.mxu0 0.0
    %2864 = vmatpush1.msra.mxu0 0.0
    %2865 = vmatprep.subr.mxu0 0.0
    %2866 = vmatpush1.msra.mxu0 0.0
    %2867 = vmatprep.subr.mxu0 0.0
    %2868 = vmatpush1.msra.mxu0 0.0
    %2869 = vmatprep.subr.mxu0 0.0
    %2870 = vmatpush1.msra.mxu0 0.0
    %2871 = vmatprep.subr.mxu0 0.0
    %2872 = vmatpush1.msra.mxu0 0.0
    %2873 = vmatprep.subr.mxu0 0.0
    %2874 = vmatpush1.msra.mxu0 0.0
    %2875 = vmatprep.subr.mxu0 0.0
    %2876 = vmatpush1.msra.mxu0 0.0
    %2877 = vmatprep.subr.mxu0 0.0
    %2878 = vmatpush1.msra.mxu0 0.0
    %2879 = vmatprep.subr.mxu0 0.0
    %2880 = vmatpush1.msra.mxu0 0.0
    %2881 = vmatprep.subr.mxu0 0.0
    %2882 = vmatpush1.msra.mxu0 0.0
    %2883 = vmatprep.subr.mxu0 0.0
    %2884 = vmatpush1.msra.mxu0 0.0
    %2885 = vmatprep.subr.mxu0 0.0
    %2886 = vmatpush1.msra.mxu0 0.0
    %2887 = vmatprep.subr.mxu0 0.0
    %2888 = vmatpush1.msra.mxu0 0.0
    %2889 = vmatprep.subr.mxu0 0.0
    %2890 = vmatpush1.msra.mxu0 0.0
    %2891 = vmatprep.subr.mxu0 0.0
    %2892 = vmatpush1.msra.mxu0 0.0
    %2893 = vmatprep.subr.mxu0 0.0
    %2894 = vmatpush1.msra.mxu0 0.0
    %2895 = vmatprep.subr.mxu0 0.0
    %2896 = vmatpush1.msra.mxu0 0.0
    %2897 = vmatprep.subr.mxu0 0.0
    %2898 = vmatpush1.msra.mxu0 0.0
    %2899 = vmatprep.subr.mxu0 0.0
    %2900 = vmatpush1.msra.mxu0 0.0
    %2901 = vmatprep.subr.mxu0 0.0
    %2902 = vmatpush1.msra.mxu0 0.0
    %2903 = vmatprep.subr.mxu0 0.0
    %2904 = vmatpush1.msra.mxu0 0.0
    %2905 = vmatprep.subr.mxu0 0.0
    %2906 = vmatpush1.msra.mxu0 0.0
    %2907 = vmatprep.subr.mxu0 0.0
    %2908 = vmatpush1.msra.mxu0 0.0
    %2909 = vmatprep.subr.mxu0 0.0
    %2910 = vmatpush1.msra.mxu0 0.0
    %2911 = vmatprep.mubr.f32.mxu0 0.0
    %2912 = vmatmul.mubr.f32.gmra.mrb[0].mxu0 %v2845
    %v2913 = vpop.f32.mrb[0].mxu0
    %v2914 = vadd.f32 0.0, %v2913
    %v2915 = vpop.f32.mrb[0].mxu0
    %2916 = vdwg.mxu0
    %v2918 = vsel %vm1491, %v2695, 0
    %2920 = vmatprep.subr.mxu0 0.0
    %2921 = vmatpush1.msra.mxu0 %v118
    %2922 = vmatprep.subr.mxu0 0.0
    %2923 = vmatpush1.msra.mxu0 0.0
    %2924 = vmatprep.subr.mxu0 0.0
    %2925 = vmatpush1.msra.mxu0 0.0
    %2926 = vmatprep.subr.mxu0 0.0
    %2927 = vmatpush1.msra.mxu0 0.0
    %2928 = vmatprep.subr.mxu0 0.0
    %2929 = vmatpush1.msra.mxu0 0.0
    %2930 = vmatprep.subr.mxu0 0.0
    %2931 = vmatpush1.msra.mxu0 0.0
    %2932 = vmatprep.subr.mxu0 0.0
    %2933 = vmatpush1.msra.mxu0 0.0
    %2934 = vmatprep.subr.mxu0 0.0
    %2935 = vmatpush1.msra.mxu0 0.0
    %2936 = vmatprep.subr.mxu0 0.0
    %2937 = vmatpush1.msra.mxu0 0.0
    %2938 = vmatprep.subr.mxu0 0.0
    %2939 = vmatpush1.msra.mxu0 0.0
    %2940 = vmatprep.subr.mxu0 0.0
    %2941 = vmatpush1.msra.mxu0 0.0
    %2942 = vmatprep.subr.mxu0 0.0
    %2943 = vmatpush1.msra.mxu0 0.0
    %2944 = vmatprep.subr.mxu0 0.0
    %2945 = vmatpush1.msra.mxu0 0.0
    %2946 = vmatprep.subr.mxu0 0.0
    %2947 = vmatpush1.msra.mxu0 0.0
    %2948 = vmatprep.subr.mxu0 0.0
    %2949 = vmatpush1.msra.mxu0 0.0
    %2950 = vmatprep.subr.mxu0 0.0
    %2951 = vmatpush1.msra.mxu0 0.0
    %2952 = vmatprep.subr.mxu0 0.0
    %2953 = vmatpush1.msra.mxu0 0.0
    %2954 = vmatprep.subr.mxu0 0.0
    %2955 = vmatpush1.msra.mxu0 0.0
    %2956 = vmatprep.subr.mxu0 0.0
    %2957 = vmatpush1.msra.mxu0 0.0
    %2958 = vmatprep.subr.mxu0 0.0
    %2959 = vmatpush1.msra.mxu0 0.0
    %2960 = vmatprep.subr.mxu0 0.0
    %2961 = vmatpush1.msra.mxu0 0.0
    %2962 = vmatprep.subr.mxu0 0.0
    %2963 = vmatpush1.msra.mxu0 0.0
    %2964 = vmatprep.subr.mxu0 0.0
    %2965 = vmatpush1.msra.mxu0 0.0
    %2966 = vmatprep.subr.mxu0 0.0
    %2967 = vmatpush1.msra.mxu0 0.0
    %2968 = vmatprep.subr.mxu0 0.0
    %2969 = vmatpush1.msra.mxu0 0.0
    %2970 = vmatprep.subr.mxu0 0.0
    %2971 = vmatpush1.msra.mxu0 0.0
    %2972 = vmatprep.subr.mxu0 0.0
    %2973 = vmatpush1.msra.mxu0 0.0
    %2974 = vmatprep.subr.mxu0 0.0
    %2975 = vmatpush1.msra.mxu0 0.0
    %2976 = vmatprep.subr.mxu0 0.0
    %2977 = vmatpush1.msra.mxu0 0.0
    %2978 = vmatprep.subr.mxu0 0.0
    %2979 = vmatpush1.msra.mxu0 0.0
    %2980 = vmatprep.subr.mxu0 0.0
    %2981 = vmatpush1.msra.mxu0 0.0
    %2982 = vmatprep.subr.mxu0 0.0
    %2983 = vmatpush1.msra.mxu0 0.0
    %2984 = vmatprep.mubr.f32.mxu0 0.0
    %2985 = vmatmul.mubr.f32.gmra.mrb[0].mxu0 %v2918
    %v2986 = vpop.f32.mrb[0].mxu0
    %v2987 = vadd.f32 0.0, %v2986
    %v2988 = vpop.f32.mrb[0].mxu0
    %2989 = vdwg.mxu0
    %v2990 = vsel %vm198, %v2768, 0.0
    %v2991 = vsel %vm198, %v2841, 0.0
    %v2992 = vadd.f32 %v2990, %v2991
    %v2993 = vsel %vm198, %v2914, 0.0
    %v2994 = vadd.f32 %v2992, %v2993
    %v2995 = vsel %vm198, %v2987, 0.0
    %v2996 = vadd.f32 %v2994, %v2995
    %v2997 = vadd.f32 %v543, %v2996
    %v2998 = vsel %vm198, %v2997, 0.0
    %2999 = vadd.xlane.f32.xlu0 %v2998
    %v3000 = vpop.xlane.xlu0 %2999
    %v3001 = vrcp.pop 32.0
    %v3002 = vmul.f32 %v3000, %v3001
    %v3003 = vsub.f32 %v2997, %v3002
    %v3004 = vmul.f32 %v3003, %v3003
    %v3005 = vsel %vm198, %v3004, 0.0
    %3006 = vadd.xlane.f32.xlu0 %v3005
    %v3007 = vpop.xlane.xlu0 %3006
    %v3008 = vmul.f32 %v3007, %v3001
    %v3009 = vadd.f32 %v3008, 1e-05
    %v3010 = vrsqrt.pop %v3009
    %v3011 = vmul.f32 %v3003, %v3010
    %v3012 = vlaneseq
    %v3013 = vshrl.u32 %v3012, 7
    %v3014 = vsub.s32 0, %v3013
    %v3015 = vrot.slane %v45, %v3014
    %v3016 = vmul.f32 %v3011, %v3015
    %v3017 = vlaneseq
    %v3018 = vshrl.u32 %v3017, 7
    %v3019 = vsub.s32 0, %v3018
    %v3020 = vrot.slane %v46, %v3019
    %v3021 = vadd.f32 %v3016, %v3020
    %v3022 = vlaneseq
    %v3023 = vshrl.u32 %v3022, 7
    %v3024 = vsub.s32 0, %v3023
    %v3025 = vrot.slane %v47, %v3024
    %v3027 = vsel %vm198, %v3021, 0
    %3029 = vmatprep.subr.mxu0 0.0
    %3030 = vmatpush1.msra.mxu0 %v119
    %3031 = vmatprep.subr.mxu0 0.0
    %3032 = vmatpush1.msra.mxu0 %v120
    %3033 = vmatprep.subr.mxu0 0.0
    %3034 = vmatpush1.msra.mxu0 %v121
    %3035 = vmatprep.subr.mxu0 0.0
    %3036 = vmatpush1.msra.mxu0 %v122
    %3037 = vmatprep.subr.mxu0 0.0
    %3038 = vmatpush1.msra.mxu0 0.0
    %3039 = vmatprep.subr.mxu0 0.0
    %3040 = vmatpush1.msra.mxu0 0.0
    %3041 = vmatprep.subr.mxu0 0.0
    %3042 = vmatpush1.msra.mxu0 0.0
    %3043 = vmatprep.subr.mxu0 0.0
    %3044 = vmatpush1.msra.mxu0 0.0
    %3045 = vmatprep.subr.mxu0 0.0
    %3046 = vmatpush1.msra.mxu0 0.0
    %3047 = vmatprep.subr.mxu0 0.0
    %3048 = vmatpush1.msra.mxu0 0.0
    %3049 = vmatprep.subr.mxu0 0.0
    %3050 = vmatpush1.msra.mxu0 0.0
    %3051 = vmatprep.subr.mxu0 0.0
    %3052 = vmatpush1.msra.mxu0 0.0
    %3053 = vmatprep.subr.mxu0 0.0
    %3054 = vmatpush1.msra.mxu0 0.0
    %3055 = vmatprep.subr.mxu0 0.0
    %3056 = vmatpush1.msra.mxu0 0.0
    %3057 = vmatprep.subr.mxu0 0.0
    %3058 = vmatpush1.msra.mxu0 0.0
    %3059 = vmatprep.subr.mxu0 0.0
    %3060 = vmatpush1.msra.mxu0 0.0
    %3061 = vmatprep.subr.mxu0 0.0
    %3062 = vmatpush1.msra.mxu0 0.0
    %3063 = vmatprep.subr.mxu0 0.0
    %3064 = vmatpush1.msra.mxu0 0.0
    %3065 = vmatprep.subr.mxu0 0.0
    %3066 = vmatpush1.msra.mxu0 0.0
    %3067 = vmatprep.subr.mxu0 0.0
    %3068 = vmatpush1.msra.mxu0 0.0
    %3069 = vmatprep.subr.mxu0 0.0
    %3070 = vmatpush1.msra.mxu0 0.0
    %3071 = vmatprep.subr.mxu0 0.0
    %3072 = vmatpush1.msra.mxu0 0.0
    %3073 = vmatprep.subr.mxu0 0.0
    %3074 = vmatpush1.msra.mxu0 0.0
    %3075 = vmatprep.subr.mxu0 0.0
    %3076 = vmatpush1.msra.mxu0 0.0
    %3077 = vmatprep.subr.mxu0 0.0
    %3078 = vmatpush1.msra.mxu0 0.0
    %3079 = vmatprep.subr.mxu0 0.0
    %3080 = vmatpush1.msra.mxu0 0.0
    %3081 = vmatprep.subr.mxu0 0.0
    %3082 = vmatpush1.msra.mxu0 0.0
    %3083 = vmatprep.subr.mxu0 0.0
    %3084 = vmatpush1.msra.mxu0 0.0
    %3085 = vmatprep.subr.mxu0 0.0
    %3086 = vmatpush1.msra.mxu0 0.0
    %3087 = vmatprep.subr.mxu0 0.0
    %3088 = vmatpush1.msra.mxu0 0.0
    %3089 = vmatprep.subr.mxu0 0.0
    %3090 = vmatpush1.msra.mxu0 0.0
    %3091 = vmatprep.subr.mxu0 0.0
    %3092 = vmatpush1.msra.mxu0 0.0
    %3093 = vmatprep.mubr.f32.mxu0 0.0
    %3094 = vmatmul.mubr.f32.gmra.mrb[0].mxu0 %v3027
    %v3095 = vpop.f32.mrb[0].mxu0
    %v3096 = vadd.f32 %v3025, %v3095
    %v3097 = vpop.f32.mrb[0].mxu0
    %3098 = vdwg.mxu0
    %v3099 = vmax.f32 %v3096, 0.0
    %v3100 = vlaneseq
    %v3101 = vshrl.u32 %v3100, 7
    %v3102 = vsub.s32 0, %v3101
    %v3103 = vrot.slane %v48, %v3102
    %vm3104 = vcmask 523264
    %v3106 = vsel %vm3104, %v3099, 0
    %3108 = vmatprep.subr.mxu0 0.0
    %3109 = vmatpush1.msra.mxu0 %v123
    %3110 = vmatprep.subr.mxu0 0.0
    %3111 = vmatpush1.msra.mxu0 %v124
    %3112 = vmatprep.subr.mxu0 0.0
    %3113 = vmatpush1.msra.mxu0 %v125
    %3114 = vmatprep.subr.mxu0 0.0
    %3115 = vmatpush1.msra.mxu0 %v126
    %3116 = vmatprep.subr.mxu0 0.0
    %3117 = vmatpush1.msra.mxu0 %v127
    %3118 = vmatprep.subr.mxu0 0.0
    %3119 = vmatpush1.msra.mxu0 %v128
    %3120 = vmatprep.subr.mxu0 0.0
    %3121 = vmatpush1.msra.mxu0 %v129
    %3122 = vmatprep.subr.mxu0 0.0
    %3123 = vmatpush1.msra.mxu0 %v130
    %3124 = vmatprep.subr.mxu0 0.0
    %3125 = vmatpush1.msra.mxu0 0.0
    %3126 = vmatprep.subr.mxu0 0.0
    %3127 = vmatpush1.msra.mxu0 0.0
    %3128 = vmatprep.subr.mxu0 0.0
    %3129 = vmatpush1.msra.mxu0 0.0
    %3130 = vmatprep.subr.mxu0 0.0
    %3131 = vmatpush1.msra.mxu0 0.0
    %3132 = vmatprep.subr.mxu0 0.0
    %3133 = vmatpush1.msra.mxu0 0.0
    %3134 = vmatprep.subr.mxu0 0.0
    %3135 = vmatpush1.msra.mxu0 0.0
    %3136 = vmatprep.subr.mxu0 0.0
    %3137 = vmatpush1.msra.mxu0 0.0
    %3138 = vmatprep.subr.mxu0 0.0
    %3139 = vmatpush1.msra.mxu0 0.0
    %3140 = vmatprep.subr.mxu0 0.0
    %3141 = vmatpush1.msra.mxu0 0.0
    %3142 = vmatprep.subr.mxu0 0.0
    %3143 = vmatpush1.msra.mxu0 0.0
    %3144 = vmatprep.subr.mxu0 0.0
    %3145 = vmatpush1.msra.mxu0 0.0
    %3146 = vmatprep.subr.mxu0 0.0
    %3147 = vmatpush1.msra.mxu0 0.0
    %3148 = vmatprep.subr.mxu0 0.0
    %3149 = vmatpush1.msra.mxu0 0.0
    %3150 = vmatprep.subr.mxu0 0.0
    %3151 = vmatpush1.msra.mxu0 0.0
    %3152 = vmatprep.subr.mxu0 0.0
    %3153 = vmatpush1.msra.mxu0 0.0
    %3154 = vmatprep.subr.mxu0 0.0
    %3155 = vmatpush1.msra.mxu0 0.0
    %3156 = vmatprep.subr.mxu0 0.0
    %3157 = vmatpush1.msra.mxu0 0.0
    %3158 = vmatprep.subr.mxu0 0.0
    %3159 = vmatpush1.msra.mxu0 0.0
    %3160 = vmatprep.subr.mxu0 0.0
    %3161 = vmatpush1.msra.mxu0 0.0
    %3162 = vmatprep.subr.mxu0 0.0
    %3163 = vmatpush1.msra.mxu0 0.0
    %3164 = vmatprep.subr.mxu0 0.0
    %3165 = vmatpush1.msra.mxu0 0.0
    %3166 = vmatprep.subr.mxu0 0.0
    %3167 = vmatpush1.msra.mxu0 0.0
    %3168 = vmatprep.subr.mxu0 0.0
    %3169 = vmatpush1.msra.mxu0 0.0
    %3170 = vmatprep.subr.mxu0 0.0
    %3171 = vmatpush1.msra.mxu0 0.0
    %3172 = vmatprep.mubr.f32.mxu0 0.0
    %3173 = vmatmul.mubr.f32.gmra.mrb[0].mxu0 %v3106
    %v3174 = vpop.f32.mrb[0].mxu0
    %v3175 = vadd.f32 %v3103, %v3174
    %v3176 = vpop.f32.mrb[0].mxu0
    %3177 = vdwg.mxu0
    %v3178 = vadd.f32 %v3021, %v3175
    %v3179 = vsel %vm198, %v3178, 0.0
    %3180 = vadd.xlane.f32.xlu0 %v3179
    %v3181 = vpop.xlane.xlu0 %3180
    %v3182 = vmul.f32 %v3181, %v3001
    %v3183 = vsub.f32 %v3178, %v3182
    %v3184 = vmul.f32 %v3183, %v3183
    %v3185 = vsel %vm198, %v3184, 0.0
    %3186 = vadd.xlane.f32.xlu0 %v3185
    %v3187 = vpop.xlane.xlu0 %3186
    %v3188 = vmul.f32 %v3187, %v3001
    %v3189 = vadd.f32 %v3188, 1e-05
    %v3190 = vrsqrt.pop %v3189
    %v3191 = vmul.f32 %v3183, %v3190
    %v3192 = vlaneseq
    %v3193 = vshrl.u32 %v3192, 7
    %v3194 = vsub.s32 0, %v3193
    %v3195 = vrot.slane %v49, %v3194
    %v3196 = vmul.f32 %v3191, %v3195
    %v3197 = vlaneseq
    %v3198 = vshrl.u32 %v3197, 7
    %v3199 = vsub.s32 0, %v3198
    %v3200 = vrot.slane %v50, %v3199
    %v3201 = vadd.f32 %v3196, %v3200
    %3202 = vst.msk [vmem:[#allocation2] sm:$0xff] %vm198, %v3201
    %s3203 = scalar_lea.vmem %s0, 8
    %v3204 = vld [vmem:[%s3203] sm:$0xff]
    %s3205 = scalar_lea.vmem %s1, 24
    %v3206 = vld [vmem:[%s3205] sm:$0xff]
    %v3207 = vld [vmem:[%s3205 + $0x8] sm:$0xff]
    %v3208 = vld [vmem:[%s3205 + $0x10] sm:$0xf]
    %v3210 = vsel %vm198, %v3204, 0
    %3212 = vmatprep.subr.mxu0 0.0
    %3213 = vmatpush1.msra.mxu0 %v51
    %3214 = vmatprep.subr.mxu0 0.0
    %3215 = vmatpush1.msra.mxu0 %v52
    %3216 = vmatprep.subr.mxu0 0.0
    %3217 = vmatpush1.msra.mxu0 %v53
    %3218 = vmatprep.subr.mxu0 0.0
    %3219 = vmatpush1.msra.mxu0 %v54
    %3220 = vmatprep.subr.mxu0 0.0
    %3221 = vmatpush1.msra.mxu0 0.0
    %3222 = vmatprep.subr.mxu0 0.0
    %3223 = vmatpush1.msra.mxu0 0.0
    %3224 = vmatprep.subr.mxu0 0.0
    %3225 = vmatpush1.msra.mxu0 0.0
    %3226 = vmatprep.subr.mxu0 0.0
    %3227 = vmatpush1.msra.mxu0 0.0
    %3228 = vmatprep.subr.mxu0 0.0
    %3229 = vmatpush1.msra.mxu0 0.0
    %3230 = vmatprep.subr.mxu0 0.0
    %3231 = vmatpush1.msra.mxu0 0.0
    %3232 = vmatprep.subr.mxu0 0.0
    %3233 = vmatpush1.msra.mxu0 0.0
    %3234 = vmatprep.subr.mxu0 0.0
    %3235 = vmatpush1.msra.mxu0 0.0
    %3236 = vmatprep.subr.mxu0 0.0
    %3237 = vmatpush1.msra.mxu0 0.0
    %3238 = vmatprep.subr.mxu0 0.0
    %3239 = vmatpush1.msra.mxu0 0.0
    %3240 = vmatprep.subr.mxu0 0.0
    %3241 = vmatpush1.msra.mxu0 0.0
    %3242 = vmatprep.subr.mxu0 0.0
    %3243 = vmatpush1.msra.mxu0 0.0
    %3244 = vmatprep.subr.mxu0 0.0
    %3245 = vmatpush1.msra.mxu0 0.0
    %3246 = vmatprep.subr.mxu0 0.0
    %3247 = vmatpush1.msra.mxu0 0.0
    %3248 = vmatprep.subr.mxu0 0.0
    %3249 = vmatpush1.msra.mxu0 0.0
    %3250 = vmatprep.subr.mxu0 0.0
    %3251 = vmatpush1.msra.mxu0 0.0
    %3252 = vmatprep.subr.mxu0 0.0
    %3253 = vmatpush1.msra.mxu0 0.0
    %3254 = vmatprep.subr.mxu0 0.0
    %3255 = vmatpush1.msra.mxu0 0.0
    %3256 = vmatprep.subr.mxu0 0.0
    %3257 = vmatpush1.msra.mxu0 0.0
    %3258 = vmatprep.subr.mxu0 0.0
    %3259 = vmatpush1.msra.mxu0 0.0
    %3260 = vmatprep.subr.mxu0 0.0
    %3261 = vmatpush1.msra.mxu0 0.0
    %3262 = vmatprep.subr.mxu0 0.0
    %3263 = vmatpush1.msra.mxu0 0.0
    %3264 = vmatprep.subr.mxu0 0.0
    %3265 = vmatpush1.msra.mxu0 0.0
    %3266 = vmatprep.subr.mxu0 0.0
    %3267 = vmatpush1.msra.mxu0 0.0
    %3268 = vmatprep.subr.mxu0 0.0
    %3269 = vmatpush1.msra.mxu0 0.0
    %3270 = vmatprep.subr.mxu0 0.0
    %3271 = vmatpush1.msra.mxu0 0.0
    %3272 = vmatprep.subr.mxu0 0.0
    %3273 = vmatpush1.msra.mxu0 0.0
    %3274 = vmatprep.subr.mxu0 0.0
    %3275 = vmatpush1.msra.mxu0 0.0
    %3276 = vmatprep.mubr.f32.mxu0 0.0
    %3277 = vmatmul.mubr.f32.gmra.mrb[0].mxu0 %v3210
    %v3278 = vpop.f32.mrb[0].mxu0
    %v3279 = vadd.f32 0.0, %v3278
    %v3280 = vpop.f32.mrb[0].mxu0
    %3281 = vdwg.mxu0
    %3282 = vmatprep.subr.mxu0 0.0
    %3283 = vmatpush1.msra.mxu0 %v55
    %3284 = vmatprep.subr.mxu0 0.0
    %3285 = vmatpush1.msra.mxu0 %v56
    %3286 = vmatprep.subr.mxu0 0.0
    %3287 = vmatpush1.msra.mxu0 %v57
    %3288 = vmatprep.subr.mxu0 0.0
    %3289 = vmatpush1.msra.mxu0 %v58
    %3290 = vmatprep.subr.mxu0 0.0
    %3291 = vmatpush1.msra.mxu0 0.0
    %3292 = vmatprep.subr.mxu0 0.0
    %3293 = vmatpush1.msra.mxu0 0.0
    %3294 = vmatprep.subr.mxu0 0.0
    %3295 = vmatpush1.msra.mxu0 0.0
    %3296 = vmatprep.subr.mxu0 0.0
    %3297 = vmatpush1.msra.mxu0 0.0
    %3298 = vmatprep.subr.mxu0 0.0
    %3299 = vmatpush1.msra.mxu0 0.0
    %3300 = vmatprep.subr.mxu0 0.0
    %3301 = vmatpush1.msra.mxu0 0.0
    %3302 = vmatprep.subr.mxu0 0.0
    %3303 = vmatpush1.msra.mxu0 0.0
    %3304 = vmatprep.subr.mxu0 0.0
    %3305 = vmatpush1.msra.mxu0 0.0
    %3306 = vmatprep.subr.mxu0 0.0
    %3307 = vmatpush1.msra.mxu0 0.0
    %3308 = vmatprep.subr.mxu0 0.0
    %3309 = vmatpush1.msra.mxu0 0.0
    %3310 = vmatprep.subr.mxu0 0.0
    %3311 = vmatpush1.msra.mxu0 0.0
    %3312 = vmatprep.subr.mxu0 0.0
    %3313 = vmatpush1.msra.mxu0 0.0
    %3314 = vmatprep.subr.mxu0 0.0
    %3315 = vmatpush1.msra.mxu0 0.0
    %3316 = vmatprep.subr.mxu0 0.0
    %3317 = vmatpush1.msra.mxu0 0.0
    %3318 = vmatprep.subr.mxu0 0.0
    %3319 = vmatpush1.msra.mxu0 0.0
    %3320 = vmatprep.subr.mxu0 0.0
    %3321 = vmatpush1.msra.mxu0 0.0
    %3322 = vmatprep.subr.mxu0 0.0
    %3323 = vmatpush1.msra.mxu0 0.0
    %3324 = vmatprep.subr.mxu0 0.0
    %3325 = vmatpush1.msra.mxu0 0.0
    %3326 = vmatprep.subr.mxu0 0.0
    %3327 = vmatpush1.msra.mxu0 0.0
    %3328 = vmatprep.subr.mxu0 0.0
    %3329 = vmatpush1.msra.mxu0 0.0
    %3330 = vmatprep.subr.mxu0 0.0
    %3331 = vmatpush1.msra.mxu0 0.0
    %3332 = vmatprep.subr.mxu0 0.0
    %3333 = vmatpush1.msra.mxu0 0.0
    %3334 = vmatprep.subr.mxu0 0.0
    %3335 = vmatpush1.msra.mxu0 0.0
    %3336 = vmatprep.subr.mxu0 0.0
    %3337 = vmatpush1.msra.mxu0 0.0
    %3338 = vmatprep.subr.mxu0 0.0
    %3339 = vmatpush1.msra.mxu0 0.0
    %3340 = vmatprep.subr.mxu0 0.0
    %3341 = vmatpush1.msra.mxu0 0.0
    %3342 = vmatprep.subr.mxu0 0.0
    %3343 = vmatpush1.msra.mxu0 0.0
    %3344 = vmatprep.subr.mxu0 0.0
    %3345 = vmatpush1.msra.mxu0 0.0
    %3346 = vmatprep.mubr.f32.mxu0 0.0
    %3347 = vmatmul.mubr.f32.gmra.mrb[0].mxu0 %v3210
    %v3348 = vpop.f32.mrb[0].mxu0
    %v3349 = vadd.f32 0.0, %v3348
    %v3350 = vpop.f32.mrb[0].mxu0
    %3351 = vdwg.mxu0
    %3352 = vmatprep.subr.mxu0 0.0
    %3353 = vmatpush1.msra.mxu0 %v59
    %3354 = vmatprep.subr.mxu0 0.0
    %3355 = vmatpush1.msra.mxu0 %v60
    %3356 = vmatprep.subr.mxu0 0.0
    %3357 = vmatpush1.msra.mxu0 %v61
    %3358 = vmatprep.subr.mxu0 0.0
    %3359 = vmatpush1.msra.mxu0 %v62
    %3360 = vmatprep.subr.mxu0 0.0
    %3361 = vmatpush1.msra.mxu0 0.0
    %3362 = vmatprep.subr.mxu0 0.0
    %3363 = vmatpush1.msra.mxu0 0.0
    %3364 = vmatprep.subr.mxu0 0.0
    %3365 = vmatpush1.msra.mxu0 0.0
    %3366 = vmatprep.subr.mxu0 0.0
    %3367 = vmatpush1.msra.mxu0 0.0
    %3368 = vmatprep.subr.mxu0 0.0
    %3369 = vmatpush1.msra.mxu0 0.0
    %3370 = vmatprep.subr.mxu0 0.0
    %3371 = vmatpush1.msra.mxu0 0.0
    %3372 = vmatprep.subr.mxu0 0.0
    %3373 = vmatpush1.msra.mxu0 0.0
    %3374 = vmatprep.subr.mxu0 0.0
    %3375 = vmatpush1.msra.mxu0 0.0
    %3376 = vmatprep.subr.mxu0 0.0
    %3377 = vmatpush1.msra.mxu0 0.0
    %3378 = vmatprep.subr.mxu0 0.0
    %3379 = vmatpush1.msra.mxu0 0.0
    %3380 = vmatprep.subr.mxu0 0.0
    %3381 = vmatpush1.msra.mxu0 0.0
    %3382 = vmatprep.subr.mxu0 0.0
    %3383 = vmatpush1.msra.mxu0 0.0
    %3384 = vmatprep.subr.mxu0 0.0
    %3385 = vmatpush1.msra.mxu0 0.0
    %3386 = vmatprep.subr.mxu0 0.0
    %3387 = vmatpush1.msra.mxu0 0.0
    %3388 = vmatprep.subr.mxu0 0.0
    %3389 = vmatpush1.msra.mxu0 0.0
    %3390 = vmatprep.subr.mxu0 0.0
    %3391 = vmatpush1.msra.mxu0 0.0
    %3392 = vmatprep.subr.mxu0 0.0
    %3393 = vmatpush1.msra.mxu0 0.0
    %3394 = vmatprep.subr.mxu0 0.0
    %3395 = vmatpush1.msra.mxu0 0.0
    %3396 = vmatprep.subr.mxu0 0.0
    %3397 = vmatpush1.msra.mxu0 0.0
    %3398 = vmatprep.subr.mxu0 0.0
    %3399 = vmatpush1.msra.mxu0 0.0
    %3400 = vmatprep.subr.mxu0 0.0
    %3401 = vmatpush1.msra.mxu0 0.0
    %3402 = vmatprep.subr.mxu0 0.0
    %3403 = vmatpush1.msra.mxu0 0.0
    %3404 = vmatprep.subr.mxu0 0.0
    %3405 = vmatpush1.msra.mxu0 0.0
    %3406 = vmatprep.subr.mxu0 0.0
    %3407 = vmatpush1.msra.mxu0 0.0
    %3408 = vmatprep.subr.mxu0 0.0
    %3409 = vmatpush1.msra.mxu0 0.0
    %3410 = vmatprep.subr.mxu0 0.0
    %3411 = vmatpush1.msra.mxu0 0.0
    %3412 = vmatprep.subr.mxu0 0.0
    %3413 = vmatpush1.msra.mxu0 0.0
    %3414 = vmatprep.subr.mxu0 0.0
    %3415 = vmatpush1.msra.mxu0 0.0
    %3416 = vmatprep.mubr.f32.mxu0 0.0
    %3417 = vmatmul.mubr.f32.gmra.mrb[0].mxu0 %v3210
    %v3418 = vpop.f32.mrb[0].mxu0
    %v3419 = vadd.f32 0.0, %v3418
    %v3420 = vpop.f32.mrb[0].mxu0
    %3421 = vdwg.mxu0
    %3422 = vmatprep.subr.mxu0 0.0
    %3423 = vmatpush1.msra.mxu0 %v63
    %3424 = vmatprep.subr.mxu0 0.0
    %3425 = vmatpush1.msra.mxu0 %v64
    %3426 = vmatprep.subr.mxu0 0.0
    %3427 = vmatpush1.msra.mxu0 %v65
    %3428 = vmatprep.subr.mxu0 0.0
    %3429 = vmatpush1.msra.mxu0 %v66
    %3430 = vmatprep.subr.mxu0 0.0
    %3431 = vmatpush1.msra.mxu0 0.0
    %3432 = vmatprep.subr.mxu0 0.0
    %3433 = vmatpush1.msra.mxu0 0.0
    %3434 = vmatprep.subr.mxu0 0.0
    %3435 = vmatpush1.msra.mxu0 0.0
    %3436 = vmatprep.subr.mxu0 0.0
    %3437 = vmatpush1.msra.mxu0 0.0
    %3438 = vmatprep.subr.mxu0 0.0
    %3439 = vmatpush1.msra.mxu0 0.0
    %3440 = vmatprep.subr.mxu0 0.0
    %3441 = vmatpush1.msra.mxu0 0.0
    %3442 = vmatprep.subr.mxu0 0.0
    %3443 = vmatpush1.msra.mxu0 0.0
    %3444 = vmatprep.subr.mxu0 0.0
    %3445 = vmatpush1.msra.mxu0 0.0
    %3446 = vmatprep.subr.mxu0 0.0
    %3447 = vmatpush1.msra.mxu0 0.0
    %3448 = vmatprep.subr.mxu0 0.0
    %3449 = vmatpush1.msra.mxu0 0.0
    %3450 = vmatprep.subr.mxu0 0.0
    %3451 = vmatpush1.msra.mxu0 0.0
    %3452 = vmatprep.subr.mxu0 0.0
    %3453 = vmatpush1.msra.mxu0 0.0
    %3454 = vmatprep.subr.mxu0 0.0
    %3455 = vmatpush1.msra.mxu0 0.0
    %3456 = vmatprep.subr.mxu0 0.0
    %3457 = vmatpush1.msra.mxu0 0.0
    %3458 = vmatprep.subr.mxu0 0.0
    %3459 = vmatpush1.msra.mxu0 0.0
    %3460 = vmatprep.subr.mxu0 0.0
    %3461 = vmatpush1.msra.mxu0 0.0
    %3462 = vmatprep.subr.mxu0 0.0
    %3463 = vmatpush1.msra.mxu0 0.0
    %3464 = vmatprep.subr.mxu0 0.0
    %3465 = vmatpush1.msra.mxu0 0.0
    %3466 = vmatprep.subr.mxu0 0.0
    %3467 = vmatpush1.msra.mxu0 0.0
    %3468 = vmatprep.subr.mxu0 0.0
    %3469 = vmatpush1.msra.mxu0 0.0
    %3470 = vmatprep.subr.mxu0 0.0
    %3471 = vmatpush1.msra.mxu0 0.0
    %3472 = vmatprep.subr.mxu0 0.0
    %3473 = vmatpush1.msra.mxu0 0.0
    %3474 = vmatprep.subr.mxu0 0.0
    %3475 = vmatpush1.msra.mxu0 0.0
    %3476 = vmatprep.subr.mxu0 0.0
    %3477 = vmatpush1.msra.mxu0 0.0
    %3478 = vmatprep.subr.mxu0 0.0
    %3479 = vmatpush1.msra.mxu0 0.0
    %3480 = vmatprep.subr.mxu0 0.0
    %3481 = vmatpush1.msra.mxu0 0.0
    %3482 = vmatprep.subr.mxu0 0.0
    %3483 = vmatpush1.msra.mxu0 0.0
    %3484 = vmatprep.subr.mxu0 0.0
    %3485 = vmatpush1.msra.mxu0 0.0
    %3486 = vmatprep.mubr.f32.mxu0 0.0
    %3487 = vmatmul.mubr.f32.gmra.mrb[0].mxu0 %v3210
    %v3488 = vpop.f32.mrb[0].mxu0
    %v3489 = vadd.f32 0.0, %v3488
    %v3490 = vpop.f32.mrb[0].mxu0
    %3491 = vdwg.mxu0
    %v3493 = vsel %vm198, %v3206, 0
    %v3496 = vsel %vm198, %v3207, 0
    %v3499 = vsel %vm198, %v3208, 0
    %3501 = vmatprep.subr.mxu0 0.0
    %3502 = vmatpush1.msra.mxu0 %v67
    %3503 = vmatprep.subr.mxu0 0.0
    %3504 = vmatpush1.msra.mxu0 %v68
    %3505 = vmatprep.subr.mxu0 0.0
    %3506 = vmatpush1.msra.mxu0 %v69
    %3507 = vmatprep.subr.mxu0 0.0
    %3508 = vmatpush1.msra.mxu0 %v70
    %3509 = vmatprep.subr.mxu0 0.0
    %3510 = vmatpush1.msra.mxu0 0.0
    %3511 = vmatprep.subr.mxu0 0.0
    %3512 = vmatpush1.msra.mxu0 0.0
    %3513 = vmatprep.subr.mxu0 0.0
    %3514 = vmatpush1.msra.mxu0 0.0
    %3515 = vmatprep.subr.mxu0 0.0
    %3516 = vmatpush1.msra.mxu0 0.0
    %3517 = vmatprep.subr.mxu0 0.0
    %3518 = vmatpush1.msra.mxu0 0.0
    %3519 = vmatprep.subr.mxu0 0.0
    %3520 = vmatpush1.msra.mxu0 0.0
    %3521 = vmatprep.subr.mxu0 0.0
    %3522 = vmatpush1.msra.mxu0 0.0
    %3523 = vmatprep.subr.mxu0 0.0
    %3524 = vmatpush1.msra.mxu0 0.0
    %3525 = vmatprep.subr.mxu0 0.0
    %3526 = vmatpush1.msra.mxu0 0.0
    %3527 = vmatprep.subr.mxu0 0.0
    %3528 = vmatpush1.msra.mxu0 0.0
    %3529 = vmatprep.subr.mxu0 0.0
    %3530 = vmatpush1.msra.mxu0 0.0
    %3531 = vmatprep.subr.mxu0 0.0
    %3532 = vmatpush1.msra.mxu0 0.0
    %3533 = vmatprep.subr.mxu0 0.0
    %3534 = vmatpush1.msra.mxu0 0.0
    %3535 = vmatprep.subr.mxu0 0.0
    %3536 = vmatpush1.msra.mxu0 0.0
    %3537 = vmatprep.subr.mxu0 0.0
    %3538 = vmatpush1.msra.mxu0 0.0
    %3539 = vmatprep.subr.mxu0 0.0
    %3540 = vmatpush1.msra.mxu0 0.0
    %3541 = vmatprep.subr.mxu0 0.0
    %3542 = vmatpush1.msra.mxu0 0.0
    %3543 = vmatprep.subr.mxu0 0.0
    %3544 = vmatpush1.msra.mxu0 0.0
    %3545 = vmatprep.subr.mxu0 0.0
    %3546 = vmatpush1.msra.mxu0 0.0
    %3547 = vmatprep.subr.mxu0 0.0
    %3548 = vmatpush1.msra.mxu0 0.0
    %3549 = vmatprep.subr.mxu0 0.0
    %3550 = vmatpush1.msra.mxu0 0.0
    %3551 = vmatprep.subr.mxu0 0.0
    %3552 = vmatpush1.msra.mxu0 0.0
    %3553 = vmatprep.subr.mxu0 0.0
    %3554 = vmatpush1.msra.mxu0 0.0
    %3555 = vmatprep.subr.mxu0 0.0
    %3556 = vmatpush1.msra.mxu0 0.0
    %3557 = vmatprep.subr.mxu0 0.0
    %3558 = vmatpush1.msra.mxu0 0.0
    %3559 = vmatprep.subr.mxu0 0.0
    %3560 = vmatpush1.msra.mxu0 0.0
    %3561 = vmatprep.subr.mxu0 0.0
    %3562 = vmatpush1.msra.mxu0 0.0
    %3563 = vmatprep.subr.mxu0 0.0
    %3564 = vmatpush1.msra.mxu0 0.0
    %3565 = vmatprep.mubr.f32.mxu0 0.0
    %3566 = vmatmul.mubr.f32.gmra.mrb[0].mxu0 %v3493
    %v3567 = vpop.f32.mrb[0].mxu0
    %v3568 = vadd.f32 0.0, %v3567
    %v3569 = vpop.f32.mrb[0].mxu0
    %3570 = vmatprep.mubr.f32.mxu0 0.0
    %3571 = vmatmul.mubr.f32.gmra.mrb[0].mxu0 %v3496
    %v3572 = vpop.f32.mrb[0].mxu0
    %v3573 = vadd.f32 0.0, %v3572
    %v3574 = vpop.f32.mrb[0].mxu0
    %3575 = vmatprep.mubr.f32.mxu0 0.0
    %3576 = vmatmul.mubr.f32.gmra.mrb[0].mxu0 %v3499
    %v3577 = vpop.f32.mrb[0].mxu0
    %v3578 = vadd.f32 0.0, %v3577
    %v3579 = vpop.f32.mrb[0].mxu0
    %3580 = vdwg.mxu0
    %3581 = vmatprep.subr.mxu0 0.0
    %3582 = vmatpush1.msra.mxu0 %v71
    %3583 = vmatprep.subr.mxu0 0.0
    %3584 = vmatpush1.msra.mxu0 %v72
    %3585 = vmatprep.subr.mxu0 0.0
    %3586 = vmatpush1.msra.mxu0 %v73
    %3587 = vmatprep.subr.mxu0 0.0
    %3588 = vmatpush1.msra.mxu0 %v74
    %3589 = vmatprep.subr.mxu0 0.0
    %3590 = vmatpush1.msra.mxu0 0.0
    %3591 = vmatprep.subr.mxu0 0.0
    %3592 = vmatpush1.msra.mxu0 0.0
    %3593 = vmatprep.subr.mxu0 0.0
    %3594 = vmatpush1.msra.mxu0 0.0
    %3595 = vmatprep.subr.mxu0 0.0
    %3596 = vmatpush1.msra.mxu0 0.0
    %3597 = vmatprep.subr.mxu0 0.0
    %3598 = vmatpush1.msra.mxu0 0.0
    %3599 = vmatprep.subr.mxu0 0.0
    %3600 = vmatpush1.msra.mxu0 0.0
    %3601 = vmatprep.subr.mxu0 0.0
    %3602 = vmatpush1.msra.mxu0 0.0
    %3603 = vmatprep.subr.mxu0 0.0
    %3604 = vmatpush1.msra.mxu0 0.0
    %3605 = vmatprep.subr.mxu0 0.0
    %3606 = vmatpush1.msra.mxu0 0.0
    %3607 = vmatprep.subr.mxu0 0.0
    %3608 = vmatpush1.msra.mxu0 0.0
    %3609 = vmatprep.subr.mxu0 0.0
    %3610 = vmatpush1.msra.mxu0 0.0
    %3611 = vmatprep.subr.mxu0 0.0
    %3612 = vmatpush1.msra.mxu0 0.0
    %3613 = vmatprep.subr.mxu0 0.0
    %3614 = vmatpush1.msra.mxu0 0.0
    %3615 = vmatprep.subr.mxu0 0.0
    %3616 = vmatpush1.msra.mxu0 0.0
    %3617 = vmatprep.subr.mxu0 0.0
    %3618 = vmatpush1.msra.mxu0 0.0
    %3619 = vmatprep.subr.mxu0 0.0
    %3620 = vmatpush1.msra.mxu0 0.0
    %3621 = vmatprep.subr.mxu0 0.0
    %3622 = vmatpush1.msra.mxu0 0.0
    %3623 = vmatprep.subr.mxu0 0.0
    %3624 = vmatpush1.msra.mxu0 0.0
    %3625 = vmatprep.subr.mxu0 0.0
    %3626 = vmatpush1.msra.mxu0 0.0
    %3627 = vmatprep.subr.mxu0 0.0
    %3628 = vmatpush1.msra.mxu0 0.0
    %3629 = vmatprep.subr.mxu0 0.0
    %3630 = vmatpush1.msra.mxu0 0.0
    %3631 = vmatprep.subr.mxu0 0.0
    %3632 = vmatpush1.msra.mxu0 0.0
    %3633 = vmatprep.subr.mxu0 0.0
    %3634 = vmatpush1.msra.mxu0 0.0
    %3635 = vmatprep.subr.mxu0 0.0
    %3636 = vmatpush1.msra.mxu0 0.0
    %3637 = vmatprep.subr.mxu0 0.0
    %3638 = vmatpush1.msra.mxu0 0.0
    %3639 = vmatprep.subr.mxu0 0.0
    %3640 = vmatpush1.msra.mxu0 0.0
    %3641 = vmatprep.subr.mxu0 0.0
    %3642 = vmatpush1.msra.mxu0 0.0
    %3643 = vmatprep.subr.mxu0 0.0
    %3644 = vmatpush1.msra.mxu0 0.0
    %3645 = vmatprep.mubr.f32.mxu0 0.0
    %3646 = vmatmul.mubr.f32.gmra.mrb[0].mxu0 %v3493
    %v3647 = vpop.f32.mrb[0].mxu0
    %v3648 = vadd.f32 0.0, %v3647
    %v3649 = vpop.f32.mrb[0].mxu0
    %3650 = vmatprep.mubr.f32.mxu0 0.0
    %3651 = vmatmul.mubr.f32.gmra.mrb[0].mxu0 %v3496
    %v3652 = vpop.f32.mrb[0].mxu0
    %v3653 = vadd.f32 0.0, %v3652
    %v3654 = vpop.f32.mrb[0].mxu0
    %3655 = vmatprep.mubr.f32.mxu0 0.0
    %3656 = vmatmul.mubr.f32.gmra.mrb[0].mxu0 %v3499
    %v3657 = vpop.f32.mrb[0].mxu0
    %v3658 = vadd.f32 0.0, %v3657
    %v3659 = vpop.f32.mrb[0].mxu0
    %3660 = vdwg.mxu0
    %3661 = vmatprep.subr.mxu0 0.0
    %3662 = vmatpush1.msra.mxu0 %v75
    %3663 = vmatprep.subr.mxu0 0.0
    %3664 = vmatpush1.msra.mxu0 %v76
    %3665 = vmatprep.subr.mxu0 0.0
    %3666 = vmatpush1.msra.mxu0 %v77
    %3667 = vmatprep.subr.mxu0 0.0
    %3668 = vmatpush1.msra.mxu0 %v78
    %3669 = vmatprep.subr.mxu0 0.0
    %3670 = vmatpush1.msra.mxu0 0.0
    %3671 = vmatprep.subr.mxu0 0.0
    %3672 = vmatpush1.msra.mxu0 0.0
    %3673 = vmatprep.subr.mxu0 0.0
    %3674 = vmatpush1.msra.mxu0 0.0
    %3675 = vmatprep.subr.mxu0 0.0
    %3676 = vmatpush1.msra.mxu0 0.0
    %3677 = vmatprep.subr.mxu0 0.0
    %3678 = vmatpush1.msra.mxu0 0.0
    %3679 = vmatprep.subr.mxu0 0.0
    %3680 = vmatpush1.msra.mxu0 0.0
    %3681 = vmatprep.subr.mxu0 0.0
    %3682 = vmatpush1.msra.mxu0 0.0
    %3683 = vmatprep.subr.mxu0 0.0
    %3684 = vmatpush1.msra.mxu0 0.0
    %3685 = vmatprep.subr.mxu0 0.0
    %3686 = vmatpush1.msra.mxu0 0.0
    %3687 = vmatprep.subr.mxu0 0.0
    %3688 = vmatpush1.msra.mxu0 0.0
    %3689 = vmatprep.subr.mxu0 0.0
    %3690 = vmatpush1.msra.mxu0 0.0
    %3691 = vmatprep.subr.mxu0 0.0
    %3692 = vmatpush1.msra.mxu0 0.0
    %3693 = vmatprep.subr.mxu0 0.0
    %3694 = vmatpush1.msra.mxu0 0.0
    %3695 = vmatprep.subr.mxu0 0.0
    %3696 = vmatpush1.msra.mxu0 0.0
    %3697 = vmatprep.subr.mxu0 0.0
    %3698 = vmatpush1.msra.mxu0 0.0
    %3699 = vmatprep.subr.mxu0 0.0
    %3700 = vmatpush1.msra.mxu0 0.0
    %3701 = vmatprep.subr.mxu0 0.0
    %3702 = vmatpush1.msra.mxu0 0.0
    %3703 = vmatprep.subr.mxu0 0.0
    %3704 = vmatpush1.msra.mxu0 0.0
    %3705 = vmatprep.subr.mxu0 0.0
    %3706 = vmatpush1.msra.mxu0 0.0
    %3707 = vmatprep.subr.mxu0 0.0
    %3708 = vmatpush1.msra.mxu0 0.0
    %3709 = vmatprep.subr.mxu0 0.0
    %3710 = vmatpush1.msra.mxu0 0.0
    %3711 = vmatprep.subr.mxu0 0.0
    %3712 = vmatpush1.msra.mxu0 0.0
    %3713 = vmatprep.subr.mxu0 0.0
    %3714 = vmatpush1.msra.mxu0 0.0
    %3715 = vmatprep.subr.mxu0 0.0
    %3716 = vmatpush1.msra.mxu0 0.0
    %3717 = vmatprep.subr.mxu0 0.0
    %3718 = vmatpush1.msra.mxu0 0.0
    %3719 = vmatprep.subr.mxu0 0.0
    %3720 = vmatpush1.msra.mxu0 0.0
    %3721 = vmatprep.subr.mxu0 0.0
    %3722 = vmatpush1.msra.mxu0 0.0
    %3723 = vmatprep.subr.mxu0 0.0
    %3724 = vmatpush1.msra.mxu0 0.0
    %3725 = vmatprep.mubr.f32.mxu0 0.0
    %3726 = vmatmul.mubr.f32.gmra.mrb[0].mxu0 %v3493
    %v3727 = vpop.f32.mrb[0].mxu0
    %v3728 = vadd.f32 0.0, %v3727
    %v3729 = vpop.f32.mrb[0].mxu0
    %3730 = vmatprep.mubr.f32.mxu0 0.0
    %3731 = vmatmul.mubr.f32.gmra.mrb[0].mxu0 %v3496
    %v3732 = vpop.f32.mrb[0].mxu0
    %v3733 = vadd.f32 0.0, %v3732
    %v3734 = vpop.f32.mrb[0].mxu0
    %3735 = vmatprep.mubr.f32.mxu0 0.0
    %3736 = vmatmul.mubr.f32.gmra.mrb[0].mxu0 %v3499
    %v3737 = vpop.f32.mrb[0].mxu0
    %v3738 = vadd.f32 0.0, %v3737
    %v3739 = vpop.f32.mrb[0].mxu0
    %3740 = vdwg.mxu0
    %3741 = vmatprep.subr.mxu0 0.0
    %3742 = vmatpush1.msra.mxu0 %v79
    %3743 = vmatprep.subr.mxu0 0.0
    %3744 = vmatpush1.msra.mxu0 %v80
    %3745 = vmatprep.subr.mxu0 0.0
    %3746 = vmatpush1.msra.mxu0 %v81
    %3747 = vmatprep.subr.mxu0 0.0
    %3748 = vmatpush1.msra.mxu0 %v82
    %3749 = vmatprep.subr.mxu0 0.0
    %3750 = vmatpush1.msra.mxu0 0.0
    %3751 = vmatprep.subr.mxu0 0.0
    %3752 = vmatpush1.msra.mxu0 0.0
    %3753 = vmatprep.subr.mxu0 0.0
    %3754 = vmatpush1.msra.mxu0 0.0
    %3755 = vmatprep.subr.mxu0 0.0
    %3756 = vmatpush1.msra.mxu0 0.0
    %3757 = vmatprep.subr.mxu0 0.0
    %3758 = vmatpush1.msra.mxu0 0.0
    %3759 = vmatprep.subr.mxu0 0.0
    %3760 = vmatpush1.msra.mxu0 0.0
    %3761 = vmatprep.subr.mxu0 0.0
    %3762 = vmatpush1.msra.mxu0 0.0
    %3763 = vmatprep.subr.mxu0 0.0
    %3764 = vmatpush1.msra.mxu0 0.0
    %3765 = vmatprep.subr.mxu0 0.0
    %3766 = vmatpush1.msra.mxu0 0.0
    %3767 = vmatprep.subr.mxu0 0.0
    %3768 = vmatpush1.msra.mxu0 0.0
    %3769 = vmatprep.subr.mxu0 0.0
    %3770 = vmatpush1.msra.mxu0 0.0
    %3771 = vmatprep.subr.mxu0 0.0
    %3772 = vmatpush1.msra.mxu0 0.0
    %3773 = vmatprep.subr.mxu0 0.0
    %3774 = vmatpush1.msra.mxu0 0.0
    %3775 = vmatprep.subr.mxu0 0.0
    %3776 = vmatpush1.msra.mxu0 0.0
    %3777 = vmatprep.subr.mxu0 0.0
    %3778 = vmatpush1.msra.mxu0 0.0
    %3779 = vmatprep.subr.mxu0 0.0
    %3780 = vmatpush1.msra.mxu0 0.0
    %3781 = vmatprep.subr.mxu0 0.0
    %3782 = vmatpush1.msra.mxu0 0.0
    %3783 = vmatprep.subr.mxu0 0.0
    %3784 = vmatpush1.msra.mxu0 0.0
    %3785 = vmatprep.subr.mxu0 0.0
    %3786 = vmatpush1.msra.mxu0 0.0
    %3787 = vmatprep.subr.mxu0 0.0
    %3788 = vmatpush1.msra.mxu0 0.0
    %3789 = vmatprep.subr.mxu0 0.0
    %3790 = vmatpush1.msra.mxu0 0.0
    %3791 = vmatprep.subr.mxu0 0.0
    %3792 = vmatpush1.msra.mxu0 0.0
    %3793 = vmatprep.subr.mxu0 0.0
    %3794 = vmatpush1.msra.mxu0 0.0
    %3795 = vmatprep.subr.mxu0 0.0
    %3796 = vmatpush1.msra.mxu0 0.0
    %3797 = vmatprep.subr.mxu0 0.0
    %3798 = vmatpush1.msra.mxu0 0.0
    %3799 = vmatprep.subr.mxu0 0.0
    %3800 = vmatpush1.msra.mxu0 0.0
    %3801 = vmatprep.subr.mxu0 0.0
    %3802 = vmatpush1.msra.mxu0 0.0
    %3803 = vmatprep.subr.mxu0 0.0
    %3804 = vmatpush1.msra.mxu0 0.0
    %3805 = vmatprep.mubr.f32.mxu0 0.0
    %3806 = vmatmul.mubr.f32.gmra.mrb[0].mxu0 %v3493
    %v3807 = vpop.f32.mrb[0].mxu0
    %v3808 = vadd.f32 0.0, %v3807
    %v3809 = vpop.f32.mrb[0].mxu0
    %3810 = vmatprep.mubr.f32.mxu0 0.0
    %3811 = vmatmul.mubr.f32.gmra.mrb[0].mxu0 %v3496
    %v3812 = vpop.f32.mrb[0].mxu0
    %v3813 = vadd.f32 0.0, %v3812
    %v3814 = vpop.f32.mrb[0].mxu0
    %3815 = vmatprep.mubr.f32.mxu0 0.0
    %3816 = vmatmul.mubr.f32.gmra.mrb[0].mxu0 %v3499
    %v3817 = vpop.f32.mrb[0].mxu0
    %v3818 = vadd.f32 0.0, %v3817
    %v3819 = vpop.f32.mrb[0].mxu0
    %3820 = vdwg.mxu0
    %3821 = vmatprep.subr.mxu0 0.0
    %3822 = vmatpush1.msra.mxu0 %v83
    %3823 = vmatprep.subr.mxu0 0.0
    %3824 = vmatpush1.msra.mxu0 %v84
    %3825 = vmatprep.subr.mxu0 0.0
    %3826 = vmatpush1.msra.mxu0 %v85
    %3827 = vmatprep.subr.mxu0 0.0
    %3828 = vmatpush1.msra.mxu0 %v86
    %3829 = vmatprep.subr.mxu0 0.0
    %3830 = vmatpush1.msra.mxu0 0.0
    %3831 = vmatprep.subr.mxu0 0.0
    %3832 = vmatpush1.msra.mxu0 0.0
    %3833 = vmatprep.subr.mxu0 0.0
    %3834 = vmatpush1.msra.mxu0 0.0
    %3835 = vmatprep.subr.mxu0 0.0
    %3836 = vmatpush1.msra.mxu0 0.0
    %3837 = vmatprep.subr.mxu0 0.0
    %3838 = vmatpush1.msra.mxu0 0.0
    %3839 = vmatprep.subr.mxu0 0.0
    %3840 = vmatpush1.msra.mxu0 0.0
    %3841 = vmatprep.subr.mxu0 0.0
    %3842 = vmatpush1.msra.mxu0 0.0
    %3843 = vmatprep.subr.mxu0 0.0
    %3844 = vmatpush1.msra.mxu0 0.0
    %3845 = vmatprep.subr.mxu0 0.0
    %3846 = vmatpush1.msra.mxu0 0.0
    %3847 = vmatprep.subr.mxu0 0.0
    %3848 = vmatpush1.msra.mxu0 0.0
    %3849 = vmatprep.subr.mxu0 0.0
    %3850 = vmatpush1.msra.mxu0 0.0
    %3851 = vmatprep.subr.mxu0 0.0
    %3852 = vmatpush1.msra.mxu0 0.0
    %3853 = vmatprep.subr.mxu0 0.0
    %3854 = vmatpush1.msra.mxu0 0.0
    %3855 = vmatprep.subr.mxu0 0.0
    %3856 = vmatpush1.msra.mxu0 0.0
    %3857 = vmatprep.subr.mxu0 0.0
    %3858 = vmatpush1.msra.mxu0 0.0
    %3859 = vmatprep.subr.mxu0 0.0
    %3860 = vmatpush1.msra.mxu0 0.0
    %3861 = vmatprep.subr.mxu0 0.0
    %3862 = vmatpush1.msra.mxu0 0.0
    %3863 = vmatprep.subr.mxu0 0.0
    %3864 = vmatpush1.msra.mxu0 0.0
    %3865 = vmatprep.subr.mxu0 0.0
    %3866 = vmatpush1.msra.mxu0 0.0
    %3867 = vmatprep.subr.mxu0 0.0
    %3868 = vmatpush1.msra.mxu0 0.0
    %3869 = vmatprep.subr.mxu0 0.0
    %3870 = vmatpush1.msra.mxu0 0.0
    %3871 = vmatprep.subr.mxu0 0.0
    %3872 = vmatpush1.msra.mxu0 0.0
    %3873 = vmatprep.subr.mxu0 0.0
    %3874 = vmatpush1.msra.mxu0 0.0
    %3875 = vmatprep.subr.mxu0 0.0
    %3876 = vmatpush1.msra.mxu0 0.0
    %3877 = vmatprep.subr.mxu0 0.0
    %3878 = vmatpush1.msra.mxu0 0.0
    %3879 = vmatprep.subr.mxu0 0.0
    %3880 = vmatpush1.msra.mxu0 0.0
    %3881 = vmatprep.subr.mxu0 0.0
    %3882 = vmatpush1.msra.mxu0 0.0
    %3883 = vmatprep.subr.mxu0 0.0
    %3884 = vmatpush1.msra.mxu0 0.0
    %3885 = vmatprep.mubr.f32.mxu0 0.0
    %3886 = vmatmul.mubr.f32.gmra.mrb[0].mxu0 %v3493
    %v3887 = vpop.f32.mrb[0].mxu0
    %v3888 = vadd.f32 0.0, %v3887
    %v3889 = vpop.f32.mrb[0].mxu0
    %3890 = vmatprep.mubr.f32.mxu0 0.0
    %3891 = vmatmul.mubr.f32.gmra.mrb[0].mxu0 %v3496
    %v3892 = vpop.f32.mrb[0].mxu0
    %v3893 = vadd.f32 0.0, %v3892
    %v3894 = vpop.f32.mrb[0].mxu0
    %3895 = vmatprep.mubr.f32.mxu0 0.0
    %3896 = vmatmul.mubr.f32.gmra.mrb[0].mxu0 %v3499
    %v3897 = vpop.f32.mrb[0].mxu0
    %v3898 = vadd.f32 0.0, %v3897
    %v3899 = vpop.f32.mrb[0].mxu0
    %3900 = vdwg.mxu0
    %3901 = vmatprep.subr.mxu0 0.0
    %3902 = vmatpush1.msra.mxu0 %v87
    %3903 = vmatprep.subr.mxu0 0.0
    %3904 = vmatpush1.msra.mxu0 %v88
    %3905 = vmatprep.subr.mxu0 0.0
    %3906 = vmatpush1.msra.mxu0 %v89
    %3907 = vmatprep.subr.mxu0 0.0
    %3908 = vmatpush1.msra.mxu0 %v90
    %3909 = vmatprep.subr.mxu0 0.0
    %3910 = vmatpush1.msra.mxu0 0.0
    %3911 = vmatprep.subr.mxu0 0.0
    %3912 = vmatpush1.msra.mxu0 0.0
    %3913 = vmatprep.subr.mxu0 0.0
    %3914 = vmatpush1.msra.mxu0 0.0
    %3915 = vmatprep.subr.mxu0 0.0
    %3916 = vmatpush1.msra.mxu0 0.0
    %3917 = vmatprep.subr.mxu0 0.0
    %3918 = vmatpush1.msra.mxu0 0.0
    %3919 = vmatprep.subr.mxu0 0.0
    %3920 = vmatpush1.msra.mxu0 0.0
    %3921 = vmatprep.subr.mxu0 0.0
    %3922 = vmatpush1.msra.mxu0 0.0
    %3923 = vmatprep.subr.mxu0 0.0
    %3924 = vmatpush1.msra.mxu0 0.0
    %3925 = vmatprep.subr.mxu0 0.0
    %3926 = vmatpush1.msra.mxu0 0.0
    %3927 = vmatprep.subr.mxu0 0.0
    %3928 = vmatpush1.msra.mxu0 0.0
    %3929 = vmatprep.subr.mxu0 0.0
    %3930 = vmatpush1.msra.mxu0 0.0
    %3931 = vmatprep.subr.mxu0 0.0
    %3932 = vmatpush1.msra.mxu0 0.0
    %3933 = vmatprep.subr.mxu0 0.0
    %3934 = vmatpush1.msra.mxu0 0.0
    %3935 = vmatprep.subr.mxu0 0.0
    %3936 = vmatpush1.msra.mxu0 0.0
    %3937 = vmatprep.subr.mxu0 0.0
    %3938 = vmatpush1.msra.mxu0 0.0
    %3939 = vmatprep.subr.mxu0 0.0
    %3940 = vmatpush1.msra.mxu0 0.0
    %3941 = vmatprep.subr.mxu0 0.0
    %3942 = vmatpush1.msra.mxu0 0.0
    %3943 = vmatprep.subr.mxu0 0.0
    %3944 = vmatpush1.msra.mxu0 0.0
    %3945 = vmatprep.subr.mxu0 0.0
    %3946 = vmatpush1.msra.mxu0 0.0
    %3947 = vmatprep.subr.mxu0 0.0
    %3948 = vmatpush1.msra.mxu0 0.0
    %3949 = vmatprep.subr.mxu0 0.0
    %3950 = vmatpush1.msra.mxu0 0.0
    %3951 = vmatprep.subr.mxu0 0.0
    %3952 = vmatpush1.msra.mxu0 0.0
    %3953 = vmatprep.subr.mxu0 0.0
    %3954 = vmatpush1.msra.mxu0 0.0
    %3955 = vmatprep.subr.mxu0 0.0
    %3956 = vmatpush1.msra.mxu0 0.0
    %3957 = vmatprep.subr.mxu0 0.0
    %3958 = vmatpush1.msra.mxu0 0.0
    %3959 = vmatprep.subr.mxu0 0.0
    %3960 = vmatpush1.msra.mxu0 0.0
    %3961 = vmatprep.subr.mxu0 0.0
    %3962 = vmatpush1.msra.mxu0 0.0
    %3963 = vmatprep.subr.mxu0 0.0
    %3964 = vmatpush1.msra.mxu0 0.0
    %3965 = vmatprep.mubr.f32.mxu0 0.0
    %3966 = vmatmul.mubr.f32.gmra.mrb[0].mxu0 %v3493
    %v3967 = vpop.f32.mrb[0].mxu0
    %v3968 = vadd.f32 0.0, %v3967
    %v3969 = vpop.f32.mrb[0].mxu0
    %3970 = vmatprep.mubr.f32.mxu0 0.0
    %3971 = vmatmul.mubr.f32.gmra.mrb[0].mxu0 %v3496
    %v3972 = vpop.f32.mrb[0].mxu0
    %v3973 = vadd.f32 0.0, %v3972
    %v3974 = vpop.f32.mrb[0].mxu0
    %3975 = vmatprep.mubr.f32.mxu0 0.0
    %3976 = vmatmul.mubr.f32.gmra.mrb[0].mxu0 %v3499
    %v3977 = vpop.f32.mrb[0].mxu0
    %v3978 = vadd.f32 0.0, %v3977
    %v3979 = vpop.f32.mrb[0].mxu0
    %3980 = vdwg.mxu0
    %3981 = vmatprep.subr.mxu0 0.0
    %3982 = vmatpush1.msra.mxu0 %v91
    %3983 = vmatprep.subr.mxu0 0.0
    %3984 = vmatpush1.msra.mxu0 %v92
    %3985 = vmatprep.subr.mxu0 0.0
    %3986 = vmatpush1.msra.mxu0 %v93
    %3987 = vmatprep.subr.mxu0 0.0
    %3988 = vmatpush1.msra.mxu0 %v94
    %3989 = vmatprep.subr.mxu0 0.0
    %3990 = vmatpush1.msra.mxu0 0.0
    %3991 = vmatprep.subr.mxu0 0.0
    %3992 = vmatpush1.msra.mxu0 0.0
    %3993 = vmatprep.subr.mxu0 0.0
    %3994 = vmatpush1.msra.mxu0 0.0
    %3995 = vmatprep.subr.mxu0 0.0
    %3996 = vmatpush1.msra.mxu0 0.0
    %3997 = vmatprep.subr.mxu0 0.0
    %3998 = vmatpush1.msra.mxu0 0.0
    %3999 = vmatprep.subr.mxu0 0.0
    %4000 = vmatpush1.msra.mxu0 0.0
    %4001 = vmatprep.subr.mxu0 0.0
    %4002 = vmatpush1.msra.mxu0 0.0
    %4003 = vmatprep.subr.mxu0 0.0
    %4004 = vmatpush1.msra.mxu0 0.0
    %4005 = vmatprep.subr.mxu0 0.0
    %4006 = vmatpush1.msra.mxu0 0.0
    %4007 = vmatprep.subr.mxu0 0.0
    %4008 = vmatpush1.msra.mxu0 0.0
    %4009 = vmatprep.subr.mxu0 0.0
    %4010 = vmatpush1.msra.mxu0 0.0
    %4011 = vmatprep.subr.mxu0 0.0
    %4012 = vmatpush1.msra.mxu0 0.0
    %4013 = vmatprep.subr.mxu0 0.0
    %4014 = vmatpush1.msra.mxu0 0.0
    %4015 = vmatprep.subr.mxu0 0.0
    %4016 = vmatpush1.msra.mxu0 0.0
    %4017 = vmatprep.subr.mxu0 0.0
    %4018 = vmatpush1.msra.mxu0 0.0
    %4019 = vmatprep.subr.mxu0 0.0
    %4020 = vmatpush1.msra.mxu0 0.0
    %4021 = vmatprep.subr.mxu0 0.0
    %4022 = vmatpush1.msra.mxu0 0.0
    %4023 = vmatprep.subr.mxu0 0.0
    %4024 = vmatpush1.msra.mxu0 0.0
    %4025 = vmatprep.subr.mxu0 0.0
    %4026 = vmatpush1.msra.mxu0 0.0
    %4027 = vmatprep.subr.mxu0 0.0
    %4028 = vmatpush1.msra.mxu0 0.0
    %4029 = vmatprep.subr.mxu0 0.0
    %4030 = vmatpush1.msra.mxu0 0.0
    %4031 = vmatprep.subr.mxu0 0.0
    %4032 = vmatpush1.msra.mxu0 0.0
    %4033 = vmatprep.subr.mxu0 0.0
    %4034 = vmatpush1.msra.mxu0 0.0
    %4035 = vmatprep.subr.mxu0 0.0
    %4036 = vmatpush1.msra.mxu0 0.0
    %4037 = vmatprep.subr.mxu0 0.0
    %4038 = vmatpush1.msra.mxu0 0.0
    %4039 = vmatprep.subr.mxu0 0.0
    %4040 = vmatpush1.msra.mxu0 0.0
    %4041 = vmatprep.subr.mxu0 0.0
    %4042 = vmatpush1.msra.mxu0 0.0
    %4043 = vmatprep.subr.mxu0 0.0
    %4044 = vmatpush1.msra.mxu0 0.0
    %4045 = vmatprep.mubr.f32.mxu0 0.0
    %4046 = vmatmul.mubr.f32.gmra.mrb[0].mxu0 %v3493
    %v4047 = vpop.f32.mrb[0].mxu0
    %v4048 = vadd.f32 0.0, %v4047
    %v4049 = vpop.f32.mrb[0].mxu0
    %4050 = vmatprep.mubr.f32.mxu0 0.0
    %4051 = vmatmul.mubr.f32.gmra.mrb[0].mxu0 %v3496
    %v4052 = vpop.f32.mrb[0].mxu0
    %v4053 = vadd.f32 0.0, %v4052
    %v4054 = vpop.f32.mrb[0].mxu0
    %4055 = vmatprep.mubr.f32.mxu0 0.0
    %4056 = vmatmul.mubr.f32.gmra.mrb[0].mxu0 %v3499
    %v4057 = vpop.f32.mrb[0].mxu0
    %v4058 = vadd.f32 0.0, %v4057
    %v4059 = vpop.f32.mrb[0].mxu0
    %4060 = vdwg.mxu0
    %4061 = vmatprep.subr.mxu0 0.0
    %4062 = vmatpush1.msra.mxu0 %v95
    %4063 = vmatprep.subr.mxu0 0.0
    %4064 = vmatpush1.msra.mxu0 %v96
    %4065 = vmatprep.subr.mxu0 0.0
    %4066 = vmatpush1.msra.mxu0 %v97
    %4067 = vmatprep.subr.mxu0 0.0
    %4068 = vmatpush1.msra.mxu0 %v98
    %4069 = vmatprep.subr.mxu0 0.0
    %4070 = vmatpush1.msra.mxu0 0.0
    %4071 = vmatprep.subr.mxu0 0.0
    %4072 = vmatpush1.msra.mxu0 0.0
    %4073 = vmatprep.subr.mxu0 0.0
    %4074 = vmatpush1.msra.mxu0 0.0
    %4075 = vmatprep.subr.mxu0 0.0
    %4076 = vmatpush1.msra.mxu0 0.0
    %4077 = vmatprep.subr.mxu0 0.0
    %4078 = vmatpush1.msra.mxu0 0.0
    %4079 = vmatprep.subr.mxu0 0.0
    %4080 = vmatpush1.msra.mxu0 0.0
    %4081 = vmatprep.subr.mxu0 0.0
    %4082 = vmatpush1.msra.mxu0 0.0
    %4083 = vmatprep.subr.mxu0 0.0
    %4084 = vmatpush1.msra.mxu0 0.0
    %4085 = vmatprep.subr.mxu0 0.0
    %4086 = vmatpush1.msra.mxu0 0.0
    %4087 = vmatprep.subr.mxu0 0.0
    %4088 = vmatpush1.msra.mxu0 0.0
    %4089 = vmatprep.subr.mxu0 0.0
    %4090 = vmatpush1.msra.mxu0 0.0
    %4091 = vmatprep.subr.mxu0 0.0
    %4092 = vmatpush1.msra.mxu0 0.0
    %4093 = vmatprep.subr.mxu0 0.0
    %4094 = vmatpush1.msra.mxu0 0.0
    %4095 = vmatprep.subr.mxu0 0.0
    %4096 = vmatpush1.msra.mxu0 0.0
    %4097 = vmatprep.subr.mxu0 0.0
    %4098 = vmatpush1.msra.mxu0 0.0
    %4099 = vmatprep.subr.mxu0 0.0
    %4100 = vmatpush1.msra.mxu0 0.0
    %4101 = vmatprep.subr.mxu0 0.0
    %4102 = vmatpush1.msra.mxu0 0.0
    %4103 = vmatprep.subr.mxu0 0.0
    %4104 = vmatpush1.msra.mxu0 0.0
    %4105 = vmatprep.subr.mxu0 0.0
    %4106 = vmatpush1.msra.mxu0 0.0
    %4107 = vmatprep.subr.mxu0 0.0
    %4108 = vmatpush1.msra.mxu0 0.0
    %4109 = vmatprep.subr.mxu0 0.0
    %4110 = vmatpush1.msra.mxu0 0.0
    %4111 = vmatprep.subr.mxu0 0.0
    %4112 = vmatpush1.msra.mxu0 0.0
    %4113 = vmatprep.subr.mxu0 0.0
    %4114 = vmatpush1.msra.mxu0 0.0
    %4115 = vmatprep.subr.mxu0 0.0
    %4116 = vmatpush1.msra.mxu0 0.0
    %4117 = vmatprep.subr.mxu0 0.0
    %4118 = vmatpush1.msra.mxu0 0.0
    %4119 = vmatprep.subr.mxu0 0.0
    %4120 = vmatpush1.msra.mxu0 0.0
    %4121 = vmatprep.subr.mxu0 0.0
    %4122 = vmatpush1.msra.mxu0 0.0
    %4123 = vmatprep.subr.mxu0 0.0
    %4124 = vmatpush1.msra.mxu0 0.0
    %4125 = vmatprep.mubr.f32.mxu0 0.0
    %4126 = vmatmul.mubr.f32.gmra.mrb[0].mxu0 %v3493
    %v4127 = vpop.f32.mrb[0].mxu0
    %v4128 = vadd.f32 0.0, %v4127
    %v4129 = vpop.f32.mrb[0].mxu0
    %4130 = vmatprep.mubr.f32.mxu0 0.0
    %4131 = vmatmul.mubr.f32.gmra.mrb[0].mxu0 %v3496
    %v4132 = vpop.f32.mrb[0].mxu0
    %v4133 = vadd.f32 0.0, %v4132
    %v4134 = vpop.f32.mrb[0].mxu0
    %4135 = vmatprep.mubr.f32.mxu0 0.0
    %4136 = vmatmul.mubr.f32.gmra.mrb[0].mxu0 %v3499
    %v4137 = vpop.f32.mrb[0].mxu0
    %v4138 = vadd.f32 0.0, %v4137
    %v4139 = vpop.f32.mrb[0].mxu0
    %4140 = vdwg.mxu0
    %v4141 = vmul.f32 %v3279, 0.35355338
    %v4142 = vmul.f32 %v3349, 0.35355338
    %v4143 = vmul.f32 %v3419, 0.35355338
    %v4144 = vmul.f32 %v3489, 0.35355338
    %v4145 = vadd.f32 %v4141, %v146
    %v4146 = vadd.f32 %v4142, %v150
    %v4147 = vadd.f32 %v4143, %v154
    %v4148 = vadd.f32 %v4144, %v158
    %v4149 = vadd.f32 %v4141, %v178
    %v4150 = vadd.f32 %v4142, %v182
    %v4151 = vadd.f32 %v4143, %v186
    %v4152 = vadd.f32 %v4144, %v190
    %v4154 = vsel %vm1491, %v4149, 0
    %4156 = vmatprep.subr.mxu0 0.0
    %4157 = vmatpush1.xpose.msra.mxu0 %v1496
    %4158 = vmatprep.subr.mxu0 0.0
    %4159 = vmatpush1.xpose.msra.mxu0 %v1499
    %4160 = vmatprep.subr.mxu0 0.0
    %4161 = vmatpush1.xpose.msra.mxu0 %v1502
    %4162 = vmatprep.subr.mxu0 0.0
    %4163 = vmatpush1.xpose.msra.mxu0 0.0
    %4164 = vmatprep.subr.mxu0 0.0
    %4165 = vmatpush1.xpose.msra.mxu0 0.0
    %4166 = vmatprep.subr.mxu0 0.0
    %4167 = vmatpush1.xpose.msra.mxu0 0.0
    %4168 = vmatprep.subr.mxu0 0.0
    %4169 = vmatpush1.xpose.msra.mxu0 0.0
    %4170 = vmatprep.subr.mxu0 0.0
    %4171 = vmatpush1.xpose.msra.mxu0 0.0
    %4172 = vmatprep.subr.mxu0 0.0
    %4173 = vmatpush1.xpose.msra.mxu0 0.0
    %4174 = vmatprep.subr.mxu0 0.0
    %4175 = vmatpush1.xpose.msra.mxu0 0.0
    %4176 = vmatprep.subr.mxu0 0.0
    %4177 = vmatpush1.xpose.msra.mxu0 0.0
    %4178 = vmatprep.subr.mxu0 0.0
    %4179 = vmatpush1.xpose.msra.mxu0 0.0
    %4180 = vmatprep.subr.mxu0 0.0
    %4181 = vmatpush1.xpose.msra.mxu0 0.0
    %4182 = vmatprep.subr.mxu0 0.0
    %4183 = vmatpush1.xpose.msra.mxu0 0.0
    %4184 = vmatprep.subr.mxu0 0.0
    %4185 = vmatpush1.xpose.msra.mxu0 0.0
    %4186 = vmatprep.subr.mxu0 0.0
    %4187 = vmatpush1.xpose.msra.mxu0 0.0
    %4188 = vmatprep.subr.mxu0 0.0
    %4189 = vmatpush1.xpose.msra.mxu0 0.0
    %4190 = vmatprep.subr.mxu0 0.0
    %4191 = vmatpush1.xpose.msra.mxu0 0.0
    %4192 = vmatprep.subr.mxu0 0.0
    %4193 = vmatpush1.xpose.msra.mxu0 0.0
    %4194 = vmatprep.subr.mxu0 0.0
    %4195 = vmatpush1.xpose.msra.mxu0 0.0
    %4196 = vmatprep.subr.mxu0 0.0
    %4197 = vmatpush1.xpose.msra.mxu0 0.0
    %4198 = vmatprep.subr.mxu0 0.0
    %4199 = vmatpush1.xpose.msra.mxu0 0.0
    %4200 = vmatprep.subr.mxu0 0.0
    %4201 = vmatpush1.xpose.msra.mxu0 0.0
    %4202 = vmatprep.subr.mxu0 0.0
    %4203 = vmatpush1.xpose.msra.mxu0 0.0
    %4204 = vmatprep.subr.mxu0 0.0
    %4205 = vmatpush1.xpose.msra.mxu0 0.0
    %4206 = vmatprep.subr.mxu0 0.0
    %4207 = vmatpush1.xpose.msra.mxu0 0.0
    %4208 = vmatprep.subr.mxu0 0.0
    %4209 = vmatpush1.xpose.msra.mxu0 0.0
    %4210 = vmatprep.subr.mxu0 0.0
    %4211 = vmatpush1.xpose.msra.mxu0 0.0
    %4212 = vmatprep.subr.mxu0 0.0
    %4213 = vmatpush1.xpose.msra.mxu0 0.0
    %4214 = vmatprep.subr.mxu0 0.0
    %4215 = vmatpush1.xpose.msra.mxu0 0.0
    %4216 = vmatprep.subr.mxu0 0.0
    %4217 = vmatpush1.xpose.msra.mxu0 0.0
    %4218 = vmatprep.subr.mxu0 0.0
    %4219 = vmatpush1.xpose.msra.mxu0 0.0
    %4220 = vmatprep.mubr.f32.mxu0 0.0
    %4221 = vmatmul.mubr.f32.gmra.mrb[0].mxu0 %v4154
    %v4222 = vpop.f32.mrb[0].mxu0
    %v4223 = vadd.f32 0.0, %v4222
    %v4224 = vpop.f32.mrb[0].mxu0
    %4225 = vdwg.mxu0
    %v4227 = vsel %vm1491, %v4150, 0
    %4229 = vmatprep.subr.mxu0 0.0
    %4230 = vmatpush1.xpose.msra.mxu0 %v1578
    %4231 = vmatprep.subr.mxu0 0.0
    %4232 = vmatpush1.xpose.msra.mxu0 %v1581
    %4233 = vmatprep.subr.mxu0 0.0
    %4234 = vmatpush1.xpose.msra.mxu0 %v1584
    %4235 = vmatprep.subr.mxu0 0.0
    %4236 = vmatpush1.xpose.msra.mxu0 0.0
    %4237 = vmatprep.subr.mxu0 0.0
    %4238 = vmatpush1.xpose.msra.mxu0 0.0
    %4239 = vmatprep.subr.mxu0 0.0
    %4240 = vmatpush1.xpose.msra.mxu0 0.0
    %4241 = vmatprep.subr.mxu0 0.0
    %4242 = vmatpush1.xpose.msra.mxu0 0.0
    %4243 = vmatprep.subr.mxu0 0.0
    %4244 = vmatpush1.xpose.msra.mxu0 0.0
    %4245 = vmatprep.subr.mxu0 0.0
    %4246 = vmatpush1.xpose.msra.mxu0 0.0
    %4247 = vmatprep.subr.mxu0 0.0
    %4248 = vmatpush1.xpose.msra.mxu0 0.0
    %4249 = vmatprep.subr.mxu0 0.0
    %4250 = vmatpush1.xpose.msra.mxu0 0.0
    %4251 = vmatprep.subr.mxu0 0.0
    %4252 = vmatpush1.xpose.msra.mxu0 0.0
    %4253 = vmatprep.subr.mxu0 0.0
    %4254 = vmatpush1.xpose.msra.mxu0 0.0
    %4255 = vmatprep.subr.mxu0 0.0
    %4256 = vmatpush1.xpose.msra.mxu0 0.0
    %4257 = vmatprep.subr.mxu0 0.0
    %4258 = vmatpush1.xpose.msra.mxu0 0.0
    %4259 = vmatprep.subr.mxu0 0.0
    %4260 = vmatpush1.xpose.msra.mxu0 0.0
    %4261 = vmatprep.subr.mxu0 0.0
    %4262 = vmatpush1.xpose.msra.mxu0 0.0
    %4263 = vmatprep.subr.mxu0 0.0
    %4264 = vmatpush1.xpose.msra.mxu0 0.0
    %4265 = vmatprep.subr.mxu0 0.0
    %4266 = vmatpush1.xpose.msra.mxu0 0.0
    %4267 = vmatprep.subr.mxu0 0.0
    %4268 = vmatpush1.xpose.msra.mxu0 0.0
    %4269 = vmatprep.subr.mxu0 0.0
    %4270 = vmatpush1.xpose.msra.mxu0 0.0
    %4271 = vmatprep.subr.mxu0 0.0
    %4272 = vmatpush1.xpose.msra.mxu0 0.0
    %4273 = vmatprep.subr.mxu0 0.0
    %4274 = vmatpush1.xpose.msra.mxu0 0.0
    %4275 = vmatprep.subr.mxu0 0.0
    %4276 = vmatpush1.xpose.msra.mxu0 0.0
    %4277 = vmatprep.subr.mxu0 0.0
    %4278 = vmatpush1.xpose.msra.mxu0 0.0
    %4279 = vmatprep.subr.mxu0 0.0
    %4280 = vmatpush1.xpose.msra.mxu0 0.0
    %4281 = vmatprep.subr.mxu0 0.0
    %4282 = vmatpush1.xpose.msra.mxu0 0.0
    %4283 = vmatprep.subr.mxu0 0.0
    %4284 = vmatpush1.xpose.msra.mxu0 0.0
    %4285 = vmatprep.subr.mxu0 0.0
    %4286 = vmatpush1.xpose.msra.mxu0 0.0
    %4287 = vmatprep.subr.mxu0 0.0
    %4288 = vmatpush1.xpose.msra.mxu0 0.0
    %4289 = vmatprep.subr.mxu0 0.0
    %4290 = vmatpush1.xpose.msra.mxu0 0.0
    %4291 = vmatprep.subr.mxu0 0.0
    %4292 = vmatpush1.xpose.msra.mxu0 0.0
    %4293 = vmatprep.mubr.f32.mxu0 0.0
    %4294 = vmatmul.mubr.f32.gmra.mrb[0].mxu0 %v4227
    %v4295 = vpop.f32.mrb[0].mxu0
    %v4296 = vadd.f32 0.0, %v4295
    %v4297 = vpop.f32.mrb[0].mxu0
    %4298 = vdwg.mxu0
    %v4300 = vsel %vm1491, %v4151, 0
    %4302 = vmatprep.subr.mxu0 0.0
    %4303 = vmatpush1.xpose.msra.mxu0 %v1660
    %4304 = vmatprep.subr.mxu0 0.0
    %4305 = vmatpush1.xpose.msra.mxu0 %v1663
    %4306 = vmatprep.subr.mxu0 0.0
    %4307 = vmatpush1.xpose.msra.mxu0 %v1666
    %4308 = vmatprep.subr.mxu0 0.0
    %4309 = vmatpush1.xpose.msra.mxu0 0.0
    %4310 = vmatprep.subr.mxu0 0.0
    %4311 = vmatpush1.xpose.msra.mxu0 0.0
    %4312 = vmatprep.subr.mxu0 0.0
    %4313 = vmatpush1.xpose.msra.mxu0 0.0
    %4314 = vmatprep.subr.mxu0 0.0
    %4315 = vmatpush1.xpose.msra.mxu0 0.0
    %4316 = vmatprep.subr.mxu0 0.0
    %4317 = vmatpush1.xpose.msra.mxu0 0.0
    %4318 = vmatprep.subr.mxu0 0.0
    %4319 = vmatpush1.xpose.msra.mxu0 0.0
    %4320 = vmatprep.subr.mxu0 0.0
    %4321 = vmatpush1.xpose.msra.mxu0 0.0
    %4322 = vmatprep.subr.mxu0 0.0
    %4323 = vmatpush1.xpose.msra.mxu0 0.0
    %4324 = vmatprep.subr.mxu0 0.0
    %4325 = vmatpush1.xpose.msra.mxu0 0.0
    %4326 = vmatprep.subr.mxu0 0.0
    %4327 = vmatpush1.xpose.msra.mxu0 0.0
    %4328 = vmatprep.subr.mxu0 0.0
    %4329 = vmatpush1.xpose.msra.mxu0 0.0
    %4330 = vmatprep.subr.mxu0 0.0
    %4331 = vmatpush1.xpose.msra.mxu0 0.0
    %4332 = vmatprep.subr.mxu0 0.0
    %4333 = vmatpush1.xpose.msra.mxu0 0.0
    %4334 = vmatprep.subr.mxu0 0.0
    %4335 = vmatpush1.xpose.msra.mxu0 0.0
    %4336 = vmatprep.subr.mxu0 0.0
    %4337 = vmatpush1.xpose.msra.mxu0 0.0
    %4338 = vmatprep.subr.mxu0 0.0
    %4339 = vmatpush1.xpose.msra.mxu0 0.0
    %4340 = vmatprep.subr.mxu0 0.0
    %4341 = vmatpush1.xpose.msra.mxu0 0.0
    %4342 = vmatprep.subr.mxu0 0.0
    %4343 = vmatpush1.xpose.msra.mxu0 0.0
    %4344 = vmatprep.subr.mxu0 0.0
    %4345 = vmatpush1.xpose.msra.mxu0 0.0
    %4346 = vmatprep.subr.mxu0 0.0
    %4347 = vmatpush1.xpose.msra.mxu0 0.0
    %4348 = vmatprep.subr.mxu0 0.0
    %4349 = vmatpush1.xpose.msra.mxu0 0.0
    %4350 = vmatprep.subr.mxu0 0.0
    %4351 = vmatpush1.xpose.msra.mxu0 0.0
    %4352 = vmatprep.subr.mxu0 0.0
    %4353 = vmatpush1.xpose.msra.mxu0 0.0
    %4354 = vmatprep.subr.mxu0 0.0
    %4355 = vmatpush1.xpose.msra.mxu0 0.0
    %4356 = vmatprep.subr.mxu0 0.0
    %4357 = vmatpush1.xpose.msra.mxu0 0.0
    %4358 = vmatprep.subr.mxu0 0.0
    %4359 = vmatpush1.xpose.msra.mxu0 0.0
    %4360 = vmatprep.subr.mxu0 0.0
    %4361 = vmatpush1.xpose.msra.mxu0 0.0
    %4362 = vmatprep.subr.mxu0 0.0
    %4363 = vmatpush1.xpose.msra.mxu0 0.0
    %4364 = vmatprep.subr.mxu0 0.0
    %4365 = vmatpush1.xpose.msra.mxu0 0.0
    %4366 = vmatprep.mubr.f32.mxu0 0.0
    %4367 = vmatmul.mubr.f32.gmra.mrb[0].mxu0 %v4300
    %v4368 = vpop.f32.mrb[0].mxu0
    %v4369 = vadd.f32 0.0, %v4368
    %v4370 = vpop.f32.mrb[0].mxu0
    %4371 = vdwg.mxu0
    %v4373 = vsel %vm1491, %v4152, 0
    %4375 = vmatprep.subr.mxu0 0.0
    %4376 = vmatpush1.xpose.msra.mxu0 %v1742
    %4377 = vmatprep.subr.mxu0 0.0
    %4378 = vmatpush1.xpose.msra.mxu0 %v1745
    %4379 = vmatprep.subr.mxu0 0.0
    %4380 = vmatpush1.xpose.msra.mxu0 %v1748
    %4381 = vmatprep.subr.mxu0 0.0
    %4382 = vmatpush1.xpose.msra.mxu0 0.0
    %4383 = vmatprep.subr.mxu0 0.0
    %4384 = vmatpush1.xpose.msra.mxu0 0.0
    %4385 = vmatprep.subr.mxu0 0.0
    %4386 = vmatpush1.xpose.msra.mxu0 0.0
    %4387 = vmatprep.subr.mxu0 0.0
    %4388 = vmatpush1.xpose.msra.mxu0 0.0
    %4389 = vmatprep.subr.mxu0 0.0
    %4390 = vmatpush1.xpose.msra.mxu0 0.0
    %4391 = vmatprep.subr.mxu0 0.0
    %4392 = vmatpush1.xpose.msra.mxu0 0.0
    %4393 = vmatprep.subr.mxu0 0.0
    %4394 = vmatpush1.xpose.msra.mxu0 0.0
    %4395 = vmatprep.subr.mxu0 0.0
    %4396 = vmatpush1.xpose.msra.mxu0 0.0
    %4397 = vmatprep.subr.mxu0 0.0
    %4398 = vmatpush1.xpose.msra.mxu0 0.0
    %4399 = vmatprep.subr.mxu0 0.0
    %4400 = vmatpush1.xpose.msra.mxu0 0.0
    %4401 = vmatprep.subr.mxu0 0.0
    %4402 = vmatpush1.xpose.msra.mxu0 0.0
    %4403 = vmatprep.subr.mxu0 0.0
    %4404 = vmatpush1.xpose.msra.mxu0 0.0
    %4405 = vmatprep.subr.mxu0 0.0
    %4406 = vmatpush1.xpose.msra.mxu0 0.0
    %4407 = vmatprep.subr.mxu0 0.0
    %4408 = vmatpush1.xpose.msra.mxu0 0.0
    %4409 = vmatprep.subr.mxu0 0.0
    %4410 = vmatpush1.xpose.msra.mxu0 0.0
    %4411 = vmatprep.subr.mxu0 0.0
    %4412 = vmatpush1.xpose.msra.mxu0 0.0
    %4413 = vmatprep.subr.mxu0 0.0
    %4414 = vmatpush1.xpose.msra.mxu0 0.0
    %4415 = vmatprep.subr.mxu0 0.0
    %4416 = vmatpush1.xpose.msra.mxu0 0.0
    %4417 = vmatprep.subr.mxu0 0.0
    %4418 = vmatpush1.xpose.msra.mxu0 0.0
    %4419 = vmatprep.subr.mxu0 0.0
    %4420 = vmatpush1.xpose.msra.mxu0 0.0
    %4421 = vmatprep.subr.mxu0 0.0
    %4422 = vmatpush1.xpose.msra.mxu0 0.0
    %4423 = vmatprep.subr.mxu0 0.0
    %4424 = vmatpush1.xpose.msra.mxu0 0.0
    %4425 = vmatprep.subr.mxu0 0.0
    %4426 = vmatpush1.xpose.msra.mxu0 0.0
    %4427 = vmatprep.subr.mxu0 0.0
    %4428 = vmatpush1.xpose.msra.mxu0 0.0
    %4429 = vmatprep.subr.mxu0 0.0
    %4430 = vmatpush1.xpose.msra.mxu0 0.0
    %4431 = vmatprep.subr.mxu0 0.0
    %4432 = vmatpush1.xpose.msra.mxu0 0.0
    %4433 = vmatprep.subr.mxu0 0.0
    %4434 = vmatpush1.xpose.msra.mxu0 0.0
    %4435 = vmatprep.subr.mxu0 0.0
    %4436 = vmatpush1.xpose.msra.mxu0 0.0
    %4437 = vmatprep.subr.mxu0 0.0
    %4438 = vmatpush1.xpose.msra.mxu0 0.0
    %4439 = vmatprep.mubr.f32.mxu0 0.0
    %4440 = vmatmul.mubr.f32.gmra.mrb[0].mxu0 %v4373
    %v4441 = vpop.f32.mrb[0].mxu0
    %v4442 = vadd.f32 0.0, %v4441
    %v4443 = vpop.f32.mrb[0].mxu0
    %4444 = vdwg.mxu0
    %4449 = vrot.lane.b32.xlu0 %v4223, 127
    %v4450 = vpop.permute.xlu0 %4449
    %4451 = vrot.lane.b32.xlu0 %v4296, 127
    %v4452 = vpop.permute.xlu0 %4451
    %4453 = vrot.lane.b32.xlu0 %v4369, 127
    %v4454 = vpop.permute.xlu0 %4453
    %4455 = vrot.lane.b32.xlu0 %v4442, 127
    %v4456 = vpop.permute.xlu0 %4455
    %4461 = vrot.lane.b32.xlu0 %v4223, 20
    %v4462 = vpop.permute.xlu0 %4461
    %4463 = vrot.lane.b32.xlu0 %v4296, 20
    %v4464 = vpop.permute.xlu0 %4463
    %4465 = vrot.lane.b32.xlu0 %v4369, 20
    %v4466 = vpop.permute.xlu0 %4465
    %4467 = vrot.lane.b32.xlu0 %v4442, 20
    %v4468 = vpop.permute.xlu0 %4467
    %v4473 = vsel %vm1848, %v4450, %v4462
    %v4474 = vsel %vm1848, %v4452, %v4464
    %v4475 = vsel %vm1848, %v4454, %v4466
    %v4476 = vsel %vm1848, %v4456, %v4468
    %v4477 = vsel %vm534, %v4473, %v4223
    %v4478 = vsel %vm534, %v4474, %v4296
    %v4479 = vsel %vm534, %v4475, %v4369
    %v4480 = vsel %vm534, %v4476, %v4442
    %4485 = vrot.lane.b32.xlu0 %v4477, 126
    %v4486 = vpop.permute.xlu0 %4485
    %4487 = vrot.lane.b32.xlu0 %v4478, 126
    %v4488 = vpop.permute.xlu0 %4487
    %4489 = vrot.lane.b32.xlu0 %v4479, 126
    %v4490 = vpop.permute.xlu0 %4489
    %4491 = vrot.lane.b32.xlu0 %v4480, 126
    %v4492 = vpop.permute.xlu0 %4491
    %4497 = vrot.lane.b32.xlu0 %v4477, 19
    %v4498 = vpop.permute.xlu0 %4497
    %4499 = vrot.lane.b32.xlu0 %v4478, 19
    %v4500 = vpop.permute.xlu0 %4499
    %4501 = vrot.lane.b32.xlu0 %v4479, 19
    %v4502 = vpop.permute.xlu0 %4501
    %4503 = vrot.lane.b32.xlu0 %v4480, 19
    %v4504 = vpop.permute.xlu0 %4503
    %v4509 = vsel %vm1885, %v4486, %v4498
    %v4510 = vsel %vm1885, %v4488, %v4500
    %v4511 = vsel %vm1885, %v4490, %v4502
    %v4512 = vsel %vm1885, %v4492, %v4504
    %v4513 = vsel %vm536, %v4509, %v4477
    %v4514 = vsel %vm536, %v4510, %v4478
    %v4515 = vsel %vm536, %v4511, %v4479
    %v4516 = vsel %vm536, %v4512, %v4480
    %4521 = vrot.lane.b32.xlu0 %v4513, 124
    %v4522 = vpop.permute.xlu0 %4521
    %4523 = vrot.lane.b32.xlu0 %v4514, 124
    %v4524 = vpop.permute.xlu0 %4523
    %4525 = vrot.lane.b32.xlu0 %v4515, 124
    %v4526 = vpop.permute.xlu0 %4525
    %4527 = vrot.lane.b32.xlu0 %v4516, 124
    %v4528 = vpop.permute.xlu0 %4527
    %4533 = vrot.lane.b32.xlu0 %v4513, 17
    %v4534 = vpop.permute.xlu0 %4533
    %4535 = vrot.lane.b32.xlu0 %v4514, 17
    %v4536 = vpop.permute.xlu0 %4535
    %4537 = vrot.lane.b32.xlu0 %v4515, 17
    %v4538 = vpop.permute.xlu0 %4537
    %4539 = vrot.lane.b32.xlu0 %v4516, 17
    %v4540 = vpop.permute.xlu0 %4539
    %v4545 = vsel %vm1922, %v4522, %v4534
    %v4546 = vsel %vm1922, %v4524, %v4536
    %v4547 = vsel %vm1922, %v4526, %v4538
    %v4548 = vsel %vm1922, %v4528, %v4540
    %v4549 = vsel %vm538, %v4545, %v4513
    %v4550 = vsel %vm538, %v4546, %v4514
    %v4551 = vsel %vm538, %v4547, %v4515
    %v4552 = vsel %vm538, %v4548, %v4516
    %4557 = vrot.lane.b32.xlu0 %v4549, 120
    %v4558 = vpop.permute.xlu0 %4557
    %4559 = vrot.lane.b32.xlu0 %v4550, 120
    %v4560 = vpop.permute.xlu0 %4559
    %4561 = vrot.lane.b32.xlu0 %v4551, 120
    %v4562 = vpop.permute.xlu0 %4561
    %4563 = vrot.lane.b32.xlu0 %v4552, 120
    %v4564 = vpop.permute.xlu0 %4563
    %4569 = vrot.lane.b32.xlu0 %v4549, 13
    %v4570 = vpop.permute.xlu0 %4569
    %4571 = vrot.lane.b32.xlu0 %v4550, 13
    %v4572 = vpop.permute.xlu0 %4571
    %4573 = vrot.lane.b32.xlu0 %v4551, 13
    %v4574 = vpop.permute.xlu0 %4573
    %4575 = vrot.lane.b32.xlu0 %v4552, 13
    %v4576 = vpop.permute.xlu0 %4575
    %v4581 = vsel %vm1959, %v4558, %v4570
    %v4582 = vsel %vm1959, %v4560, %v4572
    %v4583 = vsel %vm1959, %v4562, %v4574
    %v4584 = vsel %vm1959, %v4564, %v4576
    %v4585 = vsel %vm540, %v4581, %v4549
    %v4586 = vsel %vm540, %v4582, %v4550
    %v4587 = vsel %vm540, %v4583, %v4551
    %v4588 = vsel %vm540, %v4584, %v4552
    %v4593 = vrot.slane %v4585, 1
    %v4594 = vrot.slane %v4586, 1
    %v4595 = vrot.slane %v4587, 1
    %v4596 = vrot.slane %v4588, 1
    %v4601 = vsel %vm1980, %v4593, %v4593
    %v4602 = vsel %vm1980, %v4594, %v4594
    %v4603 = vsel %vm1980, %v4595, %v4595
    %v4604 = vsel %vm1980, %v4596, %v4596
    %4609 = vrot.lane.b32.xlu0 %v4601, 127
    %v4610 = vpop.permute.xlu0 %4609
    %4611 = vrot.lane.b32.xlu0 %v4602, 127
    %v4612 = vpop.permute.xlu0 %4611
    %4613 = vrot.lane.b32.xlu0 %v4603, 127
    %v4614 = vpop.permute.xlu0 %4613
    %4615 = vrot.lane.b32.xlu0 %v4604, 127
    %v4616 = vpop.permute.xlu0 %4615
    %4621 = vrot.lane.b32.xlu0 %v4601, 20
    %v4622 = vpop.permute.xlu0 %4621
    %4623 = vrot.lane.b32.xlu0 %v4602, 20
    %v4624 = vpop.permute.xlu0 %4623
    %4625 = vrot.lane.b32.xlu0 %v4603, 20
    %v4626 = vpop.permute.xlu0 %4625
    %4627 = vrot.lane.b32.xlu0 %v4604, 20
    %v4628 = vpop.permute.xlu0 %4627
    %v4633 = vsel %vm1848, %v4610, %v4622
    %v4634 = vsel %vm1848, %v4612, %v4624
    %v4635 = vsel %vm1848, %v4614, %v4626
    %v4636 = vsel %vm1848, %v4616, %v4628
    %v4637 = vsel %vm542, %v4585, %v4633
    %v4638 = vsel %vm542, %v4586, %v4634
    %v4639 = vsel %vm542, %v4587, %v4635
    %v4640 = vsel %vm542, %v4588, %v4636
    %v4642 = vsel %vm1491, %v4145, 0
    %v4645 = vsel %vm1491, %v3568, 0
    %v4648 = vsel %vm1491, %v3573, 0
    %v4651 = vsel %vm1491, %v3578, 0
    %4653 = vmatprep.subr.mxu0 0.0
    %4654 = vmatpush1.xpose.msra.mxu0 %v4645
    %4655 = vmatprep.subr.mxu0 0.0
    %4656 = vmatpush1.xpose.msra.mxu0 %v4648
    %4657 = vmatprep.subr.mxu0 0.0
    %4658 = vmatpush1.xpose.msra.mxu0 %v4651
    %4659 = vmatprep.subr.mxu0 0.0
    %4660 = vmatpush1.xpose.msra.mxu0 0.0
    %4661 = vmatprep.subr.mxu0 0.0
    %4662 = vmatpush1.xpose.msra.mxu0 0.0
    %4663 = vmatprep.subr.mxu0 0.0
    %4664 = vmatpush1.xpose.msra.mxu0 0.0
    %4665 = vmatprep.subr.mxu0 0.0
    %4666 = vmatpush1.xpose.msra.mxu0 0.0
    %4667 = vmatprep.subr.mxu0 0.0
    %4668 = vmatpush1.xpose.msra.mxu0 0.0
    %4669 = vmatprep.subr.mxu0 0.0
    %4670 = vmatpush1.xpose.msra.mxu0 0.0
    %4671 = vmatprep.subr.mxu0 0.0
    %4672 = vmatpush1.xpose.msra.mxu0 0.0
    %4673 = vmatprep.subr.mxu0 0.0
    %4674 = vmatpush1.xpose.msra.mxu0 0.0
    %4675 = vmatprep.subr.mxu0 0.0
    %4676 = vmatpush1.xpose.msra.mxu0 0.0
    %4677 = vmatprep.subr.mxu0 0.0
    %4678 = vmatpush1.xpose.msra.mxu0 0.0
    %4679 = vmatprep.subr.mxu0 0.0
    %4680 = vmatpush1.xpose.msra.mxu0 0.0
    %4681 = vmatprep.subr.mxu0 0.0
    %4682 = vmatpush1.xpose.msra.mxu0 0.0
    %4683 = vmatprep.subr.mxu0 0.0
    %4684 = vmatpush1.xpose.msra.mxu0 0.0
    %4685 = vmatprep.subr.mxu0 0.0
    %4686 = vmatpush1.xpose.msra.mxu0 0.0
    %4687 = vmatprep.subr.mxu0 0.0
    %4688 = vmatpush1.xpose.msra.mxu0 0.0
    %4689 = vmatprep.subr.mxu0 0.0
    %4690 = vmatpush1.xpose.msra.mxu0 0.0
    %4691 = vmatprep.subr.mxu0 0.0
    %4692 = vmatpush1.xpose.msra.mxu0 0.0
    %4693 = vmatprep.subr.mxu0 0.0
    %4694 = vmatpush1.xpose.msra.mxu0 0.0
    %4695 = vmatprep.subr.mxu0 0.0
    %4696 = vmatpush1.xpose.msra.mxu0 0.0
    %4697 = vmatprep.subr.mxu0 0.0
    %4698 = vmatpush1.xpose.msra.mxu0 0.0
    %4699 = vmatprep.subr.mxu0 0.0
    %4700 = vmatpush1.xpose.msra.mxu0 0.0
    %4701 = vmatprep.subr.mxu0 0.0
    %4702 = vmatpush1.xpose.msra.mxu0 0.0
    %4703 = vmatprep.subr.mxu0 0.0
    %4704 = vmatpush1.xpose.msra.mxu0 0.0
    %4705 = vmatprep.subr.mxu0 0.0
    %4706 = vmatpush1.xpose.msra.mxu0 0.0
    %4707 = vmatprep.subr.mxu0 0.0
    %4708 = vmatpush1.xpose.msra.mxu0 0.0
    %4709 = vmatprep.subr.mxu0 0.0
    %4710 = vmatpush1.xpose.msra.mxu0 0.0
    %4711 = vmatprep.subr.mxu0 0.0
    %4712 = vmatpush1.xpose.msra.mxu0 0.0
    %4713 = vmatprep.subr.mxu0 0.0
    %4714 = vmatpush1.xpose.msra.mxu0 0.0
    %4715 = vmatprep.subr.mxu0 0.0
    %4716 = vmatpush1.xpose.msra.mxu0 0.0
    %4717 = vmatprep.mubr.f32.mxu0 0.0
    %4718 = vmatmul.mubr.f32.gmra.mrb[0].mxu0 %v4642
    %v4719 = vpop.f32.mrb[0].mxu0
    %v4720 = vadd.f32 %v4637, %v4719
    %v4721 = vpop.f32.mrb[0].mxu0
    %4722 = vdwg.mxu0
    %v4724 = vsel %vm1491, %v4146, 0
    %v4727 = vsel %vm1491, %v3648, 0
    %v4730 = vsel %vm1491, %v3653, 0
    %v4733 = vsel %vm1491, %v3658, 0
    %4735 = vmatprep.subr.mxu0 0.0
    %4736 = vmatpush1.xpose.msra.mxu0 %v4727
    %4737 = vmatprep.subr.mxu0 0.0
    %4738 = vmatpush1.xpose.msra.mxu0 %v4730
    %4739 = vmatprep.subr.mxu0 0.0
    %4740 = vmatpush1.xpose.msra.mxu0 %v4733
    %4741 = vmatprep.subr.mxu0 0.0
    %4742 = vmatpush1.xpose.msra.mxu0 0.0
    %4743 = vmatprep.subr.mxu0 0.0
    %4744 = vmatpush1.xpose.msra.mxu0 0.0
    %4745 = vmatprep.subr.mxu0 0.0
    %4746 = vmatpush1.xpose.msra.mxu0 0.0
    %4747 = vmatprep.subr.mxu0 0.0
    %4748 = vmatpush1.xpose.msra.mxu0 0.0
    %4749 = vmatprep.subr.mxu0 0.0
    %4750 = vmatpush1.xpose.msra.mxu0 0.0
    %4751 = vmatprep.subr.mxu0 0.0
    %4752 = vmatpush1.xpose.msra.mxu0 0.0
    %4753 = vmatprep.subr.mxu0 0.0
    %4754 = vmatpush1.xpose.msra.mxu0 0.0
    %4755 = vmatprep.subr.mxu0 0.0
    %4756 = vmatpush1.xpose.msra.mxu0 0.0
    %4757 = vmatprep.subr.mxu0 0.0
    %4758 = vmatpush1.xpose.msra.mxu0 0.0
    %4759 = vmatprep.subr.mxu0 0.0
    %4760 = vmatpush1.xpose.msra.mxu0 0.0
    %4761 = vmatprep.subr.mxu0 0.0
    %4762 = vmatpush1.xpose.msra.mxu0 0.0
    %4763 = vmatprep.subr.mxu0 0.0
    %4764 = vmatpush1.xpose.msra.mxu0 0.0
    %4765 = vmatprep.subr.mxu0 0.0
    %4766 = vmatpush1.xpose.msra.mxu0 0.0
    %4767 = vmatprep.subr.mxu0 0.0
    %4768 = vmatpush1.xpose.msra.mxu0 0.0
    %4769 = vmatprep.subr.mxu0 0.0
    %4770 = vmatpush1.xpose.msra.mxu0 0.0
    %4771 = vmatprep.subr.mxu0 0.0
    %4772 = vmatpush1.xpose.msra.mxu0 0.0
    %4773 = vmatprep.subr.mxu0 0.0
    %4774 = vmatpush1.xpose.msra.mxu0 0.0
    %4775 = vmatprep.subr.mxu0 0.0
    %4776 = vmatpush1.xpose.msra.mxu0 0.0
    %4777 = vmatprep.subr.mxu0 0.0
    %4778 = vmatpush1.xpose.msra.mxu0 0.0
    %4779 = vmatprep.subr.mxu0 0.0
    %4780 = vmatpush1.xpose.msra.mxu0 0.0
    %4781 = vmatprep.subr.mxu0 0.0
    %4782 = vmatpush1.xpose.msra.mxu0 0.0
    %4783 = vmatprep.subr.mxu0 0.0
    %4784 = vmatpush1.xpose.msra.mxu0 0.0
    %4785 = vmatprep.subr.mxu0 0.0
    %4786 = vmatpush1.xpose.msra.mxu0 0.0
    %4787 = vmatprep.subr.mxu0 0.0
    %4788 = vmatpush1.xpose.msra.mxu0 0.0
    %4789 = vmatprep.subr.mxu0 0.0
    %4790 = vmatpush1.xpose.msra.mxu0 0.0
    %4791 = vmatprep.subr.mxu0 0.0
    %4792 = vmatpush1.xpose.msra.mxu0 0.0
    %4793 = vmatprep.subr.mxu0 0.0
    %4794 = vmatpush1.xpose.msra.mxu0 0.0
    %4795 = vmatprep.subr.mxu0 0.0
    %4796 = vmatpush1.xpose.msra.mxu0 0.0
    %4797 = vmatprep.subr.mxu0 0.0
    %4798 = vmatpush1.xpose.msra.mxu0 0.0
    %4799 = vmatprep.mubr.f32.mxu0 0.0
    %4800 = vmatmul.mubr.f32.gmra.mrb[0].mxu0 %v4724
    %v4801 = vpop.f32.mrb[0].mxu0
    %v4802 = vadd.f32 %v4638, %v4801
    %v4803 = vpop.f32.mrb[0].mxu0
    %4804 = vdwg.mxu0
    %v4806 = vsel %vm1491, %v4147, 0
    %v4809 = vsel %vm1491, %v3728, 0
    %v4812 = vsel %vm1491, %v3733, 0
    %v4815 = vsel %vm1491, %v3738, 0
    %4817 = vmatprep.subr.mxu0 0.0
    %4818 = vmatpush1.xpose.msra.mxu0 %v4809
    %4819 = vmatprep.subr.mxu0 0.0
    %4820 = vmatpush1.xpose.msra.mxu0 %v4812
    %4821 = vmatprep.subr.mxu0 0.0
    %4822 = vmatpush1.xpose.msra.mxu0 %v4815
    %4823 = vmatprep.subr.mxu0 0.0
    %4824 = vmatpush1.xpose.msra.mxu0 0.0
    %4825 = vmatprep.subr.mxu0 0.0
    %4826 = vmatpush1.xpose.msra.mxu0 0.0
    %4827 = vmatprep.subr.mxu0 0.0
    %4828 = vmatpush1.xpose.msra.mxu0 0.0
    %4829 = vmatprep.subr.mxu0 0.0
    %4830 = vmatpush1.xpose.msra.mxu0 0.0
    %4831 = vmatprep.subr.mxu0 0.0
    %4832 = vmatpush1.xpose.msra.mxu0 0.0
    %4833 = vmatprep.subr.mxu0 0.0
    %4834 = vmatpush1.xpose.msra.mxu0 0.0
    %4835 = vmatprep.subr.mxu0 0.0
    %4836 = vmatpush1.xpose.msra.mxu0 0.0
    %4837 = vmatprep.subr.mxu0 0.0
    %4838 = vmatpush1.xpose.msra.mxu0 0.0
    %4839 = vmatprep.subr.mxu0 0.0
    %4840 = vmatpush1.xpose.msra.mxu0 0.0
    %4841 = vmatprep.subr.mxu0 0.0
    %4842 = vmatpush1.xpose.msra.mxu0 0.0
    %4843 = vmatprep.subr.mxu0 0.0
    %4844 = vmatpush1.xpose.msra.mxu0 0.0
    %4845 = vmatprep.subr.mxu0 0.0
    %4846 = vmatpush1.xpose.msra.mxu0 0.0
    %4847 = vmatprep.subr.mxu0 0.0
    %4848 = vmatpush1.xpose.msra.mxu0 0.0
    %4849 = vmatprep.subr.mxu0 0.0
    %4850 = vmatpush1.xpose.msra.mxu0 0.0
    %4851 = vmatprep.subr.mxu0 0.0
    %4852 = vmatpush1.xpose.msra.mxu0 0.0
    %4853 = vmatprep.subr.mxu0 0.0
    %4854 = vmatpush1.xpose.msra.mxu0 0.0
    %4855 = vmatprep.subr.mxu0 0.0
    %4856 = vmatpush1.xpose.msra.mxu0 0.0
    %4857 = vmatprep.subr.mxu0 0.0
    %4858 = vmatpush1.xpose.msra.mxu0 0.0
    %4859 = vmatprep.subr.mxu0 0.0
    %4860 = vmatpush1.xpose.msra.mxu0 0.0
    %4861 = vmatprep.subr.mxu0 0.0
    %4862 = vmatpush1.xpose.msra.mxu0 0.0
    %4863 = vmatprep.subr.mxu0 0.0
    %4864 = vmatpush1.xpose.msra.mxu0 0.0
    %4865 = vmatprep.subr.mxu0 0.0
    %4866 = vmatpush1.xpose.msra.mxu0 0.0
    %4867 = vmatprep.subr.mxu0 0.0
    %4868 = vmatpush1.xpose.msra.mxu0 0.0
    %4869 = vmatprep.subr.mxu0 0.0
    %4870 = vmatpush1.xpose.msra.mxu0 0.0
    %4871 = vmatprep.subr.mxu0 0.0
    %4872 = vmatpush1.xpose.msra.mxu0 0.0
    %4873 = vmatprep.subr.mxu0 0.0
    %4874 = vmatpush1.xpose.msra.mxu0 0.0
    %4875 = vmatprep.subr.mxu0 0.0
    %4876 = vmatpush1.xpose.msra.mxu0 0.0
    %4877 = vmatprep.subr.mxu0 0.0
    %4878 = vmatpush1.xpose.msra.mxu0 0.0
    %4879 = vmatprep.subr.mxu0 0.0
    %4880 = vmatpush1.xpose.msra.mxu0 0.0
    %4881 = vmatprep.mubr.f32.mxu0 0.0
    %4882 = vmatmul.mubr.f32.gmra.mrb[0].mxu0 %v4806
    %v4883 = vpop.f32.mrb[0].mxu0
    %v4884 = vadd.f32 %v4639, %v4883
    %v4885 = vpop.f32.mrb[0].mxu0
    %4886 = vdwg.mxu0
    %v4888 = vsel %vm1491, %v4148, 0
    %v4891 = vsel %vm1491, %v3808, 0
    %v4894 = vsel %vm1491, %v3813, 0
    %v4897 = vsel %vm1491, %v3818, 0
    %4899 = vmatprep.subr.mxu0 0.0
    %4900 = vmatpush1.xpose.msra.mxu0 %v4891
    %4901 = vmatprep.subr.mxu0 0.0
    %4902 = vmatpush1.xpose.msra.mxu0 %v4894
    %4903 = vmatprep.subr.mxu0 0.0
    %4904 = vmatpush1.xpose.msra.mxu0 %v4897
    %4905 = vmatprep.subr.mxu0 0.0
    %4906 = vmatpush1.xpose.msra.mxu0 0.0
    %4907 = vmatprep.subr.mxu0 0.0
    %4908 = vmatpush1.xpose.msra.mxu0 0.0
    %4909 = vmatprep.subr.mxu0 0.0
    %4910 = vmatpush1.xpose.msra.mxu0 0.0
    %4911 = vmatprep.subr.mxu0 0.0
    %4912 = vmatpush1.xpose.msra.mxu0 0.0
    %4913 = vmatprep.subr.mxu0 0.0
    %4914 = vmatpush1.xpose.msra.mxu0 0.0
    %4915 = vmatprep.subr.mxu0 0.0
    %4916 = vmatpush1.xpose.msra.mxu0 0.0
    %4917 = vmatprep.subr.mxu0 0.0
    %4918 = vmatpush1.xpose.msra.mxu0 0.0
    %4919 = vmatprep.subr.mxu0 0.0
    %4920 = vmatpush1.xpose.msra.mxu0 0.0
    %4921 = vmatprep.subr.mxu0 0.0
    %4922 = vmatpush1.xpose.msra.mxu0 0.0
    %4923 = vmatprep.subr.mxu0 0.0
    %4924 = vmatpush1.xpose.msra.mxu0 0.0
    %4925 = vmatprep.subr.mxu0 0.0
    %4926 = vmatpush1.xpose.msra.mxu0 0.0
    %4927 = vmatprep.subr.mxu0 0.0
    %4928 = vmatpush1.xpose.msra.mxu0 0.0
    %4929 = vmatprep.subr.mxu0 0.0
    %4930 = vmatpush1.xpose.msra.mxu0 0.0
    %4931 = vmatprep.subr.mxu0 0.0
    %4932 = vmatpush1.xpose.msra.mxu0 0.0
    %4933 = vmatprep.subr.mxu0 0.0
    %4934 = vmatpush1.xpose.msra.mxu0 0.0
    %4935 = vmatprep.subr.mxu0 0.0
    %4936 = vmatpush1.xpose.msra.mxu0 0.0
    %4937 = vmatprep.subr.mxu0 0.0
    %4938 = vmatpush1.xpose.msra.mxu0 0.0
    %4939 = vmatprep.subr.mxu0 0.0
    %4940 = vmatpush1.xpose.msra.mxu0 0.0
    %4941 = vmatprep.subr.mxu0 0.0
    %4942 = vmatpush1.xpose.msra.mxu0 0.0
    %4943 = vmatprep.subr.mxu0 0.0
    %4944 = vmatpush1.xpose.msra.mxu0 0.0
    %4945 = vmatprep.subr.mxu0 0.0
    %4946 = vmatpush1.xpose.msra.mxu0 0.0
    %4947 = vmatprep.subr.mxu0 0.0
    %4948 = vmatpush1.xpose.msra.mxu0 0.0
    %4949 = vmatprep.subr.mxu0 0.0
    %4950 = vmatpush1.xpose.msra.mxu0 0.0
    %4951 = vmatprep.subr.mxu0 0.0
    %4952 = vmatpush1.xpose.msra.mxu0 0.0
    %4953 = vmatprep.subr.mxu0 0.0
    %4954 = vmatpush1.xpose.msra.mxu0 0.0
    %4955 = vmatprep.subr.mxu0 0.0
    %4956 = vmatpush1.xpose.msra.mxu0 0.0
    %4957 = vmatprep.subr.mxu0 0.0
    %4958 = vmatpush1.xpose.msra.mxu0 0.0
    %4959 = vmatprep.subr.mxu0 0.0
    %4960 = vmatpush1.xpose.msra.mxu0 0.0
    %4961 = vmatprep.subr.mxu0 0.0
    %4962 = vmatpush1.xpose.msra.mxu0 0.0
    %4963 = vmatprep.mubr.f32.mxu0 0.0
    %4964 = vmatmul.mubr.f32.gmra.mrb[0].mxu0 %v4888
    %v4965 = vpop.f32.mrb[0].mxu0
    %v4966 = vadd.f32 %v4640, %v4965
    %v4967 = vpop.f32.mrb[0].mxu0
    %4968 = vdwg.mxu0
    %v4969 = vsel %vm1848, %v4720, -inf
    %4970 = vmax.xlane.f32.xlu0 %v4969
    %v4971 = vpop.xlane.xlu0 %4970
    %v4972 = vsel %vm1848, %v4802, -inf
    %4973 = vmax.xlane.f32.xlu0 %v4972
    %v4974 = vpop.xlane.xlu0 %4973
    %v4975 = vsel %vm1848, %v4884, -inf
    %4976 = vmax.xlane.f32.xlu0 %v4975
    %v4977 = vpop.xlane.xlu0 %4976
    %v4978 = vsel %vm1848, %v4966, -inf
    %4979 = vmax.xlane.f32.xlu0 %v4978
    %v4980 = vpop.xlane.xlu0 %4979
    %v4981 = vsub.f32 %v4720, %v4971
    %v4982 = vsub.f32 %v4802, %v4974
    %v4983 = vsub.f32 %v4884, %v4977
    %v4984 = vsub.f32 %v4966, %v4980
    %v4985 = vmul.f32 %v4981, 1.442695
    %v4986 = vpow.pop %v4985
    %v4987 = vmul.f32 %v4982, 1.442695
    %v4988 = vpow.pop %v4987
    %v4989 = vmul.f32 %v4983, 1.442695
    %v4990 = vpow.pop %v4989
    %v4991 = vmul.f32 %v4984, 1.442695
    %v4992 = vpow.pop %v4991
    %v4993 = vsel %vm1848, %v4986, 0.0
    %4994 = vadd.xlane.f32.xlu0 %v4993
    %v4995 = vpop.xlane.xlu0 %4994
    %v4996 = vsel %vm1848, %v4988, 0.0
    %4997 = vadd.xlane.f32.xlu0 %v4996
    %v4998 = vpop.xlane.xlu0 %4997
    %v4999 = vsel %vm1848, %v4990, 0.0
    %5000 = vadd.xlane.f32.xlu0 %v4999
    %v5001 = vpop.xlane.xlu0 %5000
    %v5002 = vsel %vm1848, %v4992, 0.0
    %5003 = vadd.xlane.f32.xlu0 %v5002
    %v5004 = vpop.xlane.xlu0 %5003
    %v5005 = vrcp.pop %v4995
    %v5006 = vrcp.pop %v4998
    %v5007 = vrcp.pop %v5001
    %v5008 = vrcp.pop %v5004
    %v5009 = vmul.f32 %v4986, %v5005
    %v5010 = vmul.f32 %v4988, %v5006
    %v5011 = vmul.f32 %v4990, %v5007
    %v5012 = vmul.f32 %v4992, %v5008
    %v5014 = vsel %vm1848, %v5009, 0
    %v5017 = vsel %vm2396, %v3898, 0
    %5019 = vmatprep.subr.mxu0 0.0
    %5020 = vmatpush1.msra.mxu0 %v3888
    %5021 = vmatprep.subr.mxu0 0.0
    %5022 = vmatpush1.msra.mxu0 %v3893
    %5023 = vmatprep.subr.mxu0 0.0
    %5024 = vmatpush1.msra.mxu0 %v5017
    %5025 = vmatprep.subr.mxu0 0.0
    %5026 = vmatpush1.msra.mxu0 0.0
    %5027 = vmatprep.subr.mxu0 0.0
    %5028 = vmatpush1.msra.mxu0 0.0
    %5029 = vmatprep.subr.mxu0 0.0
    %5030 = vmatpush1.msra.mxu0 0.0
    %5031 = vmatprep.subr.mxu0 0.0
    %5032 = vmatpush1.msra.mxu0 0.0
    %5033 = vmatprep.subr.mxu0 0.0
    %5034 = vmatpush1.msra.mxu0 0.0
    %5035 = vmatprep.subr.mxu0 0.0
    %5036 = vmatpush1.msra.mxu0 0.0
    %5037 = vmatprep.subr.mxu0 0.0
    %5038 = vmatpush1.msra.mxu0 0.0
    %5039 = vmatprep.subr.mxu0 0.0
    %5040 = vmatpush1.msra.mxu0 0.0
    %5041 = vmatprep.subr.mxu0 0.0
    %5042 = vmatpush1.msra.mxu0 0.0
    %5043 = vmatprep.subr.mxu0 0.0
    %5044 = vmatpush1.msra.mxu0 0.0
    %5045 = vmatprep.subr.mxu0 0.0
    %5046 = vmatpush1.msra.mxu0 0.0
    %5047 = vmatprep.subr.mxu0 0.0
    %5048 = vmatpush1.msra.mxu0 0.0
    %5049 = vmatprep.subr.mxu0 0.0
    %5050 = vmatpush1.msra.mxu0 0.0
    %5051 = vmatprep.subr.mxu0 0.0
    %5052 = vmatpush1.msra.mxu0 0.0
    %5053 = vmatprep.subr.mxu0 0.0
    %5054 = vmatpush1.msra.mxu0 0.0
    %5055 = vmatprep.subr.mxu0 0.0
    %5056 = vmatpush1.msra.mxu0 0.0
    %5057 = vmatprep.subr.mxu0 0.0
    %5058 = vmatpush1.msra.mxu0 0.0
    %5059 = vmatprep.subr.mxu0 0.0
    %5060 = vmatpush1.msra.mxu0 0.0
    %5061 = vmatprep.subr.mxu0 0.0
    %5062 = vmatpush1.msra.mxu0 0.0
    %5063 = vmatprep.subr.mxu0 0.0
    %5064 = vmatpush1.msra.mxu0 0.0
    %5065 = vmatprep.subr.mxu0 0.0
    %5066 = vmatpush1.msra.mxu0 0.0
    %5067 = vmatprep.subr.mxu0 0.0
    %5068 = vmatpush1.msra.mxu0 0.0
    %5069 = vmatprep.subr.mxu0 0.0
    %5070 = vmatpush1.msra.mxu0 0.0
    %5071 = vmatprep.subr.mxu0 0.0
    %5072 = vmatpush1.msra.mxu0 0.0
    %5073 = vmatprep.subr.mxu0 0.0
    %5074 = vmatpush1.msra.mxu0 0.0
    %5075 = vmatprep.subr.mxu0 0.0
    %5076 = vmatpush1.msra.mxu0 0.0
    %5077 = vmatprep.subr.mxu0 0.0
    %5078 = vmatpush1.msra.mxu0 0.0
    %5079 = vmatprep.subr.mxu0 0.0
    %5080 = vmatpush1.msra.mxu0 0.0
    %5081 = vmatprep.subr.mxu0 0.0
    %5082 = vmatpush1.msra.mxu0 0.0
    %5083 = vmatprep.mubr.f32.mxu0 0.0
    %5084 = vmatmul.mubr.f32.gmra.mrb[0].mxu0 %v5014
    %v5085 = vpop.f32.mrb[0].mxu0
    %v5086 = vadd.f32 0.0, %v5085
    %v5087 = vpop.f32.mrb[0].mxu0
    %5088 = vdwg.mxu0
    %v5090 = vsel %vm1848, %v5010, 0
    %v5093 = vsel %vm2396, %v3978, 0
    %5095 = vmatprep.subr.mxu0 0.0
    %5096 = vmatpush1.msra.mxu0 %v3968
    %5097 = vmatprep.subr.mxu0 0.0
    %5098 = vmatpush1.msra.mxu0 %v3973
    %5099 = vmatprep.subr.mxu0 0.0
    %5100 = vmatpush1.msra.mxu0 %v5093
    %5101 = vmatprep.subr.mxu0 0.0
    %5102 = vmatpush1.msra.mxu0 0.0
    %5103 = vmatprep.subr.mxu0 0.0
    %5104 = vmatpush1.msra.mxu0 0.0
    %5105 = vmatprep.subr.mxu0 0.0
    %5106 = vmatpush1.msra.mxu0 0.0
    %5107 = vmatprep.subr.mxu0 0.0
    %5108 = vmatpush1.msra.mxu0 0.0
    %5109 = vmatprep.subr.mxu0 0.0
    %5110 = vmatpush1.msra.mxu0 0.0
    %5111 = vmatprep.subr.mxu0 0.0
    %5112 = vmatpush1.msra.mxu0 0.0
    %5113 = vmatprep.subr.mxu0 0.0
    %5114 = vmatpush1.msra.mxu0 0.0
    %5115 = vmatprep.subr.mxu0 0.0
    %5116 = vmatpush1.msra.mxu0 0.0
    %5117 = vmatprep.subr.mxu0 0.0
    %5118 = vmatpush1.msra.mxu0 0.0
    %5119 = vmatprep.subr.mxu0 0.0
    %5120 = vmatpush1.msra.mxu0 0.0
    %5121 = vmatprep.subr.mxu0 0.0
    %5122 = vmatpush1.msra.mxu0 0.0
    %5123 = vmatprep.subr.mxu0 0.0
    %5124 = vmatpush1.msra.mxu0 0.0
    %5125 = vmatprep.subr.mxu0 0.0
    %5126 = vmatpush1.msra.mxu0 0.0
    %5127 = vmatprep.subr.mxu0 0.0
    %5128 = vmatpush1.msra.mxu0 0.0
    %5129 = vmatprep.subr.mxu0 0.0
    %5130 = vmatpush1.msra.mxu0 0.0
    %5131 = vmatprep.subr.mxu0 0.0
    %5132 = vmatpush1.msra.mxu0 0.0
    %5133 = vmatprep.subr.mxu0 0.0
    %5134 = vmatpush1.msra.mxu0 0.0
    %5135 = vmatprep.subr.mxu0 0.0
    %5136 = vmatpush1.msra.mxu0 0.0
    %5137 = vmatprep.subr.mxu0 0.0
    %5138 = vmatpush1.msra.mxu0 0.0
    %5139 = vmatprep.subr.mxu0 0.0
    %5140 = vmatpush1.msra.mxu0 0.0
    %5141 = vmatprep.subr.mxu0 0.0
    %5142 = vmatpush1.msra.mxu0 0.0
    %5143 = vmatprep.subr.mxu0 0.0
    %5144 = vmatpush1.msra.mxu0 0.0
    %5145 = vmatprep.subr.mxu0 0.0
    %5146 = vmatpush1.msra.mxu0 0.0
    %5147 = vmatprep.subr.mxu0 0.0
    %5148 = vmatpush1.msra.mxu0 0.0
    %5149 = vmatprep.subr.mxu0 0.0
    %5150 = vmatpush1.msra.mxu0 0.0
    %5151 = vmatprep.subr.mxu0 0.0
    %5152 = vmatpush1.msra.mxu0 0.0
    %5153 = vmatprep.subr.mxu0 0.0
    %5154 = vmatpush1.msra.mxu0 0.0
    %5155 = vmatprep.subr.mxu0 0.0
    %5156 = vmatpush1.msra.mxu0 0.0
    %5157 = vmatprep.subr.mxu0 0.0
    %5158 = vmatpush1.msra.mxu0 0.0
    %5159 = vmatprep.mubr.f32.mxu0 0.0
    %5160 = vmatmul.mubr.f32.gmra.mrb[0].mxu0 %v5090
    %v5161 = vpop.f32.mrb[0].mxu0
    %v5162 = vadd.f32 0.0, %v5161
    %v5163 = vpop.f32.mrb[0].mxu0
    %5164 = vdwg.mxu0
    %v5166 = vsel %vm1848, %v5011, 0
    %v5169 = vsel %vm2396, %v4058, 0
    %5171 = vmatprep.subr.mxu0 0.0
    %5172 = vmatpush1.msra.mxu0 %v4048
    %5173 = vmatprep.subr.mxu0 0.0
    %5174 = vmatpush1.msra.mxu0 %v4053
    %5175 = vmatprep.subr.mxu0 0.0
    %5176 = vmatpush1.msra.mxu0 %v5169
    %5177 = vmatprep.subr.mxu0 0.0
    %5178 = vmatpush1.msra.mxu0 0.0
    %5179 = vmatprep.subr.mxu0 0.0
    %5180 = vmatpush1.msra.mxu0 0.0
    %5181 = vmatprep.subr.mxu0 0.0
    %5182 = vmatpush1.msra.mxu0 0.0
    %5183 = vmatprep.subr.mxu0 0.0
    %5184 = vmatpush1.msra.mxu0 0.0
    %5185 = vmatprep.subr.mxu0 0.0
    %5186 = vmatpush1.msra.mxu0 0.0
    %5187 = vmatprep.subr.mxu0 0.0
    %5188 = vmatpush1.msra.mxu0 0.0
    %5189 = vmatprep.subr.mxu0 0.0
    %5190 = vmatpush1.msra.mxu0 0.0
    %5191 = vmatprep.subr.mxu0 0.0
    %5192 = vmatpush1.msra.mxu0 0.0
    %5193 = vmatprep.subr.mxu0 0.0
    %5194 = vmatpush1.msra.mxu0 0.0
    %5195 = vmatprep.subr.mxu0 0.0
    %5196 = vmatpush1.msra.mxu0 0.0
    %5197 = vmatprep.subr.mxu0 0.0
    %5198 = vmatpush1.msra.mxu0 0.0
    %5199 = vmatprep.subr.mxu0 0.0
    %5200 = vmatpush1.msra.mxu0 0.0
    %5201 = vmatprep.subr.mxu0 0.0
    %5202 = vmatpush1.msra.mxu0 0.0
    %5203 = vmatprep.subr.mxu0 0.0
    %5204 = vmatpush1.msra.mxu0 0.0
    %5205 = vmatprep.subr.mxu0 0.0
    %5206 = vmatpush1.msra.mxu0 0.0
    %5207 = vmatprep.subr.mxu0 0.0
    %5208 = vmatpush1.msra.mxu0 0.0
    %5209 = vmatprep.subr.mxu0 0.0
    %5210 = vmatpush1.msra.mxu0 0.0
    %5211 = vmatprep.subr.mxu0 0.0
    %5212 = vmatpush1.msra.mxu0 0.0
    %5213 = vmatprep.subr.mxu0 0.0
    %5214 = vmatpush1.msra.mxu0 0.0
    %5215 = vmatprep.subr.mxu0 0.0
    %5216 = vmatpush1.msra.mxu0 0.0
    %5217 = vmatprep.subr.mxu0 0.0
    %5218 = vmatpush1.msra.mxu0 0.0
    %5219 = vmatprep.subr.mxu0 0.0
    %5220 = vmatpush1.msra.mxu0 0.0
    %5221 = vmatprep.subr.mxu0 0.0
    %5222 = vmatpush1.msra.mxu0 0.0
    %5223 = vmatprep.subr.mxu0 0.0
    %5224 = vmatpush1.msra.mxu0 0.0
    %5225 = vmatprep.subr.mxu0 0.0
    %5226 = vmatpush1.msra.mxu0 0.0
    %5227 = vmatprep.subr.mxu0 0.0
    %5228 = vmatpush1.msra.mxu0 0.0
    %5229 = vmatprep.subr.mxu0 0.0
    %5230 = vmatpush1.msra.mxu0 0.0
    %5231 = vmatprep.subr.mxu0 0.0
    %5232 = vmatpush1.msra.mxu0 0.0
    %5233 = vmatprep.subr.mxu0 0.0
    %5234 = vmatpush1.msra.mxu0 0.0
    %5235 = vmatprep.mubr.f32.mxu0 0.0
    %5236 = vmatmul.mubr.f32.gmra.mrb[0].mxu0 %v5166
    %v5237 = vpop.f32.mrb[0].mxu0
    %v5238 = vadd.f32 0.0, %v5237
    %v5239 = vpop.f32.mrb[0].mxu0
    %5240 = vdwg.mxu0
    %v5242 = vsel %vm1848, %v5012, 0
    %v5245 = vsel %vm2396, %v4138, 0
    %5247 = vmatprep.subr.mxu0 0.0
    %5248 = vmatpush1.msra.mxu0 %v4128
    %5249 = vmatprep.subr.mxu0 0.0
    %5250 = vmatpush1.msra.mxu0 %v4133
    %5251 = vmatprep.subr.mxu0 0.0
    %5252 = vmatpush1.msra.mxu0 %v5245
    %5253 = vmatprep.subr.mxu0 0.0
    %5254 = vmatpush1.msra.mxu0 0.0
    %5255 = vmatprep.subr.mxu0 0.0
    %5256 = vmatpush1.msra.mxu0 0.0
    %5257 = vmatprep.subr.mxu0 0.0
    %5258 = vmatpush1.msra.mxu0 0.0
    %5259 = vmatprep.subr.mxu0 0.0
    %5260 = vmatpush1.msra.mxu0 0.0
    %5261 = vmatprep.subr.mxu0 0.0
    %5262 = vmatpush1.msra.mxu0 0.0
    %5263 = vmatprep.subr.mxu0 0.0
    %5264 = vmatpush1.msra.mxu0 0.0
    %5265 = vmatprep.subr.mxu0 0.0
    %5266 = vmatpush1.msra.mxu0 0.0
    %5267 = vmatprep.subr.mxu0 0.0
    %5268 = vmatpush1.msra.mxu0 0.0
    %5269 = vmatprep.subr.mxu0 0.0
    %5270 = vmatpush1.msra.mxu0 0.0
    %5271 = vmatprep.subr.mxu0 0.0
    %5272 = vmatpush1.msra.mxu0 0.0
    %5273 = vmatprep.subr.mxu0 0.0
    %5274 = vmatpush1.msra.mxu0 0.0
    %5275 = vmatprep.subr.mxu0 0.0
    %5276 = vmatpush1.msra.mxu0 0.0
    %5277 = vmatprep.subr.mxu0 0.0
    %5278 = vmatpush1.msra.mxu0 0.0
    %5279 = vmatprep.subr.mxu0 0.0
    %5280 = vmatpush1.msra.mxu0 0.0
    %5281 = vmatprep.subr.mxu0 0.0
    %5282 = vmatpush1.msra.mxu0 0.0
    %5283 = vmatprep.subr.mxu0 0.0
    %5284 = vmatpush1.msra.mxu0 0.0
    %5285 = vmatprep.subr.mxu0 0.0
    %5286 = vmatpush1.msra.mxu0 0.0
    %5287 = vmatprep.subr.mxu0 0.0
    %5288 = vmatpush1.msra.mxu0 0.0
    %5289 = vmatprep.subr.mxu0 0.0
    %5290 = vmatpush1.msra.mxu0 0.0
    %5291 = vmatprep.subr.mxu0 0.0
    %5292 = vmatpush1.msra.mxu0 0.0
    %5293 = vmatprep.subr.mxu0 0.0
    %5294 = vmatpush1.msra.mxu0 0.0
    %5295 = vmatprep.subr.mxu0 0.0
    %5296 = vmatpush1.msra.mxu0 0.0
    %5297 = vmatprep.subr.mxu0 0.0
    %5298 = vmatpush1.msra.mxu0 0.0
    %5299 = vmatprep.subr.mxu0 0.0
    %5300 = vmatpush1.msra.mxu0 0.0
    %5301 = vmatprep.subr.mxu0 0.0
    %5302 = vmatpush1.msra.mxu0 0.0
    %5303 = vmatprep.subr.mxu0 0.0
    %5304 = vmatpush1.msra.mxu0 0.0
    %5305 = vmatprep.subr.mxu0 0.0
    %5306 = vmatpush1.msra.mxu0 0.0
    %5307 = vmatprep.subr.mxu0 0.0
    %5308 = vmatpush1.msra.mxu0 0.0
    %5309 = vmatprep.subr.mxu0 0.0
    %5310 = vmatpush1.msra.mxu0 0.0
    %5311 = vmatprep.mubr.f32.mxu0 0.0
    %5312 = vmatmul.mubr.f32.gmra.mrb[0].mxu0 %v5242
    %v5313 = vpop.f32.mrb[0].mxu0
    %v5314 = vadd.f32 0.0, %v5313
    %v5315 = vpop.f32.mrb[0].mxu0
    %5316 = vdwg.mxu0
    %v5318 = vsel %vm1491, %v5086, 0
    %5320 = vmatprep.subr.mxu0 0.0
    %5321 = vmatpush1.msra.mxu0 %v115
    %5322 = vmatprep.subr.mxu0 0.0
    %5323 = vmatpush1.msra.mxu0 0.0
    %5324 = vmatprep.subr.mxu0 0.0
    %5325 = vmatpush1.msra.mxu0 0.0
    %5326 = vmatprep.subr.mxu0 0.0
    %5327 = vmatpush1.msra.mxu0 0.0
    %5328 = vmatprep.subr.mxu0 0.0
    %5329 = vmatpush1.msra.mxu0 0.0
    %5330 = vmatprep.subr.mxu0 0.0
    %5331 = vmatpush1.msra.mxu0 0.0
    %5332 = vmatprep.subr.mxu0 0.0
    %5333 = vmatpush1.msra.mxu0 0.0
    %5334 = vmatprep.subr.mxu0 0.0
    %5335 = vmatpush1.msra.mxu0 0.0
    %5336 = vmatprep.subr.mxu0 0.0
    %5337 = vmatpush1.msra.mxu0 0.0
    %5338 = vmatprep.subr.mxu0 0.0
    %5339 = vmatpush1.msra.mxu0 0.0
    %5340 = vmatprep.subr.mxu0 0.0
    %5341 = vmatpush1.msra.mxu0 0.0
    %5342 = vmatprep.subr.mxu0 0.0
    %5343 = vmatpush1.msra.mxu0 0.0
    %5344 = vmatprep.subr.mxu0 0.0
    %5345 = vmatpush1.msra.mxu0 0.0
    %5346 = vmatprep.subr.mxu0 0.0
    %5347 = vmatpush1.msra.mxu0 0.0
    %5348 = vmatprep.subr.mxu0 0.0
    %5349 = vmatpush1.msra.mxu0 0.0
    %5350 = vmatprep.subr.mxu0 0.0
    %5351 = vmatpush1.msra.mxu0 0.0
    %5352 = vmatprep.subr.mxu0 0.0
    %5353 = vmatpush1.msra.mxu0 0.0
    %5354 = vmatprep.subr.mxu0 0.0
    %5355 = vmatpush1.msra.mxu0 0.0
    %5356 = vmatprep.subr.mxu0 0.0
    %5357 = vmatpush1.msra.mxu0 0.0
    %5358 = vmatprep.subr.mxu0 0.0
    %5359 = vmatpush1.msra.mxu0 0.0
    %5360 = vmatprep.subr.mxu0 0.0
    %5361 = vmatpush1.msra.mxu0 0.0
    %5362 = vmatprep.subr.mxu0 0.0
    %5363 = vmatpush1.msra.mxu0 0.0
    %5364 = vmatprep.subr.mxu0 0.0
    %5365 = vmatpush1.msra.mxu0 0.0
    %5366 = vmatprep.subr.mxu0 0.0
    %5367 = vmatpush1.msra.mxu0 0.0
    %5368 = vmatprep.subr.mxu0 0.0
    %5369 = vmatpush1.msra.mxu0 0.0
    %5370 = vmatprep.subr.mxu0 0.0
    %5371 = vmatpush1.msra.mxu0 0.0
    %5372 = vmatprep.subr.mxu0 0.0
    %5373 = vmatpush1.msra.mxu0 0.0
    %5374 = vmatprep.subr.mxu0 0.0
    %5375 = vmatpush1.msra.mxu0 0.0
    %5376 = vmatprep.subr.mxu0 0.0
    %5377 = vmatpush1.msra.mxu0 0.0
    %5378 = vmatprep.subr.mxu0 0.0
    %5379 = vmatpush1.msra.mxu0 0.0
    %5380 = vmatprep.subr.mxu0 0.0
    %5381 = vmatpush1.msra.mxu0 0.0
    %5382 = vmatprep.subr.mxu0 0.0
    %5383 = vmatpush1.msra.mxu0 0.0
    %5384 = vmatprep.mubr.f32.mxu0 0.0
    %5385 = vmatmul.mubr.f32.gmra.mrb[0].mxu0 %v5318
    %v5386 = vpop.f32.mrb[0].mxu0
    %v5387 = vadd.f32 0.0, %v5386
    %v5388 = vpop.f32.mrb[0].mxu0
    %5389 = vdwg.mxu0
    %v5391 = vsel %vm1491, %v5162, 0
    %5393 = vmatprep.subr.mxu0 0.0
    %5394 = vmatpush1.msra.mxu0 %v116
    %5395 = vmatprep.subr.mxu0 0.0
    %5396 = vmatpush1.msra.mxu0 0.0
    %5397 = vmatprep.subr.mxu0 0.0
    %5398 = vmatpush1.msra.mxu0 0.0
    %5399 = vmatprep.subr.mxu0 0.0
    %5400 = vmatpush1.msra.mxu0 0.0
    %5401 = vmatprep.subr.mxu0 0.0
    %5402 = vmatpush1.msra.mxu0 0.0
    %5403 = vmatprep.subr.mxu0 0.0
    %5404 = vmatpush1.msra.mxu0 0.0
    %5405 = vmatprep.subr.mxu0 0.0
    %5406 = vmatpush1.msra.mxu0 0.0
    %5407 = vmatprep.subr.mxu0 0.0
    %5408 = vmatpush1.msra.mxu0 0.0
    %5409 = vmatprep.subr.mxu0 0.0
    %5410 = vmatpush1.msra.mxu0 0.0
    %5411 = vmatprep.subr.mxu0 0.0
    %5412 = vmatpush1.msra.mxu0 0.0
    %5413 = vmatprep.subr.mxu0 0.0
    %5414 = vmatpush1.msra.mxu0 0.0
    %5415 = vmatprep.subr.mxu0 0.0
    %5416 = vmatpush1.msra.mxu0 0.0
    %5417 = vmatprep.subr.mxu0 0.0
    %5418 = vmatpush1.msra.mxu0 0.0
    %5419 = vmatprep.subr.mxu0 0.0
    %5420 = vmatpush1.msra.mxu0 0.0
    %5421 = vmatprep.subr.mxu0 0.0
    %5422 = vmatpush1.msra.mxu0 0.0
    %5423 = vmatprep.subr.mxu0 0.0
    %5424 = vmatpush1.msra.mxu0 0.0
    %5425 = vmatprep.subr.mxu0 0.0
    %5426 = vmatpush1.msra.mxu0 0.0
    %5427 = vmatprep.subr.mxu0 0.0
    %5428 = vmatpush1.msra.mxu0 0.0
    %5429 = vmatprep.subr.mxu0 0.0
    %5430 = vmatpush1.msra.mxu0 0.0
    %5431 = vmatprep.subr.mxu0 0.0
    %5432 = vmatpush1.msra.mxu0 0.0
    %5433 = vmatprep.subr.mxu0 0.0
    %5434 = vmatpush1.msra.mxu0 0.0
    %5435 = vmatprep.subr.mxu0 0.0
    %5436 = vmatpush1.msra.mxu0 0.0
    %5437 = vmatprep.subr.mxu0 0.0
    %5438 = vmatpush1.msra.mxu0 0.0
    %5439 = vmatprep.subr.mxu0 0.0
    %5440 = vmatpush1.msra.mxu0 0.0
    %5441 = vmatprep.subr.mxu0 0.0
    %5442 = vmatpush1.msra.mxu0 0.0
    %5443 = vmatprep.subr.mxu0 0.0
    %5444 = vmatpush1.msra.mxu0 0.0
    %5445 = vmatprep.subr.mxu0 0.0
    %5446 = vmatpush1.msra.mxu0 0.0
    %5447 = vmatprep.subr.mxu0 0.0
    %5448 = vmatpush1.msra.mxu0 0.0
    %5449 = vmatprep.subr.mxu0 0.0
    %5450 = vmatpush1.msra.mxu0 0.0
    %5451 = vmatprep.subr.mxu0 0.0
    %5452 = vmatpush1.msra.mxu0 0.0
    %5453 = vmatprep.subr.mxu0 0.0
    %5454 = vmatpush1.msra.mxu0 0.0
    %5455 = vmatprep.subr.mxu0 0.0
    %5456 = vmatpush1.msra.mxu0 0.0
    %5457 = vmatprep.mubr.f32.mxu0 0.0
    %5458 = vmatmul.mubr.f32.gmra.mrb[0].mxu0 %v5391
    %v5459 = vpop.f32.mrb[0].mxu0
    %v5460 = vadd.f32 0.0, %v5459
    %v5461 = vpop.f32.mrb[0].mxu0
    %5462 = vdwg.mxu0
    %v5464 = vsel %vm1491, %v5238, 0
    %5466 = vmatprep.subr.mxu0 0.0
    %5467 = vmatpush1.msra.mxu0 %v117
    %5468 = vmatprep.subr.mxu0 0.0
    %5469 = vmatpush1.msra.mxu0 0.0
    %5470 = vmatprep.subr.mxu0 0.0
    %5471 = vmatpush1.msra.mxu0 0.0
    %5472 = vmatprep.subr.mxu0 0.0
    %5473 = vmatpush1.msra.mxu0 0.0
    %5474 = vmatprep.subr.mxu0 0.0
    %5475 = vmatpush1.msra.mxu0 0.0
    %5476 = vmatprep.subr.mxu0 0.0
    %5477 = vmatpush1.msra.mxu0 0.0
    %5478 = vmatprep.subr.mxu0 0.0
    %5479 = vmatpush1.msra.mxu0 0.0
    %5480 = vmatprep.subr.mxu0 0.0
    %5481 = vmatpush1.msra.mxu0 0.0
    %5482 = vmatprep.subr.mxu0 0.0
    %5483 = vmatpush1.msra.mxu0 0.0
    %5484 = vmatprep.subr.mxu0 0.0
    %5485 = vmatpush1.msra.mxu0 0.0
    %5486 = vmatprep.subr.mxu0 0.0
    %5487 = vmatpush1.msra.mxu0 0.0
    %5488 = vmatprep.subr.mxu0 0.0
    %5489 = vmatpush1.msra.mxu0 0.0
    %5490 = vmatprep.subr.mxu0 0.0
    %5491 = vmatpush1.msra.mxu0 0.0
    %5492 = vmatprep.subr.mxu0 0.0
    %5493 = vmatpush1.msra.mxu0 0.0
    %5494 = vmatprep.subr.mxu0 0.0
    %5495 = vmatpush1.msra.mxu0 0.0
    %5496 = vmatprep.subr.mxu0 0.0
    %5497 = vmatpush1.msra.mxu0 0.0
    %5498 = vmatprep.subr.mxu0 0.0
    %5499 = vmatpush1.msra.mxu0 0.0
    %5500 = vmatprep.subr.mxu0 0.0
    %5501 = vmatpush1.msra.mxu0 0.0
    %5502 = vmatprep.subr.mxu0 0.0
    %5503 = vmatpush1.msra.mxu0 0.0
    %5504 = vmatprep.subr.mxu0 0.0
    %5505 = vmatpush1.msra.mxu0 0.0
    %5506 = vmatprep.subr.mxu0 0.0
    %5507 = vmatpush1.msra.mxu0 0.0
    %5508 = vmatprep.subr.mxu0 0.0
    %5509 = vmatpush1.msra.mxu0 0.0
    %5510 = vmatprep.subr.mxu0 0.0
    %5511 = vmatpush1.msra.mxu0 0.0
    %5512 = vmatprep.subr.mxu0 0.0
    %5513 = vmatpush1.msra.mxu0 0.0
    %5514 = vmatprep.subr.mxu0 0.0
    %5515 = vmatpush1.msra.mxu0 0.0
    %5516 = vmatprep.subr.mxu0 0.0
    %5517 = vmatpush1.msra.mxu0 0.0
    %5518 = vmatprep.subr.mxu0 0.0
    %5519 = vmatpush1.msra.mxu0 0.0
    %5520 = vmatprep.subr.mxu0 0.0
    %5521 = vmatpush1.msra.mxu0 0.0
    %5522 = vmatprep.subr.mxu0 0.0
    %5523 = vmatpush1.msra.mxu0 0.0
    %5524 = vmatprep.subr.mxu0 0.0
    %5525 = vmatpush1.msra.mxu0 0.0
    %5526 = vmatprep.subr.mxu0 0.0
    %5527 = vmatpush1.msra.mxu0 0.0
    %5528 = vmatprep.subr.mxu0 0.0
    %5529 = vmatpush1.msra.mxu0 0.0
    %5530 = vmatprep.mubr.f32.mxu0 0.0
    %5531 = vmatmul.mubr.f32.gmra.mrb[0].mxu0 %v5464
    %v5532 = vpop.f32.mrb[0].mxu0
    %v5533 = vadd.f32 0.0, %v5532
    %v5534 = vpop.f32.mrb[0].mxu0
    %5535 = vdwg.mxu0
    %v5537 = vsel %vm1491, %v5314, 0
    %5539 = vmatprep.subr.mxu0 0.0
    %5540 = vmatpush1.msra.mxu0 %v118
    %5541 = vmatprep.subr.mxu0 0.0
    %5542 = vmatpush1.msra.mxu0 0.0
    %5543 = vmatprep.subr.mxu0 0.0
    %5544 = vmatpush1.msra.mxu0 0.0
    %5545 = vmatprep.subr.mxu0 0.0
    %5546 = vmatpush1.msra.mxu0 0.0
    %5547 = vmatprep.subr.mxu0 0.0
    %5548 = vmatpush1.msra.mxu0 0.0
    %5549 = vmatprep.subr.mxu0 0.0
    %5550 = vmatpush1.msra.mxu0 0.0
    %5551 = vmatprep.subr.mxu0 0.0
    %5552 = vmatpush1.msra.mxu0 0.0
    %5553 = vmatprep.subr.mxu0 0.0
    %5554 = vmatpush1.msra.mxu0 0.0
    %5555 = vmatprep.subr.mxu0 0.0
    %5556 = vmatpush1.msra.mxu0 0.0
    %5557 = vmatprep.subr.mxu0 0.0
    %5558 = vmatpush1.msra.mxu0 0.0
    %5559 = vmatprep.subr.mxu0 0.0
    %5560 = vmatpush1.msra.mxu0 0.0
    %5561 = vmatprep.subr.mxu0 0.0
    %5562 = vmatpush1.msra.mxu0 0.0
    %5563 = vmatprep.subr.mxu0 0.0
    %5564 = vmatpush1.msra.mxu0 0.0
    %5565 = vmatprep.subr.mxu0 0.0
    %5566 = vmatpush1.msra.mxu0 0.0
    %5567 = vmatprep.subr.mxu0 0.0
    %5568 = vmatpush1.msra.mxu0 0.0
    %5569 = vmatprep.subr.mxu0 0.0
    %5570 = vmatpush1.msra.mxu0 0.0
    %5571 = vmatprep.subr.mxu0 0.0
    %5572 = vmatpush1.msra.mxu0 0.0
    %5573 = vmatprep.subr.mxu0 0.0
    %5574 = vmatpush1.msra.mxu0 0.0
    %5575 = vmatprep.subr.mxu0 0.0
    %5576 = vmatpush1.msra.mxu0 0.0
    %5577 = vmatprep.subr.mxu0 0.0
    %5578 = vmatpush1.msra.mxu0 0.0
    %5579 = vmatprep.subr.mxu0 0.0
    %5580 = vmatpush1.msra.mxu0 0.0
    %5581 = vmatprep.subr.mxu0 0.0
    %5582 = vmatpush1.msra.mxu0 0.0
    %5583 = vmatprep.subr.mxu0 0.0
    %5584 = vmatpush1.msra.mxu0 0.0
    %5585 = vmatprep.subr.mxu0 0.0
    %5586 = vmatpush1.msra.mxu0 0.0
    %5587 = vmatprep.subr.mxu0 0.0
    %5588 = vmatpush1.msra.mxu0 0.0
    %5589 = vmatprep.subr.mxu0 0.0
    %5590 = vmatpush1.msra.mxu0 0.0
    %5591 = vmatprep.subr.mxu0 0.0
    %5592 = vmatpush1.msra.mxu0 0.0
    %5593 = vmatprep.subr.mxu0 0.0
    %5594 = vmatpush1.msra.mxu0 0.0
    %5595 = vmatprep.subr.mxu0 0.0
    %5596 = vmatpush1.msra.mxu0 0.0
    %5597 = vmatprep.subr.mxu0 0.0
    %5598 = vmatpush1.msra.mxu0 0.0
    %5599 = vmatprep.subr.mxu0 0.0
    %5600 = vmatpush1.msra.mxu0 0.0
    %5601 = vmatprep.subr.mxu0 0.0
    %5602 = vmatpush1.msra.mxu0 0.0
    %5603 = vmatprep.mubr.f32.mxu0 0.0
    %5604 = vmatmul.mubr.f32.gmra.mrb[0].mxu0 %v5537
    %v5605 = vpop.f32.mrb[0].mxu0
    %v5606 = vadd.f32 0.0, %v5605
    %v5607 = vpop.f32.mrb[0].mxu0
    %5608 = vdwg.mxu0
    %v5609 = vsel %vm198, %v5387, 0.0
    %v5610 = vsel %vm198, %v5460, 0.0
    %v5611 = vadd.f32 %v5609, %v5610
    %v5612 = vsel %vm198, %v5533, 0.0
    %v5613 = vadd.f32 %v5611, %v5612
    %v5614 = vsel %vm198, %v5606, 0.0
    %v5615 = vadd.f32 %v5613, %v5614
    %v5616 = vadd.f32 %v3204, %v5615
    %v5617 = vsel %vm198, %v5616, 0.0
    %5618 = vadd.xlane.f32.xlu0 %v5617
    %v5619 = vpop.xlane.xlu0 %5618
    %v5620 = vmul.f32 %v5619, %v3001
    %v5621 = vsub.f32 %v5616, %v5620
    %v5622 = vmul.f32 %v5621, %v5621
    %v5623 = vsel %vm198, %v5622, 0.0
    %5624 = vadd.xlane.f32.xlu0 %v5623
    %v5625 = vpop.xlane.xlu0 %5624
    %v5626 = vmul.f32 %v5625, %v3001
    %v5627 = vadd.f32 %v5626, 1e-05
    %v5628 = vrsqrt.pop %v5627
    %v5629 = vmul.f32 %v5621, %v5628
    %v5630 = vmul.f32 %v5629, %v3015
    %v5631 = vadd.f32 %v5630, %v3020
    %v5633 = vsel %vm198, %v5631, 0
    %5635 = vmatprep.subr.mxu0 0.0
    %5636 = vmatpush1.msra.mxu0 %v119
    %5637 = vmatprep.subr.mxu0 0.0
    %5638 = vmatpush1.msra.mxu0 %v120
    %5639 = vmatprep.subr.mxu0 0.0
    %5640 = vmatpush1.msra.mxu0 %v121
    %5641 = vmatprep.subr.mxu0 0.0
    %5642 = vmatpush1.msra.mxu0 %v122
    %5643 = vmatprep.subr.mxu0 0.0
    %5644 = vmatpush1.msra.mxu0 0.0
    %5645 = vmatprep.subr.mxu0 0.0
    %5646 = vmatpush1.msra.mxu0 0.0
    %5647 = vmatprep.subr.mxu0 0.0
    %5648 = vmatpush1.msra.mxu0 0.0
    %5649 = vmatprep.subr.mxu0 0.0
    %5650 = vmatpush1.msra.mxu0 0.0
    %5651 = vmatprep.subr.mxu0 0.0
    %5652 = vmatpush1.msra.mxu0 0.0
    %5653 = vmatprep.subr.mxu0 0.0
    %5654 = vmatpush1.msra.mxu0 0.0
    %5655 = vmatprep.subr.mxu0 0.0
    %5656 = vmatpush1.msra.mxu0 0.0
    %5657 = vmatprep.subr.mxu0 0.0
    %5658 = vmatpush1.msra.mxu0 0.0
    %5659 = vmatprep.subr.mxu0 0.0
    %5660 = vmatpush1.msra.mxu0 0.0
    %5661 = vmatprep.subr.mxu0 0.0
    %5662 = vmatpush1.msra.mxu0 0.0
    %5663 = vmatprep.subr.mxu0 0.0
    %5664 = vmatpush1.msra.mxu0 0.0
    %5665 = vmatprep.subr.mxu0 0.0
    %5666 = vmatpush1.msra.mxu0 0.0
    %5667 = vmatprep.subr.mxu0 0.0
    %5668 = vmatpush1.msra.mxu0 0.0
    %5669 = vmatprep.subr.mxu0 0.0
    %5670 = vmatpush1.msra.mxu0 0.0
    %5671 = vmatprep.subr.mxu0 0.0
    %5672 = vmatpush1.msra.mxu0 0.0
    %5673 = vmatprep.subr.mxu0 0.0
    %5674 = vmatpush1.msra.mxu0 0.0
    %5675 = vmatprep.subr.mxu0 0.0
    %5676 = vmatpush1.msra.mxu0 0.0
    %5677 = vmatprep.subr.mxu0 0.0
    %5678 = vmatpush1.msra.mxu0 0.0
    %5679 = vmatprep.subr.mxu0 0.0
    %5680 = vmatpush1.msra.mxu0 0.0
    %5681 = vmatprep.subr.mxu0 0.0
    %5682 = vmatpush1.msra.mxu0 0.0
    %5683 = vmatprep.subr.mxu0 0.0
    %5684 = vmatpush1.msra.mxu0 0.0
    %5685 = vmatprep.subr.mxu0 0.0
    %5686 = vmatpush1.msra.mxu0 0.0
    %5687 = vmatprep.subr.mxu0 0.0
    %5688 = vmatpush1.msra.mxu0 0.0
    %5689 = vmatprep.subr.mxu0 0.0
    %5690 = vmatpush1.msra.mxu0 0.0
    %5691 = vmatprep.subr.mxu0 0.0
    %5692 = vmatpush1.msra.mxu0 0.0
    %5693 = vmatprep.subr.mxu0 0.0
    %5694 = vmatpush1.msra.mxu0 0.0
    %5695 = vmatprep.subr.mxu0 0.0
    %5696 = vmatpush1.msra.mxu0 0.0
    %5697 = vmatprep.subr.mxu0 0.0
    %5698 = vmatpush1.msra.mxu0 0.0
    %5699 = vmatprep.mubr.f32.mxu0 0.0
    %5700 = vmatmul.mubr.f32.gmra.mrb[0].mxu0 %v5633
    %v5701 = vpop.f32.mrb[0].mxu0
    %v5702 = vadd.f32 %v3025, %v5701
    %v5703 = vpop.f32.mrb[0].mxu0
    %5704 = vdwg.mxu0
    %v5705 = vmax.f32 %v5702, 0.0
    %v5707 = vsel %vm3104, %v5705, 0
    %5709 = vmatprep.subr.mxu0 0.0
    %5710 = vmatpush1.msra.mxu0 %v123
    %5711 = vmatprep.subr.mxu0 0.0
    %5712 = vmatpush1.msra.mxu0 %v124
    %5713 = vmatprep.subr.mxu0 0.0
    %5714 = vmatpush1.msra.mxu0 %v125
    %5715 = vmatprep.subr.mxu0 0.0
    %5716 = vmatpush1.msra.mxu0 %v126
    %5717 = vmatprep.subr.mxu0 0.0
    %5718 = vmatpush1.msra.mxu0 %v127
    %5719 = vmatprep.subr.mxu0 0.0
    %5720 = vmatpush1.msra.mxu0 %v128
    %5721 = vmatprep.subr.mxu0 0.0
    %5722 = vmatpush1.msra.mxu0 %v129
    %5723 = vmatprep.subr.mxu0 0.0
    %5724 = vmatpush1.msra.mxu0 %v130
    %5725 = vmatprep.subr.mxu0 0.0
    %5726 = vmatpush1.msra.mxu0 0.0
    %5727 = vmatprep.subr.mxu0 0.0
    %5728 = vmatpush1.msra.mxu0 0.0
    %5729 = vmatprep.subr.mxu0 0.0
    %5730 = vmatpush1.msra.mxu0 0.0
    %5731 = vmatprep.subr.mxu0 0.0
    %5732 = vmatpush1.msra.mxu0 0.0
    %5733 = vmatprep.subr.mxu0 0.0
    %5734 = vmatpush1.msra.mxu0 0.0
    %5735 = vmatprep.subr.mxu0 0.0
    %5736 = vmatpush1.msra.mxu0 0.0
    %5737 = vmatprep.subr.mxu0 0.0
    %5738 = vmatpush1.msra.mxu0 0.0
    %5739 = vmatprep.subr.mxu0 0.0
    %5740 = vmatpush1.msra.mxu0 0.0
    %5741 = vmatprep.subr.mxu0 0.0
    %5742 = vmatpush1.msra.mxu0 0.0
    %5743 = vmatprep.subr.mxu0 0.0
    %5744 = vmatpush1.msra.mxu0 0.0
    %5745 = vmatprep.subr.mxu0 0.0
    %5746 = vmatpush1.msra.mxu0 0.0
    %5747 = vmatprep.subr.mxu0 0.0
    %5748 = vmatpush1.msra.mxu0 0.0
    %5749 = vmatprep.subr.mxu0 0.0
    %5750 = vmatpush1.msra.mxu0 0.0
    %5751 = vmatprep.subr.mxu0 0.0
    %5752 = vmatpush1.msra.mxu0 0.0
    %5753 = vmatprep.subr.mxu0 0.0
    %5754 = vmatpush1.msra.mxu0 0.0
    %5755 = vmatprep.subr.mxu0 0.0
    %5756 = vmatpush1.msra.mxu0 0.0
    %5757 = vmatprep.subr.mxu0 0.0
    %5758 = vmatpush1.msra.mxu0 0.0
    %5759 = vmatprep.subr.mxu0 0.0
    %5760 = vmatpush1.msra.mxu0 0.0
    %5761 = vmatprep.subr.mxu0 0.0
    %5762 = vmatpush1.msra.mxu0 0.0
    %5763 = vmatprep.subr.mxu0 0.0
    %5764 = vmatpush1.msra.mxu0 0.0
    %5765 = vmatprep.subr.mxu0 0.0
    %5766 = vmatpush1.msra.mxu0 0.0
    %5767 = vmatprep.subr.mxu0 0.0
    %5768 = vmatpush1.msra.mxu0 0.0
    %5769 = vmatprep.subr.mxu0 0.0
    %5770 = vmatpush1.msra.mxu0 0.0
    %5771 = vmatprep.subr.mxu0 0.0
    %5772 = vmatpush1.msra.mxu0 0.0
    %5773 = vmatprep.mubr.f32.mxu0 0.0
    %5774 = vmatmul.mubr.f32.gmra.mrb[0].mxu0 %v5707
    %v5775 = vpop.f32.mrb[0].mxu0
    %v5776 = vadd.f32 %v3103, %v5775
    %v5777 = vpop.f32.mrb[0].mxu0
    %5778 = vdwg.mxu0
    %v5779 = vadd.f32 %v5631, %v5776
    %v5780 = vsel %vm198, %v5779, 0.0
    %5781 = vadd.xlane.f32.xlu0 %v5780
    %v5782 = vpop.xlane.xlu0 %5781
    %v5783 = vmul.f32 %v5782, %v3001
    %v5784 = vsub.f32 %v5779, %v5783
    %v5785 = vmul.f32 %v5784, %v5784
    %v5786 = vsel %vm198, %v5785, 0.0
    %5787 = vadd.xlane.f32.xlu0 %v5786
    %v5788 = vpop.xlane.xlu0 %5787
    %v5789 = vmul.f32 %v5788, %v3001
    %v5790 = vadd.f32 %v5789, 1e-05
    %v5791 = vrsqrt.pop %v5790
    %v5792 = vmul.f32 %v5784, %v5791
    %v5793 = vmul.f32 %v5792, %v3195
    %v5794 = vadd.f32 %v5793, %v3200
    %s5795 = scalar_lea.vmem [#allocation2], 8
    %5796 = vst.msk [vmem:[%s5795] sm:$0xff] %vm198, %v5794
    // Predicated region
    $region54: #{tpu_custom_call.1} parent=1 // pred_check
      _
    $region55: #{tpu_custom_call.1} parent=1 // pred_check_branch
      %5798 = sbr.rel (0) target = $region57
    $region56: #{tpu_custom_call.1} parent=1 // pred_region
      %s5800 = ssub.s32 256, 256
      %5801 = vsyncadd [#allocation3], %s5800
      %s5802 = sshll.u32 [#allocation2], 4
      %s5803 = int_to_ptr.vmem [resolvable:$true] %s5802
      %5808 = dma.vmem_to_hbm [thread:$0]  %s5803, 256, %s13, [#allocation3], 128, 128, 8
    $region57: #{tpu_custom_call.1} parent=1 // pred_fallthru
      _
    // Predicated region
    $region58: #{tpu_custom_call.1} parent=1 // pred_check
      _
    $region59: #{tpu_custom_call.1} parent=1 // pred_check_branch
      %5810 = sbr.rel (0) target = $region61
    $region60: #{tpu_custom_call.1} parent=1 // pred_region
      %5811 = dma.done [#allocation3], 256
    $region61: #{tpu_custom_call.1} parent=1 // pred_fallthru
      _
    %5812 = vsyncpa [#allocation3], 1

</llo_original>
